<compile_context>
chip_gen: v5e
topology: v5e:2x2
jax: 0.10.0
libtpu: 0.0.40
codegen_flags: <defaults>
</compile_context>

<pallas_src>
import functools

import jax
import jax.numpy as jnp
from jax import lax
from jax.experimental import pallas as pl
from jax.experimental.pallas import tpu as pltpu


def _s_module_kernel(x_ref, wq_ref, bq_ref, wk_ref, bk_ref, wv_ref, bv_ref,
                     gamma_ref, o_ref, *, H, W):
    """Criss-cross attention for one batch element.

    x_ref:   [1, S, C] f32   S = H*W, h-major spatial order, lane dim = C
    wq/wk:   [C, C8]   f32   1x1-conv weights;  wv: [C, C]
    bq/bk:   [1, C8]   f32 ; bv: [1, C]
    gamma:   (1,)      f32   SMEM scalar
    o_ref:   [1, S, C] f32
    """
    S, C = x_ref.shape[1], x_ref.shape[2]
    C8 = wq_ref.shape[1]

    x_sc = x_ref[0]                                            # [S, C] f32

    # The three 1x1 convs are per-pixel matmuls on the MXU, projected ONCE.
    # TODO(synk): cast operands to bf16 on real TPU hardware for MXU rate.
    q = jnp.dot(x_sc, wq_ref[...], preferred_element_type=jnp.float32) + bq_ref[...]
    k = jnp.dot(x_sc, wk_ref[...], preferred_element_type=jnp.float32) + bk_ref[...]
    v = jnp.dot(x_sc, wv_ref[...], preferred_element_type=jnp.float32) + bv_ref[...]

    # Row-major views; column-branch operands are plain leading-axis
    # transposes (no [S, S] permutation matmuls).
    q_h = q.reshape(H, W, C8)
    k_h = k.reshape(H, W, C8)
    v_h = v.reshape(H, W, C)
    q_v = jnp.transpose(q_h, (1, 0, 2))                        # [W, H, C8]
    k_v = jnp.transpose(k_h, (1, 0, 2))
    v_v = jnp.transpose(v_h, (1, 0, 2))                        # [W, H, C]

    # --- attention energies (batched dot_generals) ---
    # row branch:    e_h[h, w, v'] = q(h, w) . k(h, v')
    e_h = jnp.einsum('hwc,hvc->hwv', q_h, k_h,
                     preferred_element_type=jnp.float32)       # [H, W, W]
    # column branch: e_v[w, h, g]  = q(h, w) . k(g, w)
    e_v = jnp.einsum('whc,wgc->whg', q_v, k_v,
                     preferred_element_type=jnp.float32)       # [W, H, H]

    # Mask the self position (g == h) of the column branch.
    diag = (lax.broadcasted_iota(jnp.int32, (H, H), 0) ==
            lax.broadcasted_iota(jnp.int32, (H, H), 1))
    e_v = jnp.where(diag[None, :, :], -jnp.inf, e_v)

    # --- joint softmax over the concatenated (H + W) key axis, per (h, w) ---
    # Normalization is folded into the aggregated output (one [H, W, C] scale)
    # instead of scaling the big probability tensors.
    m_h = jnp.max(e_h, axis=-1)                                # [H, W]
    m_vt = jnp.max(e_v, axis=-1).T                             # [H, W]
    m = jnp.maximum(m_h, m_vt)                                 # [H, W]
    m_t = m.T                                                  # [W, H]
    p_h = jnp.exp(e_h - m[:, :, None])                         # [H, W, W]
    p_v = jnp.exp(e_v - m_t[:, :, None])                       # [W, H, H]
    denom = jnp.sum(p_h, axis=-1) + jnp.sum(p_v, axis=-1).T    # [H, W]

    # --- attention-weighted aggregation of v (unnormalized probabilities) ---
    out_row = jnp.einsum('hwv,hvc->hwc', p_h, v_h,
                         preferred_element_type=jnp.float32)   # [H, W, C]
    out_col = jnp.einsum('whg,wgc->whc', p_v, v_v,
                         preferred_element_type=jnp.float32)   # [W, H, C]
    out_sum = out_row + jnp.transpose(out_col, (1, 0, 2))      # [H, W, C]
    out_sum = out_sum / denom[:, :, None]                      # normalize once, f32

    gamma = gamma_ref[0]
    o_ref[0] = gamma * out_sum.reshape(S, C) + x_sc


def s_module_forward(x_nchw, wq, bq, wk, bk, wv, bv, gamma):
    """x_nchw: [B, C, H, W] f32; wq/wk: [C, C//8]; wv: [C, C]; biases [1, *]; gamma: [1]."""
    B, C, H, W = x_nchw.shape
    C8 = wq.shape[1]
    S = H * W

    # [B, S, C] layout keeps the kernel free of [S, C] <-> [C, S] relayouts;
    # the NCHW <-> NHWC conversions run HBM-side in XLA, pipelined with the
    # pallas_call.
    x_bsc = jnp.transpose(x_nchw, (0, 2, 3, 1)).reshape(B, S, C)
    gamma_s = jnp.asarray(gamma, dtype=jnp.float32).reshape((1,))

    kernel = functools.partial(_s_module_kernel, H=H, W=W)

    # TODO(synk): for production CCNet sizes (C=512, S ~ 9k) add a query-row
    # grid axis marked "parallel", pad W to a multiple of 8, and single-buffer
    # (pipeline_mode=pl.Buffered(1)) the grid-invariant weight blocks so the
    # per-step footprint fits v7x's 64 MiB / v5e's 16 MiB scoped VMEM.
    out_bsc = pl.pallas_call(
        kernel,
        out_shape=jax.ShapeDtypeStruct((B, S, C), jnp.float32),
        grid=(B,),
        in_specs=[
            pl.BlockSpec((1, S, C), lambda b: (b, 0, 0)),       # x (one batch element)
            pl.BlockSpec((C, C8), lambda b: (0, 0)),            # wq
            pl.BlockSpec((1, C8), lambda b: (0, 0)),            # bq
            pl.BlockSpec((C, C8), lambda b: (0, 0)),            # wk
            pl.BlockSpec((1, C8), lambda b: (0, 0)),            # bk
            pl.BlockSpec((C, C), lambda b: (0, 0)),             # wv
            pl.BlockSpec((1, C), lambda b: (0, 0)),             # bv
            pl.BlockSpec(memory_space=pltpu.MemorySpace.SMEM),  # gamma scalar
        ],
        out_specs=pl.BlockSpec((1, S, C), lambda b: (b, 0, 0)),
        compiler_params=pltpu.CompilerParams(
            dimension_semantics=("parallel",),
            vmem_limit_bytes=64 * 1024 * 1024),
    )(x_bsc, wq, bq, wk, bk, wv, bv, gamma_s)

    return jnp.transpose(out_bsc.reshape(B, H, W, C), (0, 3, 1, 2))


def reference_forward(x, wq, bq, wk, bk, wv, bv, gamma):
    """Pure-JAX replica of the PyTorch forward (NCHW), for validation."""
    B, C, H, W = x.shape
    q = jnp.einsum('bchw,cd->bdhw', x, wq) + bq.reshape(1, -1, 1, 1)
    k = jnp.einsum('bchw,cd->bdhw', x, wk) + bk.reshape(1, -1, 1, 1)
    v = jnp.einsum('bchw,cd->bdhw', x, wv) + bv.reshape(1, -1, 1, 1)
    e_h = jnp.einsum('bchw,bcgw->bhwg', q, k)
    diag = jnp.eye(H, dtype=bool)[None, :, None, :]
    e_h = jnp.where(diag, -jnp.inf, e_h)
    e_w = jnp.einsum('bchw,bchv->bhwv', q, k)
    att = jax.nn.softmax(jnp.concatenate([e_h, e_w], axis=3), axis=3)
    a_h, a_w = att[..., :H], att[..., H:]
    out_h = jnp.einsum('bcgw,bhwg->bchw', v, a_h)
    out_w = jnp.einsum('bchv,bhwv->bchw', v, a_w)
    return gamma.reshape(()) * (out_h + out_w) + x


if __name__ == "__main__":
    B, C, H, W = 2, 32, 16, 16          # in_dim = 32 -> C//8 = 4
    C8 = C // 8

    key = jax.random.PRNGKey(0)
    kx, k1, k2, k3, k4, k5, k6 = jax.random.split(key, 7)

    x = jax.random.normal(kx, (B, C, H, W), dtype=jnp.float32)

    wq = jax.random.normal(k1, (C, C8), dtype=jnp.float32) * 0.1
    bq = jax.random.normal(k2, (1, C8), dtype=jnp.float32) * 0.1
    wk = jax.random.normal(k3, (C, C8), dtype=jnp.float32) * 0.1
    bk = jax.random.normal(k4, (1, C8), dtype=jnp.float32) * 0.1
    wv = jax.random.normal(k5, (C, C), dtype=jnp.float32) * 0.1
    bv = jax.random.normal(k6, (1, C), dtype=jnp.float32) * 0.1
    # Module inits gamma to 0 (output would equal x); use 0.5 to exercise the path.
    gamma = jnp.full((1,), 0.5, dtype=jnp.float32)

    out = s_module_forward(x, wq, bq, wk, bk, wv, bv, gamma)
    out = jax.block_until_ready(out)

    ref = reference_forward(x, wq, bq, wk, bk, wv, bv, gamma)
    assert out.shape == (B, C, H, W)
    err = float(jnp.max(jnp.abs(out - ref)))
    assert jnp.allclose(out, ref, atol=2e-3, rtol=2e-3), f"max abs err = {err}"

    print("KERNEL_OK")
</pallas_src>

<mosaic_0001>
module attributes {stable_mosaic.version = 11 : i64} {
  func.func @_s_module_kernel(%arg0: i32, %arg1: memref<1x256x32xf32, #tpu.memory_space<vmem>>, %arg2: memref<32x4xf32, #tpu.memory_space<vmem>>, %arg3: memref<1x4xf32, #tpu.memory_space<vmem>>, %arg4: memref<32x4xf32, #tpu.memory_space<vmem>>, %arg5: memref<1x4xf32, #tpu.memory_space<vmem>>, %arg6: memref<32x32xf32, #tpu.memory_space<vmem>>, %arg7: memref<1x32xf32, #tpu.memory_space<vmem>>, %arg8: memref<1xf32, #tpu.memory_space<smem>>, %arg9: memref<1x256x32xf32, #tpu.memory_space<vmem>>) attributes {dimension_semantics = [#tpu.dimension_semantics<parallel>], iteration_bounds = array<i64: 2>, scalar_prefetch = 0 : i64, scratch_operands = 0 : i64, tpu.core_type = #tpu.core_type<tc>, window_params = [{transform_indices = @transform_0, window_bounds = array<i64: 1, 256, 32>}, {pipeline_mode = #tpu.pipeline_mode<synchronous>, transform_indices = @transform_1, window_bounds = array<i64: 32, 4>}, {pipeline_mode = #tpu.pipeline_mode<synchronous>, transform_indices = @transform_2, window_bounds = array<i64: 1, 4>}, {pipeline_mode = #tpu.pipeline_mode<synchronous>, transform_indices = @transform_3, window_bounds = array<i64: 32, 4>}, {pipeline_mode = #tpu.pipeline_mode<synchronous>, transform_indices = @transform_4, window_bounds = array<i64: 1, 4>}, {pipeline_mode = #tpu.pipeline_mode<synchronous>, transform_indices = @transform_5, window_bounds = array<i64: 32, 32>}, {pipeline_mode = #tpu.pipeline_mode<synchronous>, transform_indices = @transform_6, window_bounds = array<i64: 1, 32>}, {transform_indices = @transform_7, window_bounds = array<i64: 1>}, {transform_indices = @transform_8, window_bounds = array<i64: 1, 256, 32>}]} {
    %c0 = arith.constant 0 : index
    %c0_0 = arith.constant 0 : index
    %c0_1 = arith.constant 0 : index
    %0 = vector.load %arg1[%c0, %c0_0, %c0_1] : memref<1x256x32xf32, #tpu.memory_space<vmem>>, vector<1x256x32xf32>
    %1 = vector.shape_cast %0 : vector<1x256x32xf32> to vector<256x32xf32>
    %c0_2 = arith.constant 0 : index
    %c0_3 = arith.constant 0 : index
    %2 = vector.load %arg2[%c0_2, %c0_3] : memref<32x4xf32, #tpu.memory_space<vmem>>, vector<32x4xf32>
    %cst = arith.constant dense<0.000000e+00> : vector<256x4xf32>
    %3 = tpu.matmul %1, %2, %cst {dimension_numbers = #tpu.dot_dimension_numbers<[1], [0], [0], [1], [0, 0, 1, 1], [], []>} : vector<256x32xf32>, vector<32x4xf32>, vector<256x4xf32> -> vector<256x4xf32>
    %c0_4 = arith.constant 0 : index
    %c0_5 = arith.constant 0 : index
    %4 = vector.load %arg3[%c0_4, %c0_5] : memref<1x4xf32, #tpu.memory_space<vmem>>, vector<1x4xf32>
    %5 = vector.broadcast %4 : vector<1x4xf32> to vector<256x4xf32>
    %6 = arith.addf %3, %5 : vector<256x4xf32>
    %c0_6 = arith.constant 0 : index
    %c0_7 = arith.constant 0 : index
    %7 = vector.load %arg4[%c0_6, %c0_7] : memref<32x4xf32, #tpu.memory_space<vmem>>, vector<32x4xf32>
    %cst_8 = arith.constant dense<0.000000e+00> : vector<256x4xf32>
    %8 = tpu.matmul %1, %7, %cst_8 {dimension_numbers = #tpu.dot_dimension_numbers<[1], [0], [0], [1], [0, 0, 1, 1], [], []>} : vector<256x32xf32>, vector<32x4xf32>, vector<256x4xf32> -> vector<256x4xf32>
    %c0_9 = arith.constant 0 : index
    %c0_10 = arith.constant 0 : index
    %9 = vector.load %arg5[%c0_9, %c0_10] : memref<1x4xf32, #tpu.memory_space<vmem>>, vector<1x4xf32>
    %10 = vector.broadcast %9 : vector<1x4xf32> to vector<256x4xf32>
    %11 = arith.addf %8, %10 : vector<256x4xf32>
    %c0_11 = arith.constant 0 : index
    %c0_12 = arith.constant 0 : index
    %12 = vector.load %arg6[%c0_11, %c0_12] : memref<32x32xf32, #tpu.memory_space<vmem>>, vector<32x32xf32>
    %cst_13 = arith.constant dense<0.000000e+00> : vector<256x32xf32>
    %13 = tpu.matmul %1, %12, %cst_13 {dimension_numbers = #tpu.dot_dimension_numbers<[1], [0], [0], [1], [0, 0, 1, 1], [], []>} : vector<256x32xf32>, vector<32x32xf32>, vector<256x32xf32> -> vector<256x32xf32>
    %c0_14 = arith.constant 0 : index
    %c0_15 = arith.constant 0 : index
    %14 = vector.load %arg7[%c0_14, %c0_15] : memref<1x32xf32, #tpu.memory_space<vmem>>, vector<1x32xf32>
    %15 = vector.broadcast %14 : vector<1x32xf32> to vector<256x32xf32>
    %16 = arith.addf %13, %15 : vector<256x32xf32>
    %17 = vector.shape_cast %6 : vector<256x4xf32> to vector<16x16x4xf32>
    %18 = vector.shape_cast %11 : vector<256x4xf32> to vector<16x16x4xf32>
    %19 = vector.shape_cast %16 : vector<256x32xf32> to vector<16x16x32xf32>
    %20 = tpu.transpose %17, [1, 0, 2] : vector<16x16x4xf32> -> vector<16x16x4xf32>
    %21 = tpu.transpose %18, [1, 0, 2] : vector<16x16x4xf32> -> vector<16x16x4xf32>
    %22 = tpu.transpose %19, [1, 0, 2] : vector<16x16x32xf32> -> vector<16x16x32xf32>
    "tpu.trace_start"() <{level = 10 : i32, message = "hwc,hvc->hwv"}> : () -> ()
    %cst_16 = arith.constant dense<0.000000e+00> : vector<16x16x16xf32>
    %23 = tpu.matmul %17, %18, %cst_16 {dimension_numbers = #tpu.dot_dimension_numbers<[2], [2], [1], [1], [0, 0, 0, 1, 1, 1], [0], [0]>} : vector<16x16x4xf32>, vector<16x16x4xf32>, vector<16x16x16xf32> -> vector<16x16x16xf32>
    "tpu.trace_stop"() : () -> ()
    "tpu.trace_start"() <{level = 10 : i32, message = "whc,wgc->whg"}> : () -> ()
    %cst_17 = arith.constant dense<0.000000e+00> : vector<16x16x16xf32>
    %24 = tpu.matmul %20, %21, %cst_17 {dimension_numbers = #tpu.dot_dimension_numbers<[2], [2], [1], [1], [0, 0, 0, 1, 1, 1], [0], [0]>} : vector<16x16x4xf32>, vector<16x16x4xf32>, vector<16x16x16xf32> -> vector<16x16x16xf32>
    "tpu.trace_stop"() : () -> ()
    %25 = tpu.iota {dimensions = array<i32: 0>} : vector<16x16xi32>
    %26 = tpu.iota {dimensions = array<i32: 1>} : vector<16x16xi32>
    %27 = arith.cmpi eq, %25, %26 : vector<16x16xi32>
    %28 = vector.shape_cast %27 : vector<16x16xi1> to vector<1x16x16xi1>
    %cst_18 = arith.constant 0xFF800000 : f32
    %29 = vector.shape_cast %28 : vector<1x16x16xi1> to vector<1x16x16xi1>
    %30 = vector.broadcast %29 : vector<1x16x16xi1> to vector<16x16x16xi1>
    %31 = vector.broadcast %cst_18 : f32 to vector<16x16x16xf32>
    %32 = arith.select %30, %31, %24 : vector<16x16x16xi1>, vector<16x16x16xf32>
    %cst_19 = arith.constant dense<0xFF800000> : vector<16x16xf32>
    %33 = vector.multi_reduction <maximumf>, %23, %cst_19 [2] : vector<16x16x16xf32> to vector<16x16xf32>
    %cst_20 = arith.constant dense<0xFF800000> : vector<16x16xf32>
    %34 = vector.multi_reduction <maximumf>, %32, %cst_20 [2] : vector<16x16x16xf32> to vector<16x16xf32>
    %35 = tpu.transpose %34, [1, 0] : vector<16x16xf32> -> vector<16x16xf32>
    %36 = arith.maximumf %33, %35 : vector<16x16xf32>
    %37 = tpu.transpose %36, [1, 0] : vector<16x16xf32> -> vector<16x16xf32>
    %38 = vector.shape_cast %36 : vector<16x16xf32> to vector<16x16x1xf32>
    %39 = vector.broadcast %38 : vector<16x16x1xf32> to vector<16x16x16xf32>
    %40 = arith.subf %23, %39 : vector<16x16x16xf32>
    %41 = math.exp %40 : vector<16x16x16xf32>
    %42 = vector.shape_cast %37 : vector<16x16xf32> to vector<16x16x1xf32>
    %43 = vector.broadcast %42 : vector<16x16x1xf32> to vector<16x16x16xf32>
    %44 = arith.subf %32, %43 : vector<16x16x16xf32>
    %45 = math.exp %44 : vector<16x16x16xf32>
    %cst_21 = arith.constant dense<0.000000e+00> : vector<16x16xf32>
    %46 = vector.multi_reduction <add>, %41, %cst_21 [2] : vector<16x16x16xf32> to vector<16x16xf32>
    %cst_22 = arith.constant dense<0.000000e+00> : vector<16x16xf32>
    %47 = vector.multi_reduction <add>, %45, %cst_22 [2] : vector<16x16x16xf32> to vector<16x16xf32>
    %48 = tpu.transpose %47, [1, 0] : vector<16x16xf32> -> vector<16x16xf32>
    %49 = arith.addf %46, %48 : vector<16x16xf32>
    "tpu.trace_start"() <{level = 10 : i32, message = "hwv,hvc->hwc"}> : () -> ()
    %cst_23 = arith.constant dense<0.000000e+00> : vector<16x16x32xf32>
    %50 = tpu.matmul %41, %19, %cst_23 {dimension_numbers = #tpu.dot_dimension_numbers<[2], [1], [1], [2], [0, 0, 0, 1, 1, 2], [0], [0]>} : vector<16x16x16xf32>, vector<16x16x32xf32>, vector<16x16x32xf32> -> vector<16x16x32xf32>
    "tpu.trace_stop"() : () -> ()
    "tpu.trace_start"() <{level = 10 : i32, message = "whg,wgc->whc"}> : () -> ()
    %cst_24 = arith.constant dense<0.000000e+00> : vector<16x16x32xf32>
    %51 = tpu.matmul %45, %22, %cst_24 {dimension_numbers = #tpu.dot_dimension_numbers<[2], [1], [1], [2], [0, 0, 0, 1, 1, 2], [0], [0]>} : vector<16x16x16xf32>, vector<16x16x32xf32>, vector<16x16x32xf32> -> vector<16x16x32xf32>
    "tpu.trace_stop"() : () -> ()
    %52 = tpu.transpose %51, [1, 0, 2] : vector<16x16x32xf32> -> vector<16x16x32xf32>
    %53 = arith.addf %50, %52 : vector<16x16x32xf32>
    %54 = vector.shape_cast %49 : vector<16x16xf32> to vector<16x16x1xf32>
    %55 = vector.broadcast %54 : vector<16x16x1xf32> to vector<16x16x32xf32>
    %56 = arith.divf %53, %55 : vector<16x16x32xf32>
    %c0_25 = arith.constant 0 : index
    %57 = memref.load %arg8[%c0_25] : memref<1xf32, #tpu.memory_space<smem>>
    %58 = vector.shape_cast %56 : vector<16x16x32xf32> to vector<256x32xf32>
    %59 = vector.broadcast %57 : f32 to vector<256x32xf32>
    %60 = arith.mulf %59, %58 : vector<256x32xf32>
    %61 = arith.addf %60, %1 : vector<256x32xf32>
    %c0_26 = arith.constant 0 : index
    %c0_27 = arith.constant 0 : index
    %c0_28 = arith.constant 0 : index
    %62 = vector.load %arg9[%c0_26, %c0_27, %c0_28] : memref<1x256x32xf32, #tpu.memory_space<vmem>>, vector<1x256x32xf32>
    %63 = vector.shape_cast %62 : vector<1x256x32xf32> to vector<256x32xf32>
    %64 = vector.shape_cast %61 : vector<256x32xf32> to vector<1x256x32xf32>
    tpu.vector_store %arg9[%c0_26, %c0_27, %c0_28], %64 {strides = array<i32>} : memref<1x256x32xf32, #tpu.memory_space<vmem>>, vector<1x256x32xf32>,
    return
  }
  func.func @transform_0(%arg0: i32) -> (i32, i32, i32) {
    %c0_i32 = arith.constant 0 : i32
    %c0_i32_0 = arith.constant 0 : i32
    %c0_i32_1 = arith.constant 0 : i32
    return %arg0, %c0_i32, %c0_i32_0 : i32, i32, i32
  }
  func.func @transform_1(%arg0: i32) -> (i32, i32) {
    %c0_i32 = arith.constant 0 : i32
    %c0_i32_0 = arith.constant 0 : i32
    %c0_i32_1 = arith.constant 0 : i32
    return %c0_i32, %c0_i32_0 : i32, i32
  }
  func.func @transform_2(%arg0: i32) -> (i32, i32) {
    %c0_i32 = arith.constant 0 : i32
    %c0_i32_0 = arith.constant 0 : i32
    %c0_i32_1 = arith.constant 0 : i32
    return %c0_i32, %c0_i32_0 : i32, i32
  }
  func.func @transform_3(%arg0: i32) -> (i32, i32) {
    %c0_i32 = arith.constant 0 : i32
    %c0_i32_0 = arith.constant 0 : i32
    %c0_i32_1 = arith.constant 0 : i32
    return %c0_i32, %c0_i32_0 : i32, i32
  }
  func.func @transform_4(%arg0: i32) -> (i32, i32) {
    %c0_i32 = arith.constant 0 : i32
    %c0_i32_0 = arith.constant 0 : i32
    %c0_i32_1 = arith.constant 0 : i32
    return %c0_i32, %c0_i32_0 : i32, i32
  }
  func.func @transform_5(%arg0: i32) -> (i32, i32) {
    %c0_i32 = arith.constant 0 : i32
    %c0_i32_0 = arith.constant 0 : i32
    %c0_i32_1 = arith.constant 0 : i32
    return %c0_i32, %c0_i32_0 : i32, i32
  }
  func.func @transform_6(%arg0: i32) -> (i32, i32) {
    %c0_i32 = arith.constant 0 : i32
    %c0_i32_0 = arith.constant 0 : i32
    %c0_i32_1 = arith.constant 0 : i32
    return %c0_i32, %c0_i32_0 : i32, i32
  }
  func.func @transform_7(%arg0: i32) -> i32 {
    %c0_i32 = arith.constant 0 : i32
    %c0_i32_0 = arith.constant 0 : i32
    return %c0_i32 : i32
  }
  func.func @transform_8(%arg0: i32) -> (i32, i32, i32) {
    %c0_i32 = arith.constant 0 : i32
    %c0_i32_0 = arith.constant 0 : i32
    %c0_i32_1 = arith.constant 0 : i32
    return %arg0, %c0_i32, %c0_i32_0 : i32, i32, i32
  }
}

</mosaic_0001>

<llo_original>
// kernel: tpu_custom_call.1
$region0: #{tpu_custom_call.1}
  #allocation0 [shape = 'u32[]', space=smem, size = 0x4, offset = 0x4, fixed_abs, tag = 'smem constant byte address 0x4 - core index']
  #allocation1 [shape = 'u32[72,128]{1,0:T(1,128)}', space=vmem, size = 0x9000, scoped, tag = 'internal scratch']
  #allocation2 [shape = 'f32[1]{0:T(128)S(6)}', space=smem, size = 0x200, scoped, tag = 'scoped memory for tpu_custom_call.1']
  %s0 = inlined_call_operand.vmem [shape: f32[2,256,32], index: 0, kind: input, shape index: {}]
  %s1 = inlined_call_operand.vmem [shape: f32[32,4], index: 1, kind: input, shape index: {}]
  %s2 = inlined_call_operand.vmem [shape: f32[1,4], index: 2, kind: input, shape index: {}]
  %s3 = inlined_call_operand.vmem [shape: f32[32,4], index: 3, kind: input, shape index: {}]
  %s4 = inlined_call_operand.vmem [shape: f32[1,4], index: 4, kind: input, shape index: {}]
  %s5 = inlined_call_operand.vmem [shape: f32[32,32], index: 5, kind: input, shape index: {}]
  %s6 = inlined_call_operand.vmem [shape: f32[1,32], index: 6, kind: input, shape index: {}]
  %s7 = inlined_call_operand.<no memory space> [shape: f32[1], index: 7, kind: input, shape index: {}]
  %s8 = inlined_call_operand.vmem [shape: f32[2,256,32], index: 8, kind: output, shape index: {}]
  %s9 = sld [smem:[#allocation0]]
  $region65: #{tpu_custom_call.1} parent=0
    _
  %s11 = ssub.s32 1, %s9
  %s12 = scalar_select 0, %s11, %s9
  %13 = sst [smem:[#allocation2]] %s7
  loop: start=0, step=1, limit=4
  $region2: #{tpu_custom_call.1} parent=0 // loop_pre_header
    _
  $region3: #{tpu_custom_call.1} parent=0 // loop_header
    %s15 = sphi 0, %s19
    %p16 = scmp.ge.s32.totalorder %s15, 4
    %s25 = sphi 0, %s27
    %s28 = sphi 0, %s25
    %s29 = sphi 0, %s28
    %s45 = sphi 0, %s29
    %s49 = sphi 0, %s49
    %s51 = sphi 0, %s49
    %s52 = sphi 0, %s51
    %s66 = sphi 0, %s52
    %s70 = sphi 0, %s70
    %s72 = sphi 0, %s70
    %s73 = sphi 0, %s72
    %s87 = sphi 0, %s73
    %s91 = sphi 0, %s91
    %s93 = sphi 0, %s91
    %s94 = sphi 0, %s93
    %s108 = sphi 0, %s94
    %s112 = sphi 0, %s112
    %s114 = sphi 0, %s112
    %s115 = sphi 0, %s114
    %s129 = sphi 0, %s115
    %s133 = sphi 0, %s133
    %s135 = sphi 0, %s133
    %s136 = sphi 0, %s135
    %s150 = sphi 0, %s136
    %s154 = sphi 0, %s154
    %s156 = sphi 0, %s154
    %s157 = sphi 0, %s156
    %s171 = sphi 0, %s157
    %s175 = sphi 0, %s175
    %s177 = sphi 0, %s175
    %s178 = sphi 0, %s177
    %s192 = sphi 0, %s178
    %s198 = sphi 0, %s200
    %s201 = sphi 0, %s198
    %s202 = sphi 0, %s201
    %s218 = sphi 0, %s202
  $region4: #{tpu_custom_call.1} parent=0 // loop_header_branch
    %18 = sbr.rel (%p16) target = $region8
  $region5: #{tpu_custom_call.1} parent=0 // loop_body
    %s20 = ssub.s32 %s15, 1
    %s21 = ssub.s32 %s15, 2
    %s22 = sadd.s32 %s15, 1
    %s23 = ssub.s32 %s15, %s22
    %p24 = scmp.eq.s32.totalorder %s23, 0
    %s26 = sadd.s32 %s25, 1
    %s27 = scalar_select %p24, %s25, %s26
    %p30 = pneg %p24
    %p31 = scmp.eq.s32.totalorder %s15, 1
    %p32 = por %p30, %p31
    %p33 = scmp.ne.s32.totalorder %s25, %s28
    %p34 = scmp.eq.s32.totalorder %s15, 0
    %p35 = por %p33, %p34
    %p36 = scmp.ne.s32.totalorder %s25, %s28
    %p37 = scmp.eq.s32.totalorder %s20, 1
    %p38 = por %p36, %p37
    %p39 = scmp.ne.s32.totalorder %s28, %s29
    %p40 = scmp.eq.s32.totalorder %s20, 0
    %p41 = por %p39, %p40
    %p42 = scmp.ne.s32.totalorder %s28, %s29
    %p43 = scmp.eq.s32.totalorder %s21, 1
    %p44 = por %p42, %p43
    %p46 = scmp.ne.s32.totalorder %s29, %s45
    %p47 = scmp.eq.s32.totalorder %s21, 0
    %p48 = por %p46, %p47
    %s50 = sadd.s32 %s49, 1
    %p53 = scmp.eq.s32.totalorder %s15, 1
    %p54 = scmp.ne.s32.totalorder %s49, %s51
    %p55 = scmp.eq.s32.totalorder %s15, 0
    %p56 = por %p54, %p55
    %p57 = scmp.ne.s32.totalorder %s49, %s51
    %p58 = scmp.eq.s32.totalorder %s20, 1
    %p59 = por %p57, %p58
    %p60 = scmp.ne.s32.totalorder %s51, %s52
    %p61 = scmp.eq.s32.totalorder %s20, 0
    %p62 = por %p60, %p61
    %p63 = scmp.ne.s32.totalorder %s51, %s52
    %p64 = scmp.eq.s32.totalorder %s21, 1
    %p65 = por %p63, %p64
    %p67 = scmp.ne.s32.totalorder %s52, %s66
    %p68 = scmp.eq.s32.totalorder %s21, 0
    %p69 = por %p67, %p68
    %s71 = sadd.s32 %s70, 1
    %p74 = scmp.eq.s32.totalorder %s15, 1
    %p75 = scmp.ne.s32.totalorder %s70, %s72
    %p76 = scmp.eq.s32.totalorder %s15, 0
    %p77 = por %p75, %p76
    %p78 = scmp.ne.s32.totalorder %s70, %s72
    %p79 = scmp.eq.s32.totalorder %s20, 1
    %p80 = por %p78, %p79
    %p81 = scmp.ne.s32.totalorder %s72, %s73
    %p82 = scmp.eq.s32.totalorder %s20, 0
    %p83 = por %p81, %p82
    %p84 = scmp.ne.s32.totalorder %s72, %s73
    %p85 = scmp.eq.s32.totalorder %s21, 1
    %p86 = por %p84, %p85
    %p88 = scmp.ne.s32.totalorder %s73, %s87
    %p89 = scmp.eq.s32.totalorder %s21, 0
    %p90 = por %p88, %p89
    %s92 = sadd.s32 %s91, 1
    %p95 = scmp.eq.s32.totalorder %s15, 1
    %p96 = scmp.ne.s32.totalorder %s91, %s93
    %p97 = scmp.eq.s32.totalorder %s15, 0
    %p98 = por %p96, %p97
    %p99 = scmp.ne.s32.totalorder %s91, %s93
    %p100 = scmp.eq.s32.totalorder %s20, 1
    %p101 = por %p99, %p100
    %p102 = scmp.ne.s32.totalorder %s93, %s94
    %p103 = scmp.eq.s32.totalorder %s20, 0
    %p104 = por %p102, %p103
    %p105 = scmp.ne.s32.totalorder %s93, %s94
    %p106 = scmp.eq.s32.totalorder %s21, 1
    %p107 = por %p105, %p106
    %p109 = scmp.ne.s32.totalorder %s94, %s108
    %p110 = scmp.eq.s32.totalorder %s21, 0
    %p111 = por %p109, %p110
    %s113 = sadd.s32 %s112, 1
    %p116 = scmp.eq.s32.totalorder %s15, 1
    %p117 = scmp.ne.s32.totalorder %s112, %s114
    %p118 = scmp.eq.s32.totalorder %s15, 0
    %p119 = por %p117, %p118
    %p120 = scmp.ne.s32.totalorder %s112, %s114
    %p121 = scmp.eq.s32.totalorder %s20, 1
    %p122 = por %p120, %p121
    %p123 = scmp.ne.s32.totalorder %s114, %s115
    %p124 = scmp.eq.s32.totalorder %s20, 0
    %p125 = por %p123, %p124
    %p126 = scmp.ne.s32.totalorder %s114, %s115
    %p127 = scmp.eq.s32.totalorder %s21, 1
    %p128 = por %p126, %p127
    %p130 = scmp.ne.s32.totalorder %s115, %s129
    %p131 = scmp.eq.s32.totalorder %s21, 0
    %p132 = por %p130, %p131
    %s134 = sadd.s32 %s133, 1
    %p137 = scmp.eq.s32.totalorder %s15, 1
    %p138 = scmp.ne.s32.totalorder %s133, %s135
    %p139 = scmp.eq.s32.totalorder %s15, 0
    %p140 = por %p138, %p139
    %p141 = scmp.ne.s32.totalorder %s133, %s135
    %p142 = scmp.eq.s32.totalorder %s20, 1
    %p143 = por %p141, %p142
    %p144 = scmp.ne.s32.totalorder %s135, %s136
    %p145 = scmp.eq.s32.totalorder %s20, 0
    %p146 = por %p144, %p145
    %p147 = scmp.ne.s32.totalorder %s135, %s136
    %p148 = scmp.eq.s32.totalorder %s21, 1
    %p149 = por %p147, %p148
    %p151 = scmp.ne.s32.totalorder %s136, %s150
    %p152 = scmp.eq.s32.totalorder %s21, 0
    %p153 = por %p151, %p152
    %s155 = sadd.s32 %s154, 1
    %p158 = scmp.eq.s32.totalorder %s15, 1
    %p159 = scmp.ne.s32.totalorder %s154, %s156
    %p160 = scmp.eq.s32.totalorder %s15, 0
    %p161 = por %p159, %p160
    %p162 = scmp.ne.s32.totalorder %s154, %s156
    %p163 = scmp.eq.s32.totalorder %s20, 1
    %p164 = por %p162, %p163
    %p165 = scmp.ne.s32.totalorder %s156, %s157
    %p166 = scmp.eq.s32.totalorder %s20, 0
    %p167 = por %p165, %p166
    %p168 = scmp.ne.s32.totalorder %s156, %s157
    %p169 = scmp.eq.s32.totalorder %s21, 1
    %p170 = por %p168, %p169
    %p172 = scmp.ne.s32.totalorder %s157, %s171
    %p173 = scmp.eq.s32.totalorder %s21, 0
    %p174 = por %p172, %p173
    %s176 = sadd.s32 %s175, 1
    %p179 = scmp.eq.s32.totalorder %s15, 1
    %p180 = scmp.ne.s32.totalorder %s175, %s177
    %p181 = scmp.eq.s32.totalorder %s15, 0
    %p182 = por %p180, %p181
    %p183 = scmp.ne.s32.totalorder %s175, %s177
    %p184 = scmp.eq.s32.totalorder %s20, 1
    %p185 = por %p183, %p184
    %p186 = scmp.ne.s32.totalorder %s177, %s178
    %p187 = scmp.eq.s32.totalorder %s20, 0
    %p188 = por %p186, %p187
    %p189 = scmp.ne.s32.totalorder %s177, %s178
    %p190 = scmp.eq.s32.totalorder %s21, 1
    %p191 = por %p189, %p190
    %p193 = scmp.ne.s32.totalorder %s178, %s192
    %p194 = scmp.eq.s32.totalorder %s21, 0
    %p195 = por %p193, %p194
    %s196 = ssub.s32 %s15, %s22
    %p197 = scmp.eq.s32.totalorder %s196, 0
    %s199 = sadd.s32 %s198, 1
    %s200 = scalar_select %p197, %s198, %s199
    %p203 = pneg %p197
    %p204 = scmp.eq.s32.totalorder %s15, 1
    %p205 = por %p203, %p204
    %p206 = scmp.ne.s32.totalorder %s198, %s201
    %p207 = scmp.eq.s32.totalorder %s15, 0
    %p208 = por %p206, %p207
    %p209 = scmp.ne.s32.totalorder %s198, %s201
    %p210 = scmp.eq.s32.totalorder %s20, 1
    %p211 = por %p209, %p210
    %p212 = scmp.ne.s32.totalorder %s201, %s202
    %p213 = scmp.eq.s32.totalorder %s20, 0
    %p214 = por %p212, %p213
    %p215 = scmp.ne.s32.totalorder %s201, %s202
    %p216 = scmp.eq.s32.totalorder %s21, 1
    %p217 = por %p215, %p216
    %p219 = scmp.ne.s32.totalorder %s202, %s218
    %p220 = scmp.eq.s32.totalorder %s21, 0
    %p221 = por %p219, %p220
    %p222 = scmp.le.s32.totalorder 1, %s15
    %p223 = scmp.lt.s32.totalorder %s15, 3
    %p224 = pnand %p222, %p223
    %p225 = pneg %p224
    // Predicated region
    $region9: #{tpu_custom_call.1} parent=5 // pred_check
      _
    $region10: #{tpu_custom_call.1} parent=5 // pred_check_branch
      %227 = sbr.rel (%p224) target = $region12
    $region11: #{tpu_custom_call.1} parent=5 // pred_region
      %s228 = ssub.s32 %s15, 1
      // Predicated region
      $region13: #{tpu_custom_call.1} parent=11 // pred_check
        %p229 = pneg %p62
      $region14: #{tpu_custom_call.1} parent=11 // pred_check_branch
        %231 = sbr.rel (%p229) target = $region16
      $region15: #{tpu_custom_call.1} parent=11 // pred_region
        _
      $region16: #{tpu_custom_call.1} parent=11 // pred_fallthru
        _
      // Predicated region
      $region17: #{tpu_custom_call.1} parent=11 // pred_check
        %p232 = pneg %p83
      $region18: #{tpu_custom_call.1} parent=11 // pred_check_branch
        %234 = sbr.rel (%p232) target = $region20
      $region19: #{tpu_custom_call.1} parent=11 // pred_region
        _
      $region20: #{tpu_custom_call.1} parent=11 // pred_fallthru
        _
      // Predicated region
      $region21: #{tpu_custom_call.1} parent=11 // pred_check
        %p235 = pneg %p104
      $region22: #{tpu_custom_call.1} parent=11 // pred_check_branch
        %237 = sbr.rel (%p235) target = $region24
      $region23: #{tpu_custom_call.1} parent=11 // pred_region
        _
      $region24: #{tpu_custom_call.1} parent=11 // pred_fallthru
        _
      // Predicated region
      $region25: #{tpu_custom_call.1} parent=11 // pred_check
        %p238 = pneg %p125
      $region26: #{tpu_custom_call.1} parent=11 // pred_check_branch
        %240 = sbr.rel (%p238) target = $region28
      $region27: #{tpu_custom_call.1} parent=11 // pred_region
        _
      $region28: #{tpu_custom_call.1} parent=11 // pred_fallthru
        _
      // Predicated region
      $region29: #{tpu_custom_call.1} parent=11 // pred_check
        %p241 = pneg %p146
      $region30: #{tpu_custom_call.1} parent=11 // pred_check_branch
        %243 = sbr.rel (%p241) target = $region32
      $region31: #{tpu_custom_call.1} parent=11 // pred_region
        _
      $region32: #{tpu_custom_call.1} parent=11 // pred_fallthru
        _
      // Predicated region
      $region33: #{tpu_custom_call.1} parent=11 // pred_check
        %p244 = pneg %p167
      $region34: #{tpu_custom_call.1} parent=11 // pred_check_branch
        %246 = sbr.rel (%p244) target = $region36
      $region35: #{tpu_custom_call.1} parent=11 // pred_region
        _
      $region36: #{tpu_custom_call.1} parent=11 // pred_fallthru
        _
      // Predicated region
      $region37: #{tpu_custom_call.1} parent=11 // pred_check
        %p247 = pneg %p188
      $region38: #{tpu_custom_call.1} parent=11 // pred_check_branch
        %249 = sbr.rel (%p247) target = $region40
      $region39: #{tpu_custom_call.1} parent=11 // pred_region
        _
      $region40: #{tpu_custom_call.1} parent=11 // pred_fallthru
        _
    $region12: #{tpu_custom_call.1} parent=5 // pred_fallthru
      _
    %p250 = scmp.lt.s32.totalorder %s15, 2
    // Predicated region
    $region41: #{tpu_custom_call.1} parent=5 // pred_check
      %p251 = pneg %p250
    $region42: #{tpu_custom_call.1} parent=5 // pred_check_branch
      %253 = sbr.rel (%p251) target = $region44
    $region43: #{tpu_custom_call.1} parent=5 // pred_region
      // Predicated region
      $region45: #{tpu_custom_call.1} parent=43 // pred_check
        %p254 = pneg %p35
      $region46: #{tpu_custom_call.1} parent=43 // pred_check_branch
        %256 = sbr.rel (%p254) target = $region48
      $region47: #{tpu_custom_call.1} parent=43 // pred_region
        %p257 = scmp.lt.s32.totalorder %s15, 1
        %s258 = scalar_select %p257, %s15, 1
        %s259 = smul.addr %s258, 32
        %s260 = smul.addr %s259, 8
        %s261 = scalar_lea.vmem %s0, %s260
      $region48: #{tpu_custom_call.1} parent=43 // pred_fallthru
        _
    $region44: #{tpu_custom_call.1} parent=5 // pred_fallthru
      _
    %p262 = scmp.le.s32.totalorder 1, %s15
    %p263 = scmp.lt.s32.totalorder %s15, 3
    %p264 = pnand %p262, %p263
    %p265 = pneg %p264
    // Predicated region
    $region49: #{tpu_custom_call.1} parent=5 // pred_check
      _
    $region50: #{tpu_custom_call.1} parent=5 // pred_check_branch
      %267 = sbr.rel (%p264) target = $region52
    $region51: #{tpu_custom_call.1} parent=5 // pred_region
      %s268 = ssub.s32 %s15, 1
      %p269 = scmp.lt.s32.totalorder %s20, 1
      %s270 = scalar_select %p269, %s20, 1
      %s271 = smul.addr %s270, 32
      %s272 = smul.addr %s271, 8
      %s273 = scalar_lea.vmem %s0, %s272
      %p274 = pneg %p41
      %p275 = pneg %p38
      %p276 = pneg %p62
      %p277 = pneg %p59
      %p278 = pneg %p83
      %p279 = pneg %p80
      %p280 = pneg %p104
      %p281 = pneg %p101
      %p282 = pneg %p125
      %p283 = pneg %p122
      %p284 = pneg %p146
      %p285 = pneg %p143
      %p286 = pneg %p167
      %p287 = pneg %p164
      %p288 = pneg %p188
      %p289 = pneg %p185
      %p290 = pneg %p214
      %p291 = pneg %p211
      %p292 = scmp.lt.s32.totalorder %s20, 1
      %s293 = scalar_select %p292, %s20, 1
      %s294 = smul.addr %s293, 32
      %s295 = smul.addr %s294, 8
      %s296 = scalar_lea.vmem %s8, %s295
      %p297 = scmp.lt.s32.totalorder %s20, 1
      %s298 = scalar_select %p297, %s20, 1
      %s299 = smul.addr %s298, 32
      %s300 = smul.addr %s299, 8
      %s301 = scalar_lea.vmem %s0, %s300
      %p302 = scmp.lt.s32.totalorder %s20, 1
      %s303 = scalar_select %p302, %s20, 1
      %s304 = smul.addr %s303, 32
      %s305 = smul.addr %s304, 8
      %s306 = scalar_lea.vmem %s8, %s305
      %v307 = vld [vmem:[%s301] sm:$0xff]
      %v308 = vld [vmem:[%s301 + $0x8] sm:$0xff]
      %v309 = vld [vmem:[%s301 + $0x10] sm:$0xff]
      %v310 = vld [vmem:[%s301 + $0x18] sm:$0xff]
      %v311 = vld [vmem:[%s301 + $0x20] sm:$0xff]
      %v312 = vld [vmem:[%s301 + $0x28] sm:$0xff]
      %v313 = vld [vmem:[%s301 + $0x30] sm:$0xff]
      %v314 = vld [vmem:[%s301 + $0x38] sm:$0xff]
      %v315 = vld [vmem:[%s301 + $0x40] sm:$0xff]
      %v316 = vld [vmem:[%s301 + $0x48] sm:$0xff]
      %v317 = vld [vmem:[%s301 + $0x50] sm:$0xff]
      %v318 = vld [vmem:[%s301 + $0x58] sm:$0xff]
      %v319 = vld [vmem:[%s301 + $0x60] sm:$0xff]
      %v320 = vld [vmem:[%s301 + $0x68] sm:$0xff]
      %v321 = vld [vmem:[%s301 + $0x70] sm:$0xff]
      %v322 = vld [vmem:[%s301 + $0x78] sm:$0xff]
      %v323 = vld [vmem:[%s301 + $0x80] sm:$0xff]
      %v324 = vld [vmem:[%s301 + $0x88] sm:$0xff]
      %v325 = vld [vmem:[%s301 + $0x90] sm:$0xff]
      %v326 = vld [vmem:[%s301 + $0x98] sm:$0xff]
      %v327 = vld [vmem:[%s301 + $0xa0] sm:$0xff]
      %v328 = vld [vmem:[%s301 + $0xa8] sm:$0xff]
      %v329 = vld [vmem:[%s301 + $0xb0] sm:$0xff]
      %v330 = vld [vmem:[%s301 + $0xb8] sm:$0xff]
      %v331 = vld [vmem:[%s301 + $0xc0] sm:$0xff]
      %v332 = vld [vmem:[%s301 + $0xc8] sm:$0xff]
      %v333 = vld [vmem:[%s301 + $0xd0] sm:$0xff]
      %v334 = vld [vmem:[%s301 + $0xd8] sm:$0xff]
      %v335 = vld [vmem:[%s301 + $0xe0] sm:$0xff]
      %v336 = vld [vmem:[%s301 + $0xe8] sm:$0xff]
      %v337 = vld [vmem:[%s301 + $0xf0] sm:$0xff]
      %v338 = vld [vmem:[%s301 + $0xf8] sm:$0xff]
      %v339 = vld [vmem:[%s1] sm:$0xff]
      %v340 = vld [vmem:[%s1 + $0x8] sm:$0xff]
      %v341 = vld [vmem:[%s1 + $0x10] sm:$0xff]
      %v342 = vld [vmem:[%s1 + $0x18] sm:$0xff]
      %v343 = vld [vmem:[%s2] sm:$0x1]
      %v345 = vperm.slane %v343, 0
      %vm347 = vcmask 261120
      %v349 = vsel %vm347, %v307, 0
      %v352 = vsel %vm347, %v308, 0
      %v355 = vsel %vm347, %v309, 0
      %v358 = vsel %vm347, %v310, 0
      %v361 = vsel %vm347, %v311, 0
      %v364 = vsel %vm347, %v312, 0
      %v367 = vsel %vm347, %v313, 0
      %v370 = vsel %vm347, %v314, 0
      %v373 = vsel %vm347, %v315, 0
      %v376 = vsel %vm347, %v316, 0
      %v379 = vsel %vm347, %v317, 0
      %v382 = vsel %vm347, %v318, 0
      %v385 = vsel %vm347, %v319, 0
      %v388 = vsel %vm347, %v320, 0
      %v391 = vsel %vm347, %v321, 0
      %v394 = vsel %vm347, %v322, 0
      %v397 = vsel %vm347, %v323, 0
      %v400 = vsel %vm347, %v324, 0
      %v403 = vsel %vm347, %v325, 0
      %v406 = vsel %vm347, %v326, 0
      %v409 = vsel %vm347, %v327, 0
      %v412 = vsel %vm347, %v328, 0
      %v415 = vsel %vm347, %v329, 0
      %v418 = vsel %vm347, %v330, 0
      %v421 = vsel %vm347, %v331, 0
      %v424 = vsel %vm347, %v332, 0
      %v427 = vsel %vm347, %v333, 0
      %v430 = vsel %vm347, %v334, 0
      %v433 = vsel %vm347, %v335, 0
      %v436 = vsel %vm347, %v336, 0
      %v439 = vsel %vm347, %v337, 0
      %v442 = vsel %vm347, %v338, 0
      %444 = vmatpush.msra.mxu0 0.0
      %445 = vmatpush.msra.mxu0 0.0
      %446 = vmatpush.msra.mxu0 0.0
      %447 = vmatpush.msra.mxu0 0.0
      %448 = vmatpush.msra.mxu0 0.0
      %449 = vmatpush.msra.mxu0 0.0
      %450 = vmatpush.msra.mxu0 0.0
      %451 = vmatpush.msra.mxu0 0.0
      %452 = vmatpush.msra.mxu0 0.0
      %453 = vmatpush.msra.mxu0 0.0
      %454 = vmatpush.msra.mxu0 0.0
      %455 = vmatpush.msra.mxu0 0.0
      %456 = vmatpush.msra.mxu0 %v342
      %457 = vmatpush.msra.mxu0 %v341
      %458 = vmatpush.msra.mxu0 %v340
      %459 = vmatpush.msra.mxu0 %v339
      %460 = vmatmul.f32.gmra.mxu0 %v349
      %v461 = vpop.f32.mrf.mxu0
      %v462 = vadd.f32 %v345, %v461
      %463 = vmatmul.f32.gmra.mxu0 %v352
      %v464 = vpop.f32.mrf.mxu0
      %v465 = vadd.f32 %v345, %v464
      %466 = vmatmul.f32.gmra.mxu0 %v355
      %v467 = vpop.f32.mrf.mxu0
      %v468 = vadd.f32 %v345, %v467
      %469 = vmatmul.f32.gmra.mxu0 %v358
      %v470 = vpop.f32.mrf.mxu0
      %v471 = vadd.f32 %v345, %v470
      %472 = vmatmul.f32.gmra.mxu0 %v361
      %v473 = vpop.f32.mrf.mxu0
      %v474 = vadd.f32 %v345, %v473
      %475 = vmatmul.f32.gmra.mxu0 %v364
      %v476 = vpop.f32.mrf.mxu0
      %v477 = vadd.f32 %v345, %v476
      %478 = vmatmul.f32.gmra.mxu0 %v367
      %v479 = vpop.f32.mrf.mxu0
      %v480 = vadd.f32 %v345, %v479
      %481 = vmatmul.f32.gmra.mxu0 %v370
      %v482 = vpop.f32.mrf.mxu0
      %v483 = vadd.f32 %v345, %v482
      %484 = vmatmul.f32.gmra.mxu0 %v373
      %v485 = vpop.f32.mrf.mxu0
      %v486 = vadd.f32 %v345, %v485
      %487 = vmatmul.f32.gmra.mxu0 %v376
      %v488 = vpop.f32.mrf.mxu0
      %v489 = vadd.f32 %v345, %v488
      %490 = vmatmul.f32.gmra.mxu0 %v379
      %v491 = vpop.f32.mrf.mxu0
      %v492 = vadd.f32 %v345, %v491
      %493 = vmatmul.f32.gmra.mxu0 %v382
      %v494 = vpop.f32.mrf.mxu0
      %v495 = vadd.f32 %v345, %v494
      %496 = vmatmul.f32.gmra.mxu0 %v385
      %v497 = vpop.f32.mrf.mxu0
      %v498 = vadd.f32 %v345, %v497
      %499 = vmatmul.f32.gmra.mxu0 %v388
      %v500 = vpop.f32.mrf.mxu0
      %v501 = vadd.f32 %v345, %v500
      %502 = vmatmul.f32.gmra.mxu0 %v391
      %v503 = vpop.f32.mrf.mxu0
      %v504 = vadd.f32 %v345, %v503
      %505 = vmatmul.f32.gmra.mxu0 %v394
      %v506 = vpop.f32.mrf.mxu0
      %v507 = vadd.f32 %v345, %v506
      %508 = vmatmul.f32.gmra.mxu0 %v397
      %v509 = vpop.f32.mrf.mxu0
      %v510 = vadd.f32 %v345, %v509
      %511 = vmatmul.f32.gmra.mxu0 %v400
      %v512 = vpop.f32.mrf.mxu0
      %v513 = vadd.f32 %v345, %v512
      %514 = vmatmul.f32.gmra.mxu0 %v403
      %v515 = vpop.f32.mrf.mxu0
      %v516 = vadd.f32 %v345, %v515
      %517 = vmatmul.f32.gmra.mxu0 %v406
      %v518 = vpop.f32.mrf.mxu0
      %v519 = vadd.f32 %v345, %v518
      %520 = vmatmul.f32.gmra.mxu0 %v409
      %v521 = vpop.f32.mrf.mxu0
      %v522 = vadd.f32 %v345, %v521
      %523 = vmatmul.f32.gmra.mxu0 %v412
      %v524 = vpop.f32.mrf.mxu0
      %v525 = vadd.f32 %v345, %v524
      %526 = vmatmul.f32.gmra.mxu0 %v415
      %v527 = vpop.f32.mrf.mxu0
      %v528 = vadd.f32 %v345, %v527
      %529 = vmatmul.f32.gmra.mxu0 %v418
      %v530 = vpop.f32.mrf.mxu0
      %v531 = vadd.f32 %v345, %v530
      %532 = vmatmul.f32.gmra.mxu0 %v421
      %v533 = vpop.f32.mrf.mxu0
      %v534 = vadd.f32 %v345, %v533
      %535 = vmatmul.f32.gmra.mxu0 %v424
      %v536 = vpop.f32.mrf.mxu0
      %v537 = vadd.f32 %v345, %v536
      %538 = vmatmul.f32.gmra.mxu0 %v427
      %v539 = vpop.f32.mrf.mxu0
      %v540 = vadd.f32 %v345, %v539
      %541 = vmatmul.f32.gmra.mxu0 %v430
      %v542 = vpop.f32.mrf.mxu0
      %v543 = vadd.f32 %v345, %v542
      %544 = vmatmul.f32.gmra.mxu0 %v433
      %v545 = vpop.f32.mrf.mxu0
      %v546 = vadd.f32 %v345, %v545
      %547 = vmatmul.f32.gmra.mxu0 %v436
      %v548 = vpop.f32.mrf.mxu0
      %v549 = vadd.f32 %v345, %v548
      %550 = vmatmul.f32.gmra.mxu0 %v439
      %v551 = vpop.f32.mrf.mxu0
      %v552 = vadd.f32 %v345, %v551
      %553 = vmatmul.f32.gmra.mxu0 %v442
      %v554 = vpop.f32.mrf.mxu0
      %v555 = vadd.f32 %v345, %v554
      %556 = vdwg.mxu0
      %v557 = vld [vmem:[%s3] sm:$0xff]
      %v558 = vld [vmem:[%s3 + $0x8] sm:$0xff]
      %v559 = vld [vmem:[%s3 + $0x10] sm:$0xff]
      %v560 = vld [vmem:[%s3 + $0x18] sm:$0xff]
      %v561 = vld [vmem:[%s4] sm:$0x1]
      %v563 = vperm.slane %v561, 0
      %565 = vmatpush.msra.mxu0 0.0
      %566 = vmatpush.msra.mxu0 0.0
      %567 = vmatpush.msra.mxu0 0.0
      %568 = vmatpush.msra.mxu0 0.0
      %569 = vmatpush.msra.mxu0 0.0
      %570 = vmatpush.msra.mxu0 0.0
      %571 = vmatpush.msra.mxu0 0.0
      %572 = vmatpush.msra.mxu0 0.0
      %573 = vmatpush.msra.mxu0 0.0
      %574 = vmatpush.msra.mxu0 0.0
      %575 = vmatpush.msra.mxu0 0.0
      %576 = vmatpush.msra.mxu0 0.0
      %577 = vmatpush.msra.mxu0 %v560
      %578 = vmatpush.msra.mxu0 %v559
      %579 = vmatpush.msra.mxu0 %v558
      %580 = vmatpush.msra.mxu0 %v557
      %581 = vmatmul.f32.gmra.mxu0 %v349
      %v582 = vpop.f32.mrf.mxu0
      %v583 = vadd.f32 %v563, %v582
      %584 = vmatmul.f32.gmra.mxu0 %v352
      %v585 = vpop.f32.mrf.mxu0
      %v586 = vadd.f32 %v563, %v585
      %587 = vmatmul.f32.gmra.mxu0 %v355
      %v588 = vpop.f32.mrf.mxu0
      %v589 = vadd.f32 %v563, %v588
      %590 = vmatmul.f32.gmra.mxu0 %v358
      %v591 = vpop.f32.mrf.mxu0
      %v592 = vadd.f32 %v563, %v591
      %593 = vmatmul.f32.gmra.mxu0 %v361
      %v594 = vpop.f32.mrf.mxu0
      %v595 = vadd.f32 %v563, %v594
      %596 = vmatmul.f32.gmra.mxu0 %v364
      %v597 = vpop.f32.mrf.mxu0
      %v598 = vadd.f32 %v563, %v597
      %599 = vmatmul.f32.gmra.mxu0 %v367
      %v600 = vpop.f32.mrf.mxu0
      %v601 = vadd.f32 %v563, %v600
      %602 = vmatmul.f32.gmra.mxu0 %v370
      %v603 = vpop.f32.mrf.mxu0
      %v604 = vadd.f32 %v563, %v603
      %605 = vmatmul.f32.gmra.mxu0 %v373
      %v606 = vpop.f32.mrf.mxu0
      %v607 = vadd.f32 %v563, %v606
      %608 = vmatmul.f32.gmra.mxu0 %v376
      %v609 = vpop.f32.mrf.mxu0
      %v610 = vadd.f32 %v563, %v609
      %611 = vmatmul.f32.gmra.mxu0 %v379
      %v612 = vpop.f32.mrf.mxu0
      %v613 = vadd.f32 %v563, %v612
      %614 = vmatmul.f32.gmra.mxu0 %v382
      %v615 = vpop.f32.mrf.mxu0
      %v616 = vadd.f32 %v563, %v615
      %617 = vmatmul.f32.gmra.mxu0 %v385
      %v618 = vpop.f32.mrf.mxu0
      %v619 = vadd.f32 %v563, %v618
      %620 = vmatmul.f32.gmra.mxu0 %v388
      %v621 = vpop.f32.mrf.mxu0
      %v622 = vadd.f32 %v563, %v621
      %623 = vmatmul.f32.gmra.mxu0 %v391
      %v624 = vpop.f32.mrf.mxu0
      %v625 = vadd.f32 %v563, %v624
      %626 = vmatmul.f32.gmra.mxu0 %v394
      %v627 = vpop.f32.mrf.mxu0
      %v628 = vadd.f32 %v563, %v627
      %629 = vmatmul.f32.gmra.mxu0 %v397
      %v630 = vpop.f32.mrf.mxu0
      %v631 = vadd.f32 %v563, %v630
      %632 = vmatmul.f32.gmra.mxu0 %v400
      %v633 = vpop.f32.mrf.mxu0
      %v634 = vadd.f32 %v563, %v633
      %635 = vmatmul.f32.gmra.mxu0 %v403
      %v636 = vpop.f32.mrf.mxu0
      %v637 = vadd.f32 %v563, %v636
      %638 = vmatmul.f32.gmra.mxu0 %v406
      %v639 = vpop.f32.mrf.mxu0
      %v640 = vadd.f32 %v563, %v639
      %641 = vmatmul.f32.gmra.mxu0 %v409
      %v642 = vpop.f32.mrf.mxu0
      %v643 = vadd.f32 %v563, %v642
      %644 = vmatmul.f32.gmra.mxu0 %v412
      %v645 = vpop.f32.mrf.mxu0
      %v646 = vadd.f32 %v563, %v645
      %647 = vmatmul.f32.gmra.mxu0 %v415
      %v648 = vpop.f32.mrf.mxu0
      %v649 = vadd.f32 %v563, %v648
      %650 = vmatmul.f32.gmra.mxu0 %v418
      %v651 = vpop.f32.mrf.mxu0
      %v652 = vadd.f32 %v563, %v651
      %653 = vmatmul.f32.gmra.mxu0 %v421
      %v654 = vpop.f32.mrf.mxu0
      %v655 = vadd.f32 %v563, %v654
      %656 = vmatmul.f32.gmra.mxu0 %v424
      %v657 = vpop.f32.mrf.mxu0
      %v658 = vadd.f32 %v563, %v657
      %659 = vmatmul.f32.gmra.mxu0 %v427
      %v660 = vpop.f32.mrf.mxu0
      %v661 = vadd.f32 %v563, %v660
      %662 = vmatmul.f32.gmra.mxu0 %v430
      %v663 = vpop.f32.mrf.mxu0
      %v664 = vadd.f32 %v563, %v663
      %665 = vmatmul.f32.gmra.mxu0 %v433
      %v666 = vpop.f32.mrf.mxu0
      %v667 = vadd.f32 %v563, %v666
      %668 = vmatmul.f32.gmra.mxu0 %v436
      %v669 = vpop.f32.mrf.mxu0
      %v670 = vadd.f32 %v563, %v669
      %671 = vmatmul.f32.gmra.mxu0 %v439
      %v672 = vpop.f32.mrf.mxu0
      %v673 = vadd.f32 %v563, %v672
      %674 = vmatmul.f32.gmra.mxu0 %v442
      %v675 = vpop.f32.mrf.mxu0
      %v676 = vadd.f32 %v563, %v675
      %677 = vdwg.mxu0
      %v678 = vld [vmem:[%s5] sm:$0xff]
      %v679 = vld [vmem:[%s5 + $0x8] sm:$0xff]
      %v680 = vld [vmem:[%s5 + $0x10] sm:$0xff]
      %v681 = vld [vmem:[%s5 + $0x18] sm:$0xff]
      %v682 = vld [vmem:[%s6] sm:$0x1]
      %v684 = vperm.slane %v682, 0
      %686 = vmatpush.msra.mxu0 0.0
      %687 = vmatpush.msra.mxu0 0.0
      %688 = vmatpush.msra.mxu0 0.0
      %689 = vmatpush.msra.mxu0 0.0
      %690 = vmatpush.msra.mxu0 0.0
      %691 = vmatpush.msra.mxu0 0.0
      %692 = vmatpush.msra.mxu0 0.0
      %693 = vmatpush.msra.mxu0 0.0
      %694 = vmatpush.msra.mxu0 0.0
      %695 = vmatpush.msra.mxu0 0.0
      %696 = vmatpush.msra.mxu0 0.0
      %697 = vmatpush.msra.mxu0 0.0
      %698 = vmatpush.msra.mxu0 %v681
      %699 = vmatpush.msra.mxu0 %v680
      %700 = vmatpush.msra.mxu0 %v679
      %701 = vmatpush.msra.mxu0 %v678
      %702 = vmatmul.f32.gmra.mxu0 %v349
      %v703 = vpop.f32.mrf.mxu0
      %v704 = vadd.f32 %v684, %v703
      %705 = vmatmul.f32.gmra.mxu0 %v352
      %v706 = vpop.f32.mrf.mxu0
      %v707 = vadd.f32 %v684, %v706
      %708 = vmatmul.f32.gmra.mxu0 %v355
      %v709 = vpop.f32.mrf.mxu0
      %v710 = vadd.f32 %v684, %v709
      %711 = vmatmul.f32.gmra.mxu0 %v358
      %v712 = vpop.f32.mrf.mxu0
      %v713 = vadd.f32 %v684, %v712
      %714 = vmatmul.f32.gmra.mxu0 %v361
      %v715 = vpop.f32.mrf.mxu0
      %v716 = vadd.f32 %v684, %v715
      %717 = vmatmul.f32.gmra.mxu0 %v364
      %v718 = vpop.f32.mrf.mxu0
      %v719 = vadd.f32 %v684, %v718
      %720 = vmatmul.f32.gmra.mxu0 %v367
      %v721 = vpop.f32.mrf.mxu0
      %v722 = vadd.f32 %v684, %v721
      %723 = vmatmul.f32.gmra.mxu0 %v370
      %v724 = vpop.f32.mrf.mxu0
      %v725 = vadd.f32 %v684, %v724
      %726 = vmatmul.f32.gmra.mxu0 %v373
      %v727 = vpop.f32.mrf.mxu0
      %v728 = vadd.f32 %v684, %v727
      %729 = vmatmul.f32.gmra.mxu0 %v376
      %v730 = vpop.f32.mrf.mxu0
      %v731 = vadd.f32 %v684, %v730
      %732 = vmatmul.f32.gmra.mxu0 %v379
      %v733 = vpop.f32.mrf.mxu0
      %v734 = vadd.f32 %v684, %v733
      %735 = vmatmul.f32.gmra.mxu0 %v382
      %v736 = vpop.f32.mrf.mxu0
      %v737 = vadd.f32 %v684, %v736
      %738 = vmatmul.f32.gmra.mxu0 %v385
      %v739 = vpop.f32.mrf.mxu0
      %v740 = vadd.f32 %v684, %v739
      %741 = vmatmul.f32.gmra.mxu0 %v388
      %v742 = vpop.f32.mrf.mxu0
      %v743 = vadd.f32 %v684, %v742
      %744 = vmatmul.f32.gmra.mxu0 %v391
      %v745 = vpop.f32.mrf.mxu0
      %v746 = vadd.f32 %v684, %v745
      %747 = vmatmul.f32.gmra.mxu0 %v394
      %v748 = vpop.f32.mrf.mxu0
      %v749 = vadd.f32 %v684, %v748
      %750 = vmatmul.f32.gmra.mxu0 %v397
      %v751 = vpop.f32.mrf.mxu0
      %v752 = vadd.f32 %v684, %v751
      %753 = vmatmul.f32.gmra.mxu0 %v400
      %v754 = vpop.f32.mrf.mxu0
      %v755 = vadd.f32 %v684, %v754
      %756 = vmatmul.f32.gmra.mxu0 %v403
      %v757 = vpop.f32.mrf.mxu0
      %v758 = vadd.f32 %v684, %v757
      %759 = vmatmul.f32.gmra.mxu0 %v406
      %v760 = vpop.f32.mrf.mxu0
      %v761 = vadd.f32 %v684, %v760
      %762 = vmatmul.f32.gmra.mxu0 %v409
      %v763 = vpop.f32.mrf.mxu0
      %v764 = vadd.f32 %v684, %v763
      %765 = vmatmul.f32.gmra.mxu0 %v412
      %v766 = vpop.f32.mrf.mxu0
      %v767 = vadd.f32 %v684, %v766
      %768 = vmatmul.f32.gmra.mxu0 %v415
      %v769 = vpop.f32.mrf.mxu0
      %v770 = vadd.f32 %v684, %v769
      %771 = vmatmul.f32.gmra.mxu0 %v418
      %v772 = vpop.f32.mrf.mxu0
      %v773 = vadd.f32 %v684, %v772
      %774 = vmatmul.f32.gmra.mxu0 %v421
      %v775 = vpop.f32.mrf.mxu0
      %v776 = vadd.f32 %v684, %v775
      %777 = vmatmul.f32.gmra.mxu0 %v424
      %v778 = vpop.f32.mrf.mxu0
      %v779 = vadd.f32 %v684, %v778
      %780 = vmatmul.f32.gmra.mxu0 %v427
      %v781 = vpop.f32.mrf.mxu0
      %v782 = vadd.f32 %v684, %v781
      %783 = vmatmul.f32.gmra.mxu0 %v430
      %v784 = vpop.f32.mrf.mxu0
      %v785 = vadd.f32 %v684, %v784
      %786 = vmatmul.f32.gmra.mxu0 %v433
      %v787 = vpop.f32.mrf.mxu0
      %v788 = vadd.f32 %v684, %v787
      %789 = vmatmul.f32.gmra.mxu0 %v436
      %v790 = vpop.f32.mrf.mxu0
      %v791 = vadd.f32 %v684, %v790
      %792 = vmatmul.f32.gmra.mxu0 %v439
      %v793 = vpop.f32.mrf.mxu0
      %v794 = vadd.f32 %v684, %v793
      %795 = vmatmul.f32.gmra.mxu0 %v442
      %v796 = vpop.f32.mrf.mxu0
      %v797 = vadd.f32 %v684, %v796
      %798 = vdwg.mxu0
      %v799 = vrot.slane %v474, 4
      %vm800 = vcmask 1047556
      %v801 = vsel %vm800, %v799, %v462
      %v802 = vrot.slane %v462, 4
      %v803 = vsel %vm800, %v474, %v802
      %v805 = vunpack.c.l.s4 1983009808
      %v806 = vunpack.c.0.s8 %v805
      %v807 = vperm.slane %v801, %v806
      %v809 = vunpack.c.l.s4 1983009808
      %v810 = vunpack.c.0.s8 %v809
      %v811 = vperm.slane %v803, %v810
      %v812 = vrot.slane %v480, 4
      %v813 = vsel %vm800, %v812, %v468
      %v814 = vrot.slane %v468, 4
      %v815 = vsel %vm800, %v480, %v814
      %v817 = vunpack.c.l.s4 1983009808
      %v818 = vunpack.c.0.s8 %v817
      %v819 = vperm.slane %v813, %v818
      %v821 = vunpack.c.l.s4 1983009808
      %v822 = vunpack.c.0.s8 %v821
      %v823 = vperm.slane %v815, %v822
      %v824 = vrot.slane %v498, 4
      %v825 = vsel %vm800, %v824, %v486
      %v826 = vrot.slane %v486, 4
      %v827 = vsel %vm800, %v498, %v826
      %v829 = vunpack.c.l.s4 1983009808
      %v830 = vunpack.c.0.s8 %v829
      %v831 = vperm.slane %v825, %v830
      %v833 = vunpack.c.l.s4 1983009808
      %v834 = vunpack.c.0.s8 %v833
      %v835 = vperm.slane %v827, %v834
      %v836 = vrot.slane %v504, 4
      %v837 = vsel %vm800, %v836, %v492
      %v838 = vrot.slane %v492, 4
      %v839 = vsel %vm800, %v504, %v838
      %v841 = vunpack.c.l.s4 1983009808
      %v842 = vunpack.c.0.s8 %v841
      %v843 = vperm.slane %v837, %v842
      %v845 = vunpack.c.l.s4 1983009808
      %v846 = vunpack.c.0.s8 %v845
      %v847 = vperm.slane %v839, %v846
      %v848 = vrot.slane %v819, 4
      %v849 = vsel %vm800, %v848, %v807
      %v850 = vrot.slane %v807, 4
      %v851 = vsel %vm800, %v819, %v850
      %v853 = vunpack.c.l.s4 1934713408
      %v854 = vunpack.c.0.s8 %v853
      %v855 = vperm.slane %v849, %v854
      %v857 = vunpack.c.l.s4 1934713408
      %v858 = vunpack.c.0.s8 %v857
      %v859 = vperm.slane %v851, %v858
      %v860 = vrot.slane %v823, 4
      %v861 = vsel %vm800, %v860, %v811
      %v862 = vrot.slane %v811, 4
      %v863 = vsel %vm800, %v823, %v862
      %v865 = vunpack.c.l.s4 1934713408
      %v866 = vunpack.c.0.s8 %v865
      %v867 = vperm.slane %v861, %v866
      %v869 = vunpack.c.l.s4 1934713408
      %v870 = vunpack.c.0.s8 %v869
      %v871 = vperm.slane %v863, %v870
      %v872 = vrot.slane %v843, 4
      %v873 = vsel %vm800, %v872, %v831
      %v874 = vrot.slane %v831, 4
      %v875 = vsel %vm800, %v843, %v874
      %v877 = vunpack.c.l.s4 1934713408
      %v878 = vunpack.c.0.s8 %v877
      %v879 = vperm.slane %v873, %v878
      %v881 = vunpack.c.l.s4 1934713408
      %v882 = vunpack.c.0.s8 %v881
      %v883 = vperm.slane %v875, %v882
      %v884 = vrot.slane %v847, 4
      %v885 = vsel %vm800, %v884, %v835
      %v886 = vrot.slane %v835, 4
      %v887 = vsel %vm800, %v847, %v886
      %v889 = vunpack.c.l.s4 1934713408
      %v890 = vunpack.c.0.s8 %v889
      %v891 = vperm.slane %v885, %v890
      %v893 = vunpack.c.l.s4 1934713408
      %v894 = vunpack.c.0.s8 %v893
      %v895 = vperm.slane %v887, %v894
      %v896 = vrot.slane %v879, 4
      %v897 = vsel %vm800, %v896, %v855
      %v898 = vrot.slane %v855, 4
      %v899 = vsel %vm800, %v879, %v898
      %v900 = vrot.slane %v883, 4
      %v901 = vsel %vm800, %v900, %v859
      %v902 = vrot.slane %v859, 4
      %v903 = vsel %vm800, %v883, %v902
      %v904 = vrot.slane %v891, 4
      %v905 = vsel %vm800, %v904, %v867
      %v906 = vrot.slane %v867, 4
      %v907 = vsel %vm800, %v891, %v906
      %v908 = vrot.slane %v895, 4
      %v909 = vsel %vm800, %v908, %v871
      %v910 = vrot.slane %v871, 4
      %v911 = vsel %vm800, %v895, %v910
      %v912 = vrot.slane %v522, 4
      %v913 = vsel %vm800, %v912, %v510
      %v914 = vrot.slane %v510, 4
      %v915 = vsel %vm800, %v522, %v914
      %v917 = vunpack.c.l.s4 1983009808
      %v918 = vunpack.c.0.s8 %v917
      %v919 = vperm.slane %v913, %v918
      %v921 = vunpack.c.l.s4 1983009808
      %v922 = vunpack.c.0.s8 %v921
      %v923 = vperm.slane %v915, %v922
      %v924 = vrot.slane %v528, 4
      %v925 = vsel %vm800, %v924, %v516
      %v926 = vrot.slane %v516, 4
      %v927 = vsel %vm800, %v528, %v926
      %v929 = vunpack.c.l.s4 1983009808
      %v930 = vunpack.c.0.s8 %v929
      %v931 = vperm.slane %v925, %v930
      %v933 = vunpack.c.l.s4 1983009808
      %v934 = vunpack.c.0.s8 %v933
      %v935 = vperm.slane %v927, %v934
      %v936 = vrot.slane %v546, 4
      %v937 = vsel %vm800, %v936, %v534
      %v938 = vrot.slane %v534, 4
      %v939 = vsel %vm800, %v546, %v938
      %v941 = vunpack.c.l.s4 1983009808
      %v942 = vunpack.c.0.s8 %v941
      %v943 = vperm.slane %v937, %v942
      %v945 = vunpack.c.l.s4 1983009808
      %v946 = vunpack.c.0.s8 %v945
      %v947 = vperm.slane %v939, %v946
      %v948 = vrot.slane %v552, 4
      %v949 = vsel %vm800, %v948, %v540
      %v950 = vrot.slane %v540, 4
      %v951 = vsel %vm800, %v552, %v950
      %v953 = vunpack.c.l.s4 1983009808
      %v954 = vunpack.c.0.s8 %v953
      %v955 = vperm.slane %v949, %v954
      %v957 = vunpack.c.l.s4 1983009808
      %v958 = vunpack.c.0.s8 %v957
      %v959 = vperm.slane %v951, %v958
      %v960 = vrot.slane %v931, 4
      %v961 = vsel %vm800, %v960, %v919
      %v962 = vrot.slane %v919, 4
      %v963 = vsel %vm800, %v931, %v962
      %v965 = vunpack.c.l.s4 1934713408
      %v966 = vunpack.c.0.s8 %v965
      %v967 = vperm.slane %v961, %v966
      %v969 = vunpack.c.l.s4 1934713408
      %v970 = vunpack.c.0.s8 %v969
      %v971 = vperm.slane %v963, %v970
      %v972 = vrot.slane %v935, 4
      %v973 = vsel %vm800, %v972, %v923
      %v974 = vrot.slane %v923, 4
      %v975 = vsel %vm800, %v935, %v974
      %v977 = vunpack.c.l.s4 1934713408
      %v978 = vunpack.c.0.s8 %v977
      %v979 = vperm.slane %v973, %v978
      %v981 = vunpack.c.l.s4 1934713408
      %v982 = vunpack.c.0.s8 %v981
      %v983 = vperm.slane %v975, %v982
      %v984 = vrot.slane %v955, 4
      %v985 = vsel %vm800, %v984, %v943
      %v986 = vrot.slane %v943, 4
      %v987 = vsel %vm800, %v955, %v986
      %v989 = vunpack.c.l.s4 1934713408
      %v990 = vunpack.c.0.s8 %v989
      %v991 = vperm.slane %v985, %v990
      %v993 = vunpack.c.l.s4 1934713408
      %v994 = vunpack.c.0.s8 %v993
      %v995 = vperm.slane %v987, %v994
      %v996 = vrot.slane %v959, 4
      %v997 = vsel %vm800, %v996, %v947
      %v998 = vrot.slane %v947, 4
      %v999 = vsel %vm800, %v959, %v998
      %v1001 = vunpack.c.l.s4 1934713408
      %v1002 = vunpack.c.0.s8 %v1001
      %v1003 = vperm.slane %v997, %v1002
      %v1005 = vunpack.c.l.s4 1934713408
      %v1006 = vunpack.c.0.s8 %v1005
      %v1007 = vperm.slane %v999, %v1006
      %v1008 = vrot.slane %v991, 4
      %v1009 = vsel %vm800, %v1008, %v967
      %v1010 = vrot.slane %v967, 4
      %v1011 = vsel %vm800, %v991, %v1010
      %v1012 = vrot.slane %v995, 4
      %v1013 = vsel %vm800, %v1012, %v971
      %v1014 = vrot.slane %v971, 4
      %v1015 = vsel %vm800, %v995, %v1014
      %v1016 = vrot.slane %v1003, 4
      %v1017 = vsel %vm800, %v1016, %v979
      %v1018 = vrot.slane %v979, 4
      %v1019 = vsel %vm800, %v1003, %v1018
      %v1020 = vrot.slane %v1007, 4
      %v1021 = vsel %vm800, %v1020, %v983
      %v1022 = vrot.slane %v983, 4
      %v1023 = vsel %vm800, %v1007, %v1022
      %v1024 = vrot.slane %v477, 4
      %v1025 = vsel %vm800, %v1024, %v465
      %v1026 = vrot.slane %v465, 4
      %v1027 = vsel %vm800, %v477, %v1026
      %v1029 = vunpack.c.l.s4 1983009808
      %v1030 = vunpack.c.0.s8 %v1029
      %v1031 = vperm.slane %v1025, %v1030
      %v1033 = vunpack.c.l.s4 1983009808
      %v1034 = vunpack.c.0.s8 %v1033
      %v1035 = vperm.slane %v1027, %v1034
      %v1036 = vrot.slane %v483, 4
      %v1037 = vsel %vm800, %v1036, %v471
      %v1038 = vrot.slane %v471, 4
      %v1039 = vsel %vm800, %v483, %v1038
      %v1041 = vunpack.c.l.s4 1983009808
      %v1042 = vunpack.c.0.s8 %v1041
      %v1043 = vperm.slane %v1037, %v1042
      %v1045 = vunpack.c.l.s4 1983009808
      %v1046 = vunpack.c.0.s8 %v1045
      %v1047 = vperm.slane %v1039, %v1046
      %v1048 = vrot.slane %v501, 4
      %v1049 = vsel %vm800, %v1048, %v489
      %v1050 = vrot.slane %v489, 4
      %v1051 = vsel %vm800, %v501, %v1050
      %v1053 = vunpack.c.l.s4 1983009808
      %v1054 = vunpack.c.0.s8 %v1053
      %v1055 = vperm.slane %v1049, %v1054
      %v1057 = vunpack.c.l.s4 1983009808
      %v1058 = vunpack.c.0.s8 %v1057
      %v1059 = vperm.slane %v1051, %v1058
      %v1060 = vrot.slane %v507, 4
      %v1061 = vsel %vm800, %v1060, %v495
      %v1062 = vrot.slane %v495, 4
      %v1063 = vsel %vm800, %v507, %v1062
      %v1065 = vunpack.c.l.s4 1983009808
      %v1066 = vunpack.c.0.s8 %v1065
      %v1067 = vperm.slane %v1061, %v1066
      %v1069 = vunpack.c.l.s4 1983009808
      %v1070 = vunpack.c.0.s8 %v1069
      %v1071 = vperm.slane %v1063, %v1070
      %v1072 = vrot.slane %v1043, 4
      %v1073 = vsel %vm800, %v1072, %v1031
      %v1074 = vrot.slane %v1031, 4
      %v1075 = vsel %vm800, %v1043, %v1074
      %v1077 = vunpack.c.l.s4 1934713408
      %v1078 = vunpack.c.0.s8 %v1077
      %v1079 = vperm.slane %v1073, %v1078
      %v1081 = vunpack.c.l.s4 1934713408
      %v1082 = vunpack.c.0.s8 %v1081
      %v1083 = vperm.slane %v1075, %v1082
      %v1084 = vrot.slane %v1047, 4
      %v1085 = vsel %vm800, %v1084, %v1035
      %v1086 = vrot.slane %v1035, 4
      %v1087 = vsel %vm800, %v1047, %v1086
      %v1089 = vunpack.c.l.s4 1934713408
      %v1090 = vunpack.c.0.s8 %v1089
      %v1091 = vperm.slane %v1085, %v1090
      %v1093 = vunpack.c.l.s4 1934713408
      %v1094 = vunpack.c.0.s8 %v1093
      %v1095 = vperm.slane %v1087, %v1094
      %v1096 = vrot.slane %v1067, 4
      %v1097 = vsel %vm800, %v1096, %v1055
      %v1098 = vrot.slane %v1055, 4
      %v1099 = vsel %vm800, %v1067, %v1098
      %v1101 = vunpack.c.l.s4 1934713408
      %v1102 = vunpack.c.0.s8 %v1101
      %v1103 = vperm.slane %v1097, %v1102
      %v1105 = vunpack.c.l.s4 1934713408
      %v1106 = vunpack.c.0.s8 %v1105
      %v1107 = vperm.slane %v1099, %v1106
      %v1108 = vrot.slane %v1071, 4
      %v1109 = vsel %vm800, %v1108, %v1059
      %v1110 = vrot.slane %v1059, 4
      %v1111 = vsel %vm800, %v1071, %v1110
      %v1113 = vunpack.c.l.s4 1934713408
      %v1114 = vunpack.c.0.s8 %v1113
      %v1115 = vperm.slane %v1109, %v1114
      %v1117 = vunpack.c.l.s4 1934713408
      %v1118 = vunpack.c.0.s8 %v1117
      %v1119 = vperm.slane %v1111, %v1118
      %v1120 = vrot.slane %v1103, 4
      %v1121 = vsel %vm800, %v1120, %v1079
      %v1122 = vrot.slane %v1079, 4
      %v1123 = vsel %vm800, %v1103, %v1122
      %v1124 = vrot.slane %v1107, 4
      %v1125 = vsel %vm800, %v1124, %v1083
      %v1126 = vrot.slane %v1083, 4
      %v1127 = vsel %vm800, %v1107, %v1126
      %v1128 = vrot.slane %v1115, 4
      %v1129 = vsel %vm800, %v1128, %v1091
      %v1130 = vrot.slane %v1091, 4
      %v1131 = vsel %vm800, %v1115, %v1130
      %v1132 = vrot.slane %v1119, 4
      %v1133 = vsel %vm800, %v1132, %v1095
      %v1134 = vrot.slane %v1095, 4
      %v1135 = vsel %vm800, %v1119, %v1134
      %v1136 = vrot.slane %v525, 4
      %v1137 = vsel %vm800, %v1136, %v513
      %v1138 = vrot.slane %v513, 4
      %v1139 = vsel %vm800, %v525, %v1138
      %v1141 = vunpack.c.l.s4 1983009808
      %v1142 = vunpack.c.0.s8 %v1141
      %v1143 = vperm.slane %v1137, %v1142
      %v1145 = vunpack.c.l.s4 1983009808
      %v1146 = vunpack.c.0.s8 %v1145
      %v1147 = vperm.slane %v1139, %v1146
      %v1148 = vrot.slane %v531, 4
      %v1149 = vsel %vm800, %v1148, %v519
      %v1150 = vrot.slane %v519, 4
      %v1151 = vsel %vm800, %v531, %v1150
      %v1153 = vunpack.c.l.s4 1983009808
      %v1154 = vunpack.c.0.s8 %v1153
      %v1155 = vperm.slane %v1149, %v1154
      %v1157 = vunpack.c.l.s4 1983009808
      %v1158 = vunpack.c.0.s8 %v1157
      %v1159 = vperm.slane %v1151, %v1158
      %v1160 = vrot.slane %v549, 4
      %v1161 = vsel %vm800, %v1160, %v537
      %v1162 = vrot.slane %v537, 4
      %v1163 = vsel %vm800, %v549, %v1162
      %v1165 = vunpack.c.l.s4 1983009808
      %v1166 = vunpack.c.0.s8 %v1165
      %v1167 = vperm.slane %v1161, %v1166
      %v1169 = vunpack.c.l.s4 1983009808
      %v1170 = vunpack.c.0.s8 %v1169
      %v1171 = vperm.slane %v1163, %v1170
      %v1172 = vrot.slane %v555, 4
      %v1173 = vsel %vm800, %v1172, %v543
      %v1174 = vrot.slane %v543, 4
      %v1175 = vsel %vm800, %v555, %v1174
      %v1177 = vunpack.c.l.s4 1983009808
      %v1178 = vunpack.c.0.s8 %v1177
      %v1179 = vperm.slane %v1173, %v1178
      %v1181 = vunpack.c.l.s4 1983009808
      %v1182 = vunpack.c.0.s8 %v1181
      %v1183 = vperm.slane %v1175, %v1182
      %v1184 = vrot.slane %v1155, 4
      %v1185 = vsel %vm800, %v1184, %v1143
      %v1186 = vrot.slane %v1143, 4
      %v1187 = vsel %vm800, %v1155, %v1186
      %v1189 = vunpack.c.l.s4 1934713408
      %v1190 = vunpack.c.0.s8 %v1189
      %v1191 = vperm.slane %v1185, %v1190
      %v1193 = vunpack.c.l.s4 1934713408
      %v1194 = vunpack.c.0.s8 %v1193
      %v1195 = vperm.slane %v1187, %v1194
      %v1196 = vrot.slane %v1159, 4
      %v1197 = vsel %vm800, %v1196, %v1147
      %v1198 = vrot.slane %v1147, 4
      %v1199 = vsel %vm800, %v1159, %v1198
      %v1201 = vunpack.c.l.s4 1934713408
      %v1202 = vunpack.c.0.s8 %v1201
      %v1203 = vperm.slane %v1197, %v1202
      %v1205 = vunpack.c.l.s4 1934713408
      %v1206 = vunpack.c.0.s8 %v1205
      %v1207 = vperm.slane %v1199, %v1206
      %v1208 = vrot.slane %v1179, 4
      %v1209 = vsel %vm800, %v1208, %v1167
      %v1210 = vrot.slane %v1167, 4
      %v1211 = vsel %vm800, %v1179, %v1210
      %v1213 = vunpack.c.l.s4 1934713408
      %v1214 = vunpack.c.0.s8 %v1213
      %v1215 = vperm.slane %v1209, %v1214
      %v1217 = vunpack.c.l.s4 1934713408
      %v1218 = vunpack.c.0.s8 %v1217
      %v1219 = vperm.slane %v1211, %v1218
      %v1220 = vrot.slane %v1183, 4
      %v1221 = vsel %vm800, %v1220, %v1171
      %v1222 = vrot.slane %v1171, 4
      %v1223 = vsel %vm800, %v1183, %v1222
      %v1225 = vunpack.c.l.s4 1934713408
      %v1226 = vunpack.c.0.s8 %v1225
      %v1227 = vperm.slane %v1221, %v1226
      %v1229 = vunpack.c.l.s4 1934713408
      %v1230 = vunpack.c.0.s8 %v1229
      %v1231 = vperm.slane %v1223, %v1230
      %v1232 = vrot.slane %v1215, 4
      %v1233 = vsel %vm800, %v1232, %v1191
      %v1234 = vrot.slane %v1191, 4
      %v1235 = vsel %vm800, %v1215, %v1234
      %v1236 = vrot.slane %v1219, 4
      %v1237 = vsel %vm800, %v1236, %v1195
      %v1238 = vrot.slane %v1195, 4
      %v1239 = vsel %vm800, %v1219, %v1238
      %v1240 = vrot.slane %v1227, 4
      %v1241 = vsel %vm800, %v1240, %v1203
      %v1242 = vrot.slane %v1203, 4
      %v1243 = vsel %vm800, %v1227, %v1242
      %v1244 = vrot.slane %v1231, 4
      %v1245 = vsel %vm800, %v1244, %v1207
      %v1246 = vrot.slane %v1207, 4
      %v1247 = vsel %vm800, %v1231, %v1246
      %v1248 = vrot.slane %v595, 4
      %v1249 = vsel %vm800, %v1248, %v583
      %v1250 = vrot.slane %v583, 4
      %v1251 = vsel %vm800, %v595, %v1250
      %v1253 = vunpack.c.l.s4 1983009808
      %v1254 = vunpack.c.0.s8 %v1253
      %v1255 = vperm.slane %v1249, %v1254
      %v1257 = vunpack.c.l.s4 1983009808
      %v1258 = vunpack.c.0.s8 %v1257
      %v1259 = vperm.slane %v1251, %v1258
      %v1260 = vrot.slane %v601, 4
      %v1261 = vsel %vm800, %v1260, %v589
      %v1262 = vrot.slane %v589, 4
      %v1263 = vsel %vm800, %v601, %v1262
      %v1265 = vunpack.c.l.s4 1983009808
      %v1266 = vunpack.c.0.s8 %v1265
      %v1267 = vperm.slane %v1261, %v1266
      %v1269 = vunpack.c.l.s4 1983009808
      %v1270 = vunpack.c.0.s8 %v1269
      %v1271 = vperm.slane %v1263, %v1270
      %v1272 = vrot.slane %v619, 4
      %v1273 = vsel %vm800, %v1272, %v607
      %v1274 = vrot.slane %v607, 4
      %v1275 = vsel %vm800, %v619, %v1274
      %v1277 = vunpack.c.l.s4 1983009808
      %v1278 = vunpack.c.0.s8 %v1277
      %v1279 = vperm.slane %v1273, %v1278
      %v1281 = vunpack.c.l.s4 1983009808
      %v1282 = vunpack.c.0.s8 %v1281
      %v1283 = vperm.slane %v1275, %v1282
      %v1284 = vrot.slane %v625, 4
      %v1285 = vsel %vm800, %v1284, %v613
      %v1286 = vrot.slane %v613, 4
      %v1287 = vsel %vm800, %v625, %v1286
      %v1289 = vunpack.c.l.s4 1983009808
      %v1290 = vunpack.c.0.s8 %v1289
      %v1291 = vperm.slane %v1285, %v1290
      %v1293 = vunpack.c.l.s4 1983009808
      %v1294 = vunpack.c.0.s8 %v1293
      %v1295 = vperm.slane %v1287, %v1294
      %v1296 = vrot.slane %v1267, 4
      %v1297 = vsel %vm800, %v1296, %v1255
      %v1298 = vrot.slane %v1255, 4
      %v1299 = vsel %vm800, %v1267, %v1298
      %v1301 = vunpack.c.l.s4 1934713408
      %v1302 = vunpack.c.0.s8 %v1301
      %v1303 = vperm.slane %v1297, %v1302
      %v1305 = vunpack.c.l.s4 1934713408
      %v1306 = vunpack.c.0.s8 %v1305
      %v1307 = vperm.slane %v1299, %v1306
      %v1308 = vrot.slane %v1271, 4
      %v1309 = vsel %vm800, %v1308, %v1259
      %v1310 = vrot.slane %v1259, 4
      %v1311 = vsel %vm800, %v1271, %v1310
      %v1313 = vunpack.c.l.s4 1934713408
      %v1314 = vunpack.c.0.s8 %v1313
      %v1315 = vperm.slane %v1309, %v1314
      %v1317 = vunpack.c.l.s4 1934713408
      %v1318 = vunpack.c.0.s8 %v1317
      %v1319 = vperm.slane %v1311, %v1318
      %v1320 = vrot.slane %v1291, 4
      %v1321 = vsel %vm800, %v1320, %v1279
      %v1322 = vrot.slane %v1279, 4
      %v1323 = vsel %vm800, %v1291, %v1322
      %v1325 = vunpack.c.l.s4 1934713408
      %v1326 = vunpack.c.0.s8 %v1325
      %v1327 = vperm.slane %v1321, %v1326
      %v1329 = vunpack.c.l.s4 1934713408
      %v1330 = vunpack.c.0.s8 %v1329
      %v1331 = vperm.slane %v1323, %v1330
      %v1332 = vrot.slane %v1295, 4
      %v1333 = vsel %vm800, %v1332, %v1283
      %v1334 = vrot.slane %v1283, 4
      %v1335 = vsel %vm800, %v1295, %v1334
      %v1337 = vunpack.c.l.s4 1934713408
      %v1338 = vunpack.c.0.s8 %v1337
      %v1339 = vperm.slane %v1333, %v1338
      %v1341 = vunpack.c.l.s4 1934713408
      %v1342 = vunpack.c.0.s8 %v1341
      %v1343 = vperm.slane %v1335, %v1342
      %v1344 = vrot.slane %v1327, 4
      %v1345 = vsel %vm800, %v1344, %v1303
      %v1346 = vrot.slane %v1303, 4
      %v1347 = vsel %vm800, %v1327, %v1346
      %v1348 = vrot.slane %v1331, 4
      %v1349 = vsel %vm800, %v1348, %v1307
      %v1350 = vrot.slane %v1307, 4
      %v1351 = vsel %vm800, %v1331, %v1350
      %v1352 = vrot.slane %v1339, 4
      %v1353 = vsel %vm800, %v1352, %v1315
      %v1354 = vrot.slane %v1315, 4
      %v1355 = vsel %vm800, %v1339, %v1354
      %v1356 = vrot.slane %v1343, 4
      %v1357 = vsel %vm800, %v1356, %v1319
      %v1358 = vrot.slane %v1319, 4
      %v1359 = vsel %vm800, %v1343, %v1358
      %v1360 = vrot.slane %v643, 4
      %v1361 = vsel %vm800, %v1360, %v631
      %v1362 = vrot.slane %v631, 4
      %v1363 = vsel %vm800, %v643, %v1362
      %v1365 = vunpack.c.l.s4 1983009808
      %v1366 = vunpack.c.0.s8 %v1365
      %v1367 = vperm.slane %v1361, %v1366
      %v1369 = vunpack.c.l.s4 1983009808
      %v1370 = vunpack.c.0.s8 %v1369
      %v1371 = vperm.slane %v1363, %v1370
      %v1372 = vrot.slane %v649, 4
      %v1373 = vsel %vm800, %v1372, %v637
      %v1374 = vrot.slane %v637, 4
      %v1375 = vsel %vm800, %v649, %v1374
      %v1377 = vunpack.c.l.s4 1983009808
      %v1378 = vunpack.c.0.s8 %v1377
      %v1379 = vperm.slane %v1373, %v1378
      %v1381 = vunpack.c.l.s4 1983009808
      %v1382 = vunpack.c.0.s8 %v1381
      %v1383 = vperm.slane %v1375, %v1382
      %v1384 = vrot.slane %v667, 4
      %v1385 = vsel %vm800, %v1384, %v655
      %v1386 = vrot.slane %v655, 4
      %v1387 = vsel %vm800, %v667, %v1386
      %v1389 = vunpack.c.l.s4 1983009808
      %v1390 = vunpack.c.0.s8 %v1389
      %v1391 = vperm.slane %v1385, %v1390
      %v1393 = vunpack.c.l.s4 1983009808
      %v1394 = vunpack.c.0.s8 %v1393
      %v1395 = vperm.slane %v1387, %v1394
      %v1396 = vrot.slane %v673, 4
      %v1397 = vsel %vm800, %v1396, %v661
      %v1398 = vrot.slane %v661, 4
      %v1399 = vsel %vm800, %v673, %v1398
      %v1401 = vunpack.c.l.s4 1983009808
      %v1402 = vunpack.c.0.s8 %v1401
      %v1403 = vperm.slane %v1397, %v1402
      %v1405 = vunpack.c.l.s4 1983009808
      %v1406 = vunpack.c.0.s8 %v1405
      %v1407 = vperm.slane %v1399, %v1406
      %v1408 = vrot.slane %v1379, 4
      %v1409 = vsel %vm800, %v1408, %v1367
      %v1410 = vrot.slane %v1367, 4
      %v1411 = vsel %vm800, %v1379, %v1410
      %v1413 = vunpack.c.l.s4 1934713408
      %v1414 = vunpack.c.0.s8 %v1413
      %v1415 = vperm.slane %v1409, %v1414
      %v1417 = vunpack.c.l.s4 1934713408
      %v1418 = vunpack.c.0.s8 %v1417
      %v1419 = vperm.slane %v1411, %v1418
      %v1420 = vrot.slane %v1383, 4
      %v1421 = vsel %vm800, %v1420, %v1371
      %v1422 = vrot.slane %v1371, 4
      %v1423 = vsel %vm800, %v1383, %v1422
      %v1425 = vunpack.c.l.s4 1934713408
      %v1426 = vunpack.c.0.s8 %v1425
      %v1427 = vperm.slane %v1421, %v1426
      %v1429 = vunpack.c.l.s4 1934713408
      %v1430 = vunpack.c.0.s8 %v1429
      %v1431 = vperm.slane %v1423, %v1430
      %v1432 = vrot.slane %v1403, 4
      %v1433 = vsel %vm800, %v1432, %v1391
      %v1434 = vrot.slane %v1391, 4
      %v1435 = vsel %vm800, %v1403, %v1434
      %v1437 = vunpack.c.l.s4 1934713408
      %v1438 = vunpack.c.0.s8 %v1437
      %v1439 = vperm.slane %v1433, %v1438
      %v1441 = vunpack.c.l.s4 1934713408
      %v1442 = vunpack.c.0.s8 %v1441
      %v1443 = vperm.slane %v1435, %v1442
      %v1444 = vrot.slane %v1407, 4
      %v1445 = vsel %vm800, %v1444, %v1395
      %v1446 = vrot.slane %v1395, 4
      %v1447 = vsel %vm800, %v1407, %v1446
      %v1449 = vunpack.c.l.s4 1934713408
      %v1450 = vunpack.c.0.s8 %v1449
      %v1451 = vperm.slane %v1445, %v1450
      %v1453 = vunpack.c.l.s4 1934713408
      %v1454 = vunpack.c.0.s8 %v1453
      %v1455 = vperm.slane %v1447, %v1454
      %v1456 = vrot.slane %v1439, 4
      %v1457 = vsel %vm800, %v1456, %v1415
      %v1458 = vrot.slane %v1415, 4
      %v1459 = vsel %vm800, %v1439, %v1458
      %v1460 = vrot.slane %v1443, 4
      %v1461 = vsel %vm800, %v1460, %v1419
      %v1462 = vrot.slane %v1419, 4
      %v1463 = vsel %vm800, %v1443, %v1462
      %v1464 = vrot.slane %v1451, 4
      %v1465 = vsel %vm800, %v1464, %v1427
      %v1466 = vrot.slane %v1427, 4
      %v1467 = vsel %vm800, %v1451, %v1466
      %v1468 = vrot.slane %v1455, 4
      %v1469 = vsel %vm800, %v1468, %v1431
      %v1470 = vrot.slane %v1431, 4
      %v1471 = vsel %vm800, %v1455, %v1470
      %v1472 = vrot.slane %v598, 4
      %v1473 = vsel %vm800, %v1472, %v586
      %v1474 = vrot.slane %v586, 4
      %v1475 = vsel %vm800, %v598, %v1474
      %v1477 = vunpack.c.l.s4 1983009808
      %v1478 = vunpack.c.0.s8 %v1477
      %v1479 = vperm.slane %v1473, %v1478
      %v1481 = vunpack.c.l.s4 1983009808
      %v1482 = vunpack.c.0.s8 %v1481
      %v1483 = vperm.slane %v1475, %v1482
      %v1484 = vrot.slane %v604, 4
      %v1485 = vsel %vm800, %v1484, %v592
      %v1486 = vrot.slane %v592, 4
      %v1487 = vsel %vm800, %v604, %v1486
      %v1489 = vunpack.c.l.s4 1983009808
      %v1490 = vunpack.c.0.s8 %v1489
      %v1491 = vperm.slane %v1485, %v1490
      %v1493 = vunpack.c.l.s4 1983009808
      %v1494 = vunpack.c.0.s8 %v1493
      %v1495 = vperm.slane %v1487, %v1494
      %v1496 = vrot.slane %v622, 4
      %v1497 = vsel %vm800, %v1496, %v610
      %v1498 = vrot.slane %v610, 4
      %v1499 = vsel %vm800, %v622, %v1498
      %v1501 = vunpack.c.l.s4 1983009808
      %v1502 = vunpack.c.0.s8 %v1501
      %v1503 = vperm.slane %v1497, %v1502
      %v1505 = vunpack.c.l.s4 1983009808
      %v1506 = vunpack.c.0.s8 %v1505
      %v1507 = vperm.slane %v1499, %v1506
      %v1508 = vrot.slane %v628, 4
      %v1509 = vsel %vm800, %v1508, %v616
      %v1510 = vrot.slane %v616, 4
      %v1511 = vsel %vm800, %v628, %v1510
      %v1513 = vunpack.c.l.s4 1983009808
      %v1514 = vunpack.c.0.s8 %v1513
      %v1515 = vperm.slane %v1509, %v1514
      %v1517 = vunpack.c.l.s4 1983009808
      %v1518 = vunpack.c.0.s8 %v1517
      %v1519 = vperm.slane %v1511, %v1518
      %v1520 = vrot.slane %v1491, 4
      %v1521 = vsel %vm800, %v1520, %v1479
      %v1522 = vrot.slane %v1479, 4
      %v1523 = vsel %vm800, %v1491, %v1522
      %v1525 = vunpack.c.l.s4 1934713408
      %v1526 = vunpack.c.0.s8 %v1525
      %v1527 = vperm.slane %v1521, %v1526
      %v1529 = vunpack.c.l.s4 1934713408
      %v1530 = vunpack.c.0.s8 %v1529
      %v1531 = vperm.slane %v1523, %v1530
      %v1532 = vrot.slane %v1495, 4
      %v1533 = vsel %vm800, %v1532, %v1483
      %v1534 = vrot.slane %v1483, 4
      %v1535 = vsel %vm800, %v1495, %v1534
      %v1537 = vunpack.c.l.s4 1934713408
      %v1538 = vunpack.c.0.s8 %v1537
      %v1539 = vperm.slane %v1533, %v1538
      %v1541 = vunpack.c.l.s4 1934713408
      %v1542 = vunpack.c.0.s8 %v1541
      %v1543 = vperm.slane %v1535, %v1542
      %v1544 = vrot.slane %v1515, 4
      %v1545 = vsel %vm800, %v1544, %v1503
      %v1546 = vrot.slane %v1503, 4
      %v1547 = vsel %vm800, %v1515, %v1546
      %v1549 = vunpack.c.l.s4 1934713408
      %v1550 = vunpack.c.0.s8 %v1549
      %v1551 = vperm.slane %v1545, %v1550
      %v1553 = vunpack.c.l.s4 1934713408
      %v1554 = vunpack.c.0.s8 %v1553
      %v1555 = vperm.slane %v1547, %v1554
      %v1556 = vrot.slane %v1519, 4
      %v1557 = vsel %vm800, %v1556, %v1507
      %v1558 = vrot.slane %v1507, 4
      %v1559 = vsel %vm800, %v1519, %v1558
      %v1561 = vunpack.c.l.s4 1934713408
      %v1562 = vunpack.c.0.s8 %v1561
      %v1563 = vperm.slane %v1557, %v1562
      %v1565 = vunpack.c.l.s4 1934713408
      %v1566 = vunpack.c.0.s8 %v1565
      %v1567 = vperm.slane %v1559, %v1566
      %v1568 = vrot.slane %v1551, 4
      %v1569 = vsel %vm800, %v1568, %v1527
      %v1570 = vrot.slane %v1527, 4
      %v1571 = vsel %vm800, %v1551, %v1570
      %v1572 = vrot.slane %v1555, 4
      %v1573 = vsel %vm800, %v1572, %v1531
      %v1574 = vrot.slane %v1531, 4
      %v1575 = vsel %vm800, %v1555, %v1574
      %v1576 = vrot.slane %v1563, 4
      %v1577 = vsel %vm800, %v1576, %v1539
      %v1578 = vrot.slane %v1539, 4
      %v1579 = vsel %vm800, %v1563, %v1578
      %v1580 = vrot.slane %v1567, 4
      %v1581 = vsel %vm800, %v1580, %v1543
      %v1582 = vrot.slane %v1543, 4
      %v1583 = vsel %vm800, %v1567, %v1582
      %v1584 = vrot.slane %v646, 4
      %v1585 = vsel %vm800, %v1584, %v634
      %v1586 = vrot.slane %v634, 4
      %v1587 = vsel %vm800, %v646, %v1586
      %v1589 = vunpack.c.l.s4 1983009808
      %v1590 = vunpack.c.0.s8 %v1589
      %v1591 = vperm.slane %v1585, %v1590
      %v1593 = vunpack.c.l.s4 1983009808
      %v1594 = vunpack.c.0.s8 %v1593
      %v1595 = vperm.slane %v1587, %v1594
      %v1596 = vrot.slane %v652, 4
      %v1597 = vsel %vm800, %v1596, %v640
      %v1598 = vrot.slane %v640, 4
      %v1599 = vsel %vm800, %v652, %v1598
      %v1601 = vunpack.c.l.s4 1983009808
      %v1602 = vunpack.c.0.s8 %v1601
      %v1603 = vperm.slane %v1597, %v1602
      %v1605 = vunpack.c.l.s4 1983009808
      %v1606 = vunpack.c.0.s8 %v1605
      %v1607 = vperm.slane %v1599, %v1606
      %v1608 = vrot.slane %v670, 4
      %v1609 = vsel %vm800, %v1608, %v658
      %v1610 = vrot.slane %v658, 4
      %v1611 = vsel %vm800, %v670, %v1610
      %v1613 = vunpack.c.l.s4 1983009808
      %v1614 = vunpack.c.0.s8 %v1613
      %v1615 = vperm.slane %v1609, %v1614
      %v1617 = vunpack.c.l.s4 1983009808
      %v1618 = vunpack.c.0.s8 %v1617
      %v1619 = vperm.slane %v1611, %v1618
      %v1620 = vrot.slane %v676, 4
      %v1621 = vsel %vm800, %v1620, %v664
      %v1622 = vrot.slane %v664, 4
      %v1623 = vsel %vm800, %v676, %v1622
      %v1625 = vunpack.c.l.s4 1983009808
      %v1626 = vunpack.c.0.s8 %v1625
      %v1627 = vperm.slane %v1621, %v1626
      %v1629 = vunpack.c.l.s4 1983009808
      %v1630 = vunpack.c.0.s8 %v1629
      %v1631 = vperm.slane %v1623, %v1630
      %v1632 = vrot.slane %v1603, 4
      %v1633 = vsel %vm800, %v1632, %v1591
      %v1634 = vrot.slane %v1591, 4
      %v1635 = vsel %vm800, %v1603, %v1634
      %v1637 = vunpack.c.l.s4 1934713408
      %v1638 = vunpack.c.0.s8 %v1637
      %v1639 = vperm.slane %v1633, %v1638
      %v1641 = vunpack.c.l.s4 1934713408
      %v1642 = vunpack.c.0.s8 %v1641
      %v1643 = vperm.slane %v1635, %v1642
      %v1644 = vrot.slane %v1607, 4
      %v1645 = vsel %vm800, %v1644, %v1595
      %v1646 = vrot.slane %v1595, 4
      %v1647 = vsel %vm800, %v1607, %v1646
      %v1649 = vunpack.c.l.s4 1934713408
      %v1650 = vunpack.c.0.s8 %v1649
      %v1651 = vperm.slane %v1645, %v1650
      %v1653 = vunpack.c.l.s4 1934713408
      %v1654 = vunpack.c.0.s8 %v1653
      %v1655 = vperm.slane %v1647, %v1654
      %v1656 = vrot.slane %v1627, 4
      %v1657 = vsel %vm800, %v1656, %v1615
      %v1658 = vrot.slane %v1615, 4
      %v1659 = vsel %vm800, %v1627, %v1658
      %v1661 = vunpack.c.l.s4 1934713408
      %v1662 = vunpack.c.0.s8 %v1661
      %v1663 = vperm.slane %v1657, %v1662
      %v1665 = vunpack.c.l.s4 1934713408
      %v1666 = vunpack.c.0.s8 %v1665
      %v1667 = vperm.slane %v1659, %v1666
      %v1668 = vrot.slane %v1631, 4
      %v1669 = vsel %vm800, %v1668, %v1619
      %v1670 = vrot.slane %v1619, 4
      %v1671 = vsel %vm800, %v1631, %v1670
      %v1673 = vunpack.c.l.s4 1934713408
      %v1674 = vunpack.c.0.s8 %v1673
      %v1675 = vperm.slane %v1669, %v1674
      %v1677 = vunpack.c.l.s4 1934713408
      %v1678 = vunpack.c.0.s8 %v1677
      %v1679 = vperm.slane %v1671, %v1678
      %v1680 = vrot.slane %v1663, 4
      %v1681 = vsel %vm800, %v1680, %v1639
      %v1682 = vrot.slane %v1639, 4
      %v1683 = vsel %vm800, %v1663, %v1682
      %v1684 = vrot.slane %v1667, 4
      %v1685 = vsel %vm800, %v1684, %v1643
      %v1686 = vrot.slane %v1643, 4
      %v1687 = vsel %vm800, %v1667, %v1686
      %v1688 = vrot.slane %v1675, 4
      %v1689 = vsel %vm800, %v1688, %v1651
      %v1690 = vrot.slane %v1651, 4
      %v1691 = vsel %vm800, %v1675, %v1690
      %v1692 = vrot.slane %v1679, 4
      %v1693 = vsel %vm800, %v1692, %v1655
      %v1694 = vrot.slane %v1655, 4
      %v1695 = vsel %vm800, %v1679, %v1694
      %v1696 = vrot.slane %v716, 4
      %v1697 = vsel %vm800, %v1696, %v704
      %v1698 = vrot.slane %v704, 4
      %v1699 = vsel %vm800, %v716, %v1698
      %v1701 = vunpack.c.l.s4 1983009808
      %v1702 = vunpack.c.0.s8 %v1701
      %v1703 = vperm.slane %v1697, %v1702
      %v1705 = vunpack.c.l.s4 1983009808
      %v1706 = vunpack.c.0.s8 %v1705
      %v1707 = vperm.slane %v1699, %v1706
      %v1708 = vrot.slane %v722, 4
      %v1709 = vsel %vm800, %v1708, %v710
      %v1710 = vrot.slane %v710, 4
      %v1711 = vsel %vm800, %v722, %v1710
      %v1713 = vunpack.c.l.s4 1983009808
      %v1714 = vunpack.c.0.s8 %v1713
      %v1715 = vperm.slane %v1709, %v1714
      %v1717 = vunpack.c.l.s4 1983009808
      %v1718 = vunpack.c.0.s8 %v1717
      %v1719 = vperm.slane %v1711, %v1718
      %v1720 = vrot.slane %v740, 4
      %v1721 = vsel %vm800, %v1720, %v728
      %v1722 = vrot.slane %v728, 4
      %v1723 = vsel %vm800, %v740, %v1722
      %v1725 = vunpack.c.l.s4 1983009808
      %v1726 = vunpack.c.0.s8 %v1725
      %v1727 = vperm.slane %v1721, %v1726
      %v1729 = vunpack.c.l.s4 1983009808
      %v1730 = vunpack.c.0.s8 %v1729
      %v1731 = vperm.slane %v1723, %v1730
      %v1732 = vrot.slane %v746, 4
      %v1733 = vsel %vm800, %v1732, %v734
      %v1734 = vrot.slane %v734, 4
      %v1735 = vsel %vm800, %v746, %v1734
      %v1737 = vunpack.c.l.s4 1983009808
      %v1738 = vunpack.c.0.s8 %v1737
      %v1739 = vperm.slane %v1733, %v1738
      %v1741 = vunpack.c.l.s4 1983009808
      %v1742 = vunpack.c.0.s8 %v1741
      %v1743 = vperm.slane %v1735, %v1742
      %v1744 = vrot.slane %v1715, 4
      %v1745 = vsel %vm800, %v1744, %v1703
      %v1746 = vrot.slane %v1703, 4
      %v1747 = vsel %vm800, %v1715, %v1746
      %v1749 = vunpack.c.l.s4 1934713408
      %v1750 = vunpack.c.0.s8 %v1749
      %v1751 = vperm.slane %v1745, %v1750
      %v1753 = vunpack.c.l.s4 1934713408
      %v1754 = vunpack.c.0.s8 %v1753
      %v1755 = vperm.slane %v1747, %v1754
      %v1756 = vrot.slane %v1719, 4
      %v1757 = vsel %vm800, %v1756, %v1707
      %v1758 = vrot.slane %v1707, 4
      %v1759 = vsel %vm800, %v1719, %v1758
      %v1761 = vunpack.c.l.s4 1934713408
      %v1762 = vunpack.c.0.s8 %v1761
      %v1763 = vperm.slane %v1757, %v1762
      %v1765 = vunpack.c.l.s4 1934713408
      %v1766 = vunpack.c.0.s8 %v1765
      %v1767 = vperm.slane %v1759, %v1766
      %v1768 = vrot.slane %v1739, 4
      %v1769 = vsel %vm800, %v1768, %v1727
      %v1770 = vrot.slane %v1727, 4
      %v1771 = vsel %vm800, %v1739, %v1770
      %v1773 = vunpack.c.l.s4 1934713408
      %v1774 = vunpack.c.0.s8 %v1773
      %v1775 = vperm.slane %v1769, %v1774
      %v1777 = vunpack.c.l.s4 1934713408
      %v1778 = vunpack.c.0.s8 %v1777
      %v1779 = vperm.slane %v1771, %v1778
      %v1780 = vrot.slane %v1743, 4
      %v1781 = vsel %vm800, %v1780, %v1731
      %v1782 = vrot.slane %v1731, 4
      %v1783 = vsel %vm800, %v1743, %v1782
      %v1785 = vunpack.c.l.s4 1934713408
      %v1786 = vunpack.c.0.s8 %v1785
      %v1787 = vperm.slane %v1781, %v1786
      %v1789 = vunpack.c.l.s4 1934713408
      %v1790 = vunpack.c.0.s8 %v1789
      %v1791 = vperm.slane %v1783, %v1790
      %v1792 = vrot.slane %v1775, 4
      %v1793 = vsel %vm800, %v1792, %v1751
      %v1794 = vrot.slane %v1751, 4
      %v1795 = vsel %vm800, %v1775, %v1794
      %v1796 = vrot.slane %v1779, 4
      %v1797 = vsel %vm800, %v1796, %v1755
      %v1798 = vrot.slane %v1755, 4
      %v1799 = vsel %vm800, %v1779, %v1798
      %v1800 = vrot.slane %v1787, 4
      %v1801 = vsel %vm800, %v1800, %v1763
      %v1802 = vrot.slane %v1763, 4
      %v1803 = vsel %vm800, %v1787, %v1802
      %v1804 = vrot.slane %v1791, 4
      %v1805 = vsel %vm800, %v1804, %v1767
      %v1806 = vrot.slane %v1767, 4
      %v1807 = vsel %vm800, %v1791, %v1806
      %v1808 = vrot.slane %v764, 4
      %v1809 = vsel %vm800, %v1808, %v752
      %v1810 = vrot.slane %v752, 4
      %v1811 = vsel %vm800, %v764, %v1810
      %v1813 = vunpack.c.l.s4 1983009808
      %v1814 = vunpack.c.0.s8 %v1813
      %v1815 = vperm.slane %v1809, %v1814
      %v1817 = vunpack.c.l.s4 1983009808
      %v1818 = vunpack.c.0.s8 %v1817
      %v1819 = vperm.slane %v1811, %v1818
      %v1820 = vrot.slane %v770, 4
      %v1821 = vsel %vm800, %v1820, %v758
      %v1822 = vrot.slane %v758, 4
      %v1823 = vsel %vm800, %v770, %v1822
      %v1825 = vunpack.c.l.s4 1983009808
      %v1826 = vunpack.c.0.s8 %v1825
      %v1827 = vperm.slane %v1821, %v1826
      %v1829 = vunpack.c.l.s4 1983009808
      %v1830 = vunpack.c.0.s8 %v1829
      %v1831 = vperm.slane %v1823, %v1830
      %v1832 = vrot.slane %v788, 4
      %v1833 = vsel %vm800, %v1832, %v776
      %v1834 = vrot.slane %v776, 4
      %v1835 = vsel %vm800, %v788, %v1834
      %v1837 = vunpack.c.l.s4 1983009808
      %v1838 = vunpack.c.0.s8 %v1837
      %v1839 = vperm.slane %v1833, %v1838
      %v1841 = vunpack.c.l.s4 1983009808
      %v1842 = vunpack.c.0.s8 %v1841
      %v1843 = vperm.slane %v1835, %v1842
      %v1844 = vrot.slane %v794, 4
      %v1845 = vsel %vm800, %v1844, %v782
      %v1846 = vrot.slane %v782, 4
      %v1847 = vsel %vm800, %v794, %v1846
      %v1849 = vunpack.c.l.s4 1983009808
      %v1850 = vunpack.c.0.s8 %v1849
      %v1851 = vperm.slane %v1845, %v1850
      %v1853 = vunpack.c.l.s4 1983009808
      %v1854 = vunpack.c.0.s8 %v1853
      %v1855 = vperm.slane %v1847, %v1854
      %v1856 = vrot.slane %v1827, 4
      %v1857 = vsel %vm800, %v1856, %v1815
      %v1858 = vrot.slane %v1815, 4
      %v1859 = vsel %vm800, %v1827, %v1858
      %v1861 = vunpack.c.l.s4 1934713408
      %v1862 = vunpack.c.0.s8 %v1861
      %v1863 = vperm.slane %v1857, %v1862
      %v1865 = vunpack.c.l.s4 1934713408
      %v1866 = vunpack.c.0.s8 %v1865
      %v1867 = vperm.slane %v1859, %v1866
      %v1868 = vrot.slane %v1831, 4
      %v1869 = vsel %vm800, %v1868, %v1819
      %v1870 = vrot.slane %v1819, 4
      %v1871 = vsel %vm800, %v1831, %v1870
      %v1873 = vunpack.c.l.s4 1934713408
      %v1874 = vunpack.c.0.s8 %v1873
      %v1875 = vperm.slane %v1869, %v1874
      %v1877 = vunpack.c.l.s4 1934713408
      %v1878 = vunpack.c.0.s8 %v1877
      %v1879 = vperm.slane %v1871, %v1878
      %v1880 = vrot.slane %v1851, 4
      %v1881 = vsel %vm800, %v1880, %v1839
      %v1882 = vrot.slane %v1839, 4
      %v1883 = vsel %vm800, %v1851, %v1882
      %v1885 = vunpack.c.l.s4 1934713408
      %v1886 = vunpack.c.0.s8 %v1885
      %v1887 = vperm.slane %v1881, %v1886
      %v1889 = vunpack.c.l.s4 1934713408
      %v1890 = vunpack.c.0.s8 %v1889
      %v1891 = vperm.slane %v1883, %v1890
      %v1892 = vrot.slane %v1855, 4
      %v1893 = vsel %vm800, %v1892, %v1843
      %v1894 = vrot.slane %v1843, 4
      %v1895 = vsel %vm800, %v1855, %v1894
      %v1897 = vunpack.c.l.s4 1934713408
      %v1898 = vunpack.c.0.s8 %v1897
      %v1899 = vperm.slane %v1893, %v1898
      %v1901 = vunpack.c.l.s4 1934713408
      %v1902 = vunpack.c.0.s8 %v1901
      %v1903 = vperm.slane %v1895, %v1902
      %v1904 = vrot.slane %v1887, 4
      %v1905 = vsel %vm800, %v1904, %v1863
      %v1906 = vrot.slane %v1863, 4
      %v1907 = vsel %vm800, %v1887, %v1906
      %v1908 = vrot.slane %v1891, 4
      %v1909 = vsel %vm800, %v1908, %v1867
      %v1910 = vrot.slane %v1867, 4
      %v1911 = vsel %vm800, %v1891, %v1910
      %v1912 = vrot.slane %v1899, 4
      %v1913 = vsel %vm800, %v1912, %v1875
      %v1914 = vrot.slane %v1875, 4
      %v1915 = vsel %vm800, %v1899, %v1914
      %v1916 = vrot.slane %v1903, 4
      %v1917 = vsel %vm800, %v1916, %v1879
      %v1918 = vrot.slane %v1879, 4
      %v1919 = vsel %vm800, %v1903, %v1918
      %v1920 = vrot.slane %v719, 4
      %v1921 = vsel %vm800, %v1920, %v707
      %v1922 = vrot.slane %v707, 4
      %v1923 = vsel %vm800, %v719, %v1922
      %v1925 = vunpack.c.l.s4 1983009808
      %v1926 = vunpack.c.0.s8 %v1925
      %v1927 = vperm.slane %v1921, %v1926
      %v1929 = vunpack.c.l.s4 1983009808
      %v1930 = vunpack.c.0.s8 %v1929
      %v1931 = vperm.slane %v1923, %v1930
      %v1932 = vrot.slane %v725, 4
      %v1933 = vsel %vm800, %v1932, %v713
      %v1934 = vrot.slane %v713, 4
      %v1935 = vsel %vm800, %v725, %v1934
      %v1937 = vunpack.c.l.s4 1983009808
      %v1938 = vunpack.c.0.s8 %v1937
      %v1939 = vperm.slane %v1933, %v1938
      %v1941 = vunpack.c.l.s4 1983009808
      %v1942 = vunpack.c.0.s8 %v1941
      %v1943 = vperm.slane %v1935, %v1942
      %v1944 = vrot.slane %v743, 4
      %v1945 = vsel %vm800, %v1944, %v731
      %v1946 = vrot.slane %v731, 4
      %v1947 = vsel %vm800, %v743, %v1946
      %v1949 = vunpack.c.l.s4 1983009808
      %v1950 = vunpack.c.0.s8 %v1949
      %v1951 = vperm.slane %v1945, %v1950
      %v1953 = vunpack.c.l.s4 1983009808
      %v1954 = vunpack.c.0.s8 %v1953
      %v1955 = vperm.slane %v1947, %v1954
      %v1956 = vrot.slane %v749, 4
      %v1957 = vsel %vm800, %v1956, %v737
      %v1958 = vrot.slane %v737, 4
      %v1959 = vsel %vm800, %v749, %v1958
      %v1961 = vunpack.c.l.s4 1983009808
      %v1962 = vunpack.c.0.s8 %v1961
      %v1963 = vperm.slane %v1957, %v1962
      %v1965 = vunpack.c.l.s4 1983009808
      %v1966 = vunpack.c.0.s8 %v1965
      %v1967 = vperm.slane %v1959, %v1966
      %v1968 = vrot.slane %v1939, 4
      %v1969 = vsel %vm800, %v1968, %v1927
      %v1970 = vrot.slane %v1927, 4
      %v1971 = vsel %vm800, %v1939, %v1970
      %v1973 = vunpack.c.l.s4 1934713408
      %v1974 = vunpack.c.0.s8 %v1973
      %v1975 = vperm.slane %v1969, %v1974
      %v1977 = vunpack.c.l.s4 1934713408
      %v1978 = vunpack.c.0.s8 %v1977
      %v1979 = vperm.slane %v1971, %v1978
      %v1980 = vrot.slane %v1943, 4
      %v1981 = vsel %vm800, %v1980, %v1931
      %v1982 = vrot.slane %v1931, 4
      %v1983 = vsel %vm800, %v1943, %v1982
      %v1985 = vunpack.c.l.s4 1934713408
      %v1986 = vunpack.c.0.s8 %v1985
      %v1987 = vperm.slane %v1981, %v1986
      %v1989 = vunpack.c.l.s4 1934713408
      %v1990 = vunpack.c.0.s8 %v1989
      %v1991 = vperm.slane %v1983, %v1990
      %v1992 = vrot.slane %v1963, 4
      %v1993 = vsel %vm800, %v1992, %v1951
      %v1994 = vrot.slane %v1951, 4
      %v1995 = vsel %vm800, %v1963, %v1994
      %v1997 = vunpack.c.l.s4 1934713408
      %v1998 = vunpack.c.0.s8 %v1997
      %v1999 = vperm.slane %v1993, %v1998
      %v2001 = vunpack.c.l.s4 1934713408
      %v2002 = vunpack.c.0.s8 %v2001
      %v2003 = vperm.slane %v1995, %v2002
      %v2004 = vrot.slane %v1967, 4
      %v2005 = vsel %vm800, %v2004, %v1955
      %v2006 = vrot.slane %v1955, 4
      %v2007 = vsel %vm800, %v1967, %v2006
      %v2009 = vunpack.c.l.s4 1934713408
      %v2010 = vunpack.c.0.s8 %v2009
      %v2011 = vperm.slane %v2005, %v2010
      %v2013 = vunpack.c.l.s4 1934713408
      %v2014 = vunpack.c.0.s8 %v2013
      %v2015 = vperm.slane %v2007, %v2014
      %v2016 = vrot.slane %v1999, 4
      %v2017 = vsel %vm800, %v2016, %v1975
      %v2018 = vrot.slane %v1975, 4
      %v2019 = vsel %vm800, %v1999, %v2018
      %v2020 = vrot.slane %v2003, 4
      %v2021 = vsel %vm800, %v2020, %v1979
      %v2022 = vrot.slane %v1979, 4
      %v2023 = vsel %vm800, %v2003, %v2022
      %v2024 = vrot.slane %v2011, 4
      %v2025 = vsel %vm800, %v2024, %v1987
      %v2026 = vrot.slane %v1987, 4
      %v2027 = vsel %vm800, %v2011, %v2026
      %v2028 = vrot.slane %v2015, 4
      %v2029 = vsel %vm800, %v2028, %v1991
      %v2030 = vrot.slane %v1991, 4
      %v2031 = vsel %vm800, %v2015, %v2030
      %v2032 = vrot.slane %v767, 4
      %v2033 = vsel %vm800, %v2032, %v755
      %v2034 = vrot.slane %v755, 4
      %v2035 = vsel %vm800, %v767, %v2034
      %v2037 = vunpack.c.l.s4 1983009808
      %v2038 = vunpack.c.0.s8 %v2037
      %v2039 = vperm.slane %v2033, %v2038
      %v2041 = vunpack.c.l.s4 1983009808
      %v2042 = vunpack.c.0.s8 %v2041
      %v2043 = vperm.slane %v2035, %v2042
      %v2044 = vrot.slane %v773, 4
      %v2045 = vsel %vm800, %v2044, %v761
      %v2046 = vrot.slane %v761, 4
      %v2047 = vsel %vm800, %v773, %v2046
      %v2049 = vunpack.c.l.s4 1983009808
      %v2050 = vunpack.c.0.s8 %v2049
      %v2051 = vperm.slane %v2045, %v2050
      %v2053 = vunpack.c.l.s4 1983009808
      %v2054 = vunpack.c.0.s8 %v2053
      %v2055 = vperm.slane %v2047, %v2054
      %v2056 = vrot.slane %v791, 4
      %v2057 = vsel %vm800, %v2056, %v779
      %v2058 = vrot.slane %v779, 4
      %v2059 = vsel %vm800, %v791, %v2058
      %v2061 = vunpack.c.l.s4 1983009808
      %v2062 = vunpack.c.0.s8 %v2061
      %v2063 = vperm.slane %v2057, %v2062
      %v2065 = vunpack.c.l.s4 1983009808
      %v2066 = vunpack.c.0.s8 %v2065
      %v2067 = vperm.slane %v2059, %v2066
      %v2068 = vrot.slane %v797, 4
      %v2069 = vsel %vm800, %v2068, %v785
      %v2070 = vrot.slane %v785, 4
      %v2071 = vsel %vm800, %v797, %v2070
      %v2073 = vunpack.c.l.s4 1983009808
      %v2074 = vunpack.c.0.s8 %v2073
      %v2075 = vperm.slane %v2069, %v2074
      %v2077 = vunpack.c.l.s4 1983009808
      %v2078 = vunpack.c.0.s8 %v2077
      %v2079 = vperm.slane %v2071, %v2078
      %v2080 = vrot.slane %v2051, 4
      %v2081 = vsel %vm800, %v2080, %v2039
      %v2082 = vrot.slane %v2039, 4
      %v2083 = vsel %vm800, %v2051, %v2082
      %v2085 = vunpack.c.l.s4 1934713408
      %v2086 = vunpack.c.0.s8 %v2085
      %v2087 = vperm.slane %v2081, %v2086
      %v2089 = vunpack.c.l.s4 1934713408
      %v2090 = vunpack.c.0.s8 %v2089
      %v2091 = vperm.slane %v2083, %v2090
      %v2092 = vrot.slane %v2055, 4
      %v2093 = vsel %vm800, %v2092, %v2043
      %v2094 = vrot.slane %v2043, 4
      %v2095 = vsel %vm800, %v2055, %v2094
      %v2097 = vunpack.c.l.s4 1934713408
      %v2098 = vunpack.c.0.s8 %v2097
      %v2099 = vperm.slane %v2093, %v2098
      %v2101 = vunpack.c.l.s4 1934713408
      %v2102 = vunpack.c.0.s8 %v2101
      %v2103 = vperm.slane %v2095, %v2102
      %v2104 = vrot.slane %v2075, 4
      %v2105 = vsel %vm800, %v2104, %v2063
      %v2106 = vrot.slane %v2063, 4
      %v2107 = vsel %vm800, %v2075, %v2106
      %v2109 = vunpack.c.l.s4 1934713408
      %v2110 = vunpack.c.0.s8 %v2109
      %v2111 = vperm.slane %v2105, %v2110
      %v2113 = vunpack.c.l.s4 1934713408
      %v2114 = vunpack.c.0.s8 %v2113
      %v2115 = vperm.slane %v2107, %v2114
      %v2116 = vrot.slane %v2079, 4
      %v2117 = vsel %vm800, %v2116, %v2067
      %v2118 = vrot.slane %v2067, 4
      %v2119 = vsel %vm800, %v2079, %v2118
      %v2121 = vunpack.c.l.s4 1934713408
      %v2122 = vunpack.c.0.s8 %v2121
      %v2123 = vperm.slane %v2117, %v2122
      %v2125 = vunpack.c.l.s4 1934713408
      %v2126 = vunpack.c.0.s8 %v2125
      %v2127 = vperm.slane %v2119, %v2126
      %v2128 = vrot.slane %v2111, 4
      %v2129 = vsel %vm800, %v2128, %v2087
      %v2130 = vrot.slane %v2087, 4
      %v2131 = vsel %vm800, %v2111, %v2130
      %v2132 = vrot.slane %v2115, 4
      %v2133 = vsel %vm800, %v2132, %v2091
      %v2134 = vrot.slane %v2091, 4
      %v2135 = vsel %vm800, %v2115, %v2134
      %v2136 = vrot.slane %v2123, 4
      %v2137 = vsel %vm800, %v2136, %v2099
      %v2138 = vrot.slane %v2099, 4
      %v2139 = vsel %vm800, %v2123, %v2138
      %v2140 = vrot.slane %v2127, 4
      %v2141 = vsel %vm800, %v2140, %v2103
      %v2142 = vrot.slane %v2103, 4
      %v2143 = vsel %vm800, %v2127, %v2142
      %vm2144 = vcmask 31744
      %v2146 = vsel %vm2144, %v462, 0
      %v2149 = vsel %vm2144, %v465, 0
      %v2152 = vsel %vm2144, %v583, 0
      %v2155 = vsel %vm2144, %v586, 0
      %2157 = vmatpush.xpose.msra.mxu0 0.0
      %2158 = vmatpush.xpose.msra.mxu0 0.0
      %2159 = vmatpush.xpose.msra.mxu0 0.0
      %2160 = vmatpush.xpose.msra.mxu0 0.0
      %2161 = vmatpush.xpose.msra.mxu0 0.0
      %2162 = vmatpush.xpose.msra.mxu0 0.0
      %2163 = vmatpush.xpose.msra.mxu0 0.0
      %2164 = vmatpush.xpose.msra.mxu0 0.0
      %2165 = vmatpush.xpose.msra.mxu0 0.0
      %2166 = vmatpush.xpose.msra.mxu0 0.0
      %2167 = vmatpush.xpose.msra.mxu0 0.0
      %2168 = vmatpush.xpose.msra.mxu0 0.0
      %2169 = vmatpush.xpose.msra.mxu0 0.0
      %2170 = vmatpush.xpose.msra.mxu0 0.0
      %2171 = vmatpush.xpose.msra.mxu0 %v2155
      %2172 = vmatpush.xpose.msra.mxu0 %v2152
      %2173 = vmatmul.f32.gmra.mxu0 %v2146
      %v2174 = vpop.f32.mrf.mxu0
      %v2175 = vadd.f32 0.0, %v2174
      %2176 = vmatmul.f32.gmra.mxu0 %v2149
      %v2177 = vpop.f32.mrf.mxu0
      %v2178 = vadd.f32 0.0, %v2177
      %2179 = vdwg.mxu0
      %v2181 = vsel %vm2144, %v468, 0
      %v2184 = vsel %vm2144, %v471, 0
      %v2187 = vsel %vm2144, %v589, 0
      %v2190 = vsel %vm2144, %v592, 0
      %2192 = vmatpush.xpose.msra.mxu0 0.0
      %2193 = vmatpush.xpose.msra.mxu0 0.0
      %2194 = vmatpush.xpose.msra.mxu0 0.0
      %2195 = vmatpush.xpose.msra.mxu0 0.0
      %2196 = vmatpush.xpose.msra.mxu0 0.0
      %2197 = vmatpush.xpose.msra.mxu0 0.0
      %2198 = vmatpush.xpose.msra.mxu0 0.0
      %2199 = vmatpush.xpose.msra.mxu0 0.0
      %2200 = vmatpush.xpose.msra.mxu0 0.0
      %2201 = vmatpush.xpose.msra.mxu0 0.0
      %2202 = vmatpush.xpose.msra.mxu0 0.0
      %2203 = vmatpush.xpose.msra.mxu0 0.0
      %2204 = vmatpush.xpose.msra.mxu0 0.0
      %2205 = vmatpush.xpose.msra.mxu0 0.0
      %2206 = vmatpush.xpose.msra.mxu0 %v2190
      %2207 = vmatpush.xpose.msra.mxu0 %v2187
      %2208 = vmatmul.f32.gmra.mxu0 %v2181
      %v2209 = vpop.f32.mrf.mxu0
      %v2210 = vadd.f32 0.0, %v2209
      %2211 = vmatmul.f32.gmra.mxu0 %v2184
      %v2212 = vpop.f32.mrf.mxu0
      %v2213 = vadd.f32 0.0, %v2212
      %2214 = vdwg.mxu0
      %v2216 = vsel %vm2144, %v474, 0
      %v2219 = vsel %vm2144, %v477, 0
      %v2222 = vsel %vm2144, %v595, 0
      %v2225 = vsel %vm2144, %v598, 0
      %2227 = vmatpush.xpose.msra.mxu0 0.0
      %2228 = vmatpush.xpose.msra.mxu0 0.0
      %2229 = vmatpush.xpose.msra.mxu0 0.0
      %2230 = vmatpush.xpose.msra.mxu0 0.0
      %2231 = vmatpush.xpose.msra.mxu0 0.0
      %2232 = vmatpush.xpose.msra.mxu0 0.0
      %2233 = vmatpush.xpose.msra.mxu0 0.0
      %2234 = vmatpush.xpose.msra.mxu0 0.0
      %2235 = vmatpush.xpose.msra.mxu0 0.0
      %2236 = vmatpush.xpose.msra.mxu0 0.0
      %2237 = vmatpush.xpose.msra.mxu0 0.0
      %2238 = vmatpush.xpose.msra.mxu0 0.0
      %2239 = vmatpush.xpose.msra.mxu0 0.0
      %2240 = vmatpush.xpose.msra.mxu0 0.0
      %2241 = vmatpush.xpose.msra.mxu0 %v2225
      %2242 = vmatpush.xpose.msra.mxu0 %v2222
      %2243 = vmatmul.f32.gmra.mxu0 %v2216
      %v2244 = vpop.f32.mrf.mxu0
      %v2245 = vadd.f32 0.0, %v2244
      %2246 = vmatmul.f32.gmra.mxu0 %v2219
      %v2247 = vpop.f32.mrf.mxu0
      %v2248 = vadd.f32 0.0, %v2247
      %2249 = vdwg.mxu0
      %v2251 = vsel %vm2144, %v480, 0
      %v2254 = vsel %vm2144, %v483, 0
      %v2257 = vsel %vm2144, %v601, 0
      %v2260 = vsel %vm2144, %v604, 0
      %2262 = vmatpush.xpose.msra.mxu0 0.0
      %2263 = vmatpush.xpose.msra.mxu0 0.0
      %2264 = vmatpush.xpose.msra.mxu0 0.0
      %2265 = vmatpush.xpose.msra.mxu0 0.0
      %2266 = vmatpush.xpose.msra.mxu0 0.0
      %2267 = vmatpush.xpose.msra.mxu0 0.0
      %2268 = vmatpush.xpose.msra.mxu0 0.0
      %2269 = vmatpush.xpose.msra.mxu0 0.0
      %2270 = vmatpush.xpose.msra.mxu0 0.0
      %2271 = vmatpush.xpose.msra.mxu0 0.0
      %2272 = vmatpush.xpose.msra.mxu0 0.0
      %2273 = vmatpush.xpose.msra.mxu0 0.0
      %2274 = vmatpush.xpose.msra.mxu0 0.0
      %2275 = vmatpush.xpose.msra.mxu0 0.0
      %2276 = vmatpush.xpose.msra.mxu0 %v2260
      %2277 = vmatpush.xpose.msra.mxu0 %v2257
      %2278 = vmatmul.f32.gmra.mxu0 %v2251
      %v2279 = vpop.f32.mrf.mxu0
      %v2280 = vadd.f32 0.0, %v2279
      %2281 = vmatmul.f32.gmra.mxu0 %v2254
      %v2282 = vpop.f32.mrf.mxu0
      %v2283 = vadd.f32 0.0, %v2282
      %2284 = vdwg.mxu0
      %v2286 = vsel %vm2144, %v486, 0
      %v2289 = vsel %vm2144, %v489, 0
      %v2292 = vsel %vm2144, %v607, 0
      %v2295 = vsel %vm2144, %v610, 0
      %2297 = vmatpush.xpose.msra.mxu0 0.0
      %2298 = vmatpush.xpose.msra.mxu0 0.0
      %2299 = vmatpush.xpose.msra.mxu0 0.0
      %2300 = vmatpush.xpose.msra.mxu0 0.0
      %2301 = vmatpush.xpose.msra.mxu0 0.0
      %2302 = vmatpush.xpose.msra.mxu0 0.0
      %2303 = vmatpush.xpose.msra.mxu0 0.0
      %2304 = vmatpush.xpose.msra.mxu0 0.0
      %2305 = vmatpush.xpose.msra.mxu0 0.0
      %2306 = vmatpush.xpose.msra.mxu0 0.0
      %2307 = vmatpush.xpose.msra.mxu0 0.0
      %2308 = vmatpush.xpose.msra.mxu0 0.0
      %2309 = vmatpush.xpose.msra.mxu0 0.0
      %2310 = vmatpush.xpose.msra.mxu0 0.0
      %2311 = vmatpush.xpose.msra.mxu0 %v2295
      %2312 = vmatpush.xpose.msra.mxu0 %v2292
      %2313 = vmatmul.f32.gmra.mxu0 %v2286
      %v2314 = vpop.f32.mrf.mxu0
      %v2315 = vadd.f32 0.0, %v2314
      %2316 = vmatmul.f32.gmra.mxu0 %v2289
      %v2317 = vpop.f32.mrf.mxu0
      %v2318 = vadd.f32 0.0, %v2317
      %2319 = vdwg.mxu0
      %v2321 = vsel %vm2144, %v492, 0
      %v2324 = vsel %vm2144, %v495, 0
      %v2327 = vsel %vm2144, %v613, 0
      %v2330 = vsel %vm2144, %v616, 0
      %2332 = vmatpush.xpose.msra.mxu0 0.0
      %2333 = vmatpush.xpose.msra.mxu0 0.0
      %2334 = vmatpush.xpose.msra.mxu0 0.0
      %2335 = vmatpush.xpose.msra.mxu0 0.0
      %2336 = vmatpush.xpose.msra.mxu0 0.0
      %2337 = vmatpush.xpose.msra.mxu0 0.0
      %2338 = vmatpush.xpose.msra.mxu0 0.0
      %2339 = vmatpush.xpose.msra.mxu0 0.0
      %2340 = vmatpush.xpose.msra.mxu0 0.0
      %2341 = vmatpush.xpose.msra.mxu0 0.0
      %2342 = vmatpush.xpose.msra.mxu0 0.0
      %2343 = vmatpush.xpose.msra.mxu0 0.0
      %2344 = vmatpush.xpose.msra.mxu0 0.0
      %2345 = vmatpush.xpose.msra.mxu0 0.0
      %2346 = vmatpush.xpose.msra.mxu0 %v2330
      %2347 = vmatpush.xpose.msra.mxu0 %v2327
      %2348 = vmatmul.f32.gmra.mxu0 %v2321
      %v2349 = vpop.f32.mrf.mxu0
      %v2350 = vadd.f32 0.0, %v2349
      %2351 = vmatmul.f32.gmra.mxu0 %v2324
      %v2352 = vpop.f32.mrf.mxu0
      %v2353 = vadd.f32 0.0, %v2352
      %2354 = vdwg.mxu0
      %v2356 = vsel %vm2144, %v498, 0
      %v2359 = vsel %vm2144, %v501, 0
      %v2362 = vsel %vm2144, %v619, 0
      %v2365 = vsel %vm2144, %v622, 0
      %2367 = vmatpush.xpose.msra.mxu0 0.0
      %2368 = vmatpush.xpose.msra.mxu0 0.0
      %2369 = vmatpush.xpose.msra.mxu0 0.0
      %2370 = vmatpush.xpose.msra.mxu0 0.0
      %2371 = vmatpush.xpose.msra.mxu0 0.0
      %2372 = vmatpush.xpose.msra.mxu0 0.0
      %2373 = vmatpush.xpose.msra.mxu0 0.0
      %2374 = vmatpush.xpose.msra.mxu0 0.0
      %2375 = vmatpush.xpose.msra.mxu0 0.0
      %2376 = vmatpush.xpose.msra.mxu0 0.0
      %2377 = vmatpush.xpose.msra.mxu0 0.0
      %2378 = vmatpush.xpose.msra.mxu0 0.0
      %2379 = vmatpush.xpose.msra.mxu0 0.0
      %2380 = vmatpush.xpose.msra.mxu0 0.0
      %2381 = vmatpush.xpose.msra.mxu0 %v2365
      %2382 = vmatpush.xpose.msra.mxu0 %v2362
      %2383 = vmatmul.f32.gmra.mxu0 %v2356
      %v2384 = vpop.f32.mrf.mxu0
      %v2385 = vadd.f32 0.0, %v2384
      %2386 = vmatmul.f32.gmra.mxu0 %v2359
      %v2387 = vpop.f32.mrf.mxu0
      %v2388 = vadd.f32 0.0, %v2387
      %2389 = vdwg.mxu0
      %v2391 = vsel %vm2144, %v504, 0
      %v2394 = vsel %vm2144, %v507, 0
      %v2397 = vsel %vm2144, %v625, 0
      %v2400 = vsel %vm2144, %v628, 0
      %2402 = vmatpush.xpose.msra.mxu0 0.0
      %2403 = vmatpush.xpose.msra.mxu0 0.0
      %2404 = vmatpush.xpose.msra.mxu0 0.0
      %2405 = vmatpush.xpose.msra.mxu0 0.0
      %2406 = vmatpush.xpose.msra.mxu0 0.0
      %2407 = vmatpush.xpose.msra.mxu0 0.0
      %2408 = vmatpush.xpose.msra.mxu0 0.0
      %2409 = vmatpush.xpose.msra.mxu0 0.0
      %2410 = vmatpush.xpose.msra.mxu0 0.0
      %2411 = vmatpush.xpose.msra.mxu0 0.0
      %2412 = vmatpush.xpose.msra.mxu0 0.0
      %2413 = vmatpush.xpose.msra.mxu0 0.0
      %2414 = vmatpush.xpose.msra.mxu0 0.0
      %2415 = vmatpush.xpose.msra.mxu0 0.0
      %2416 = vmatpush.xpose.msra.mxu0 %v2400
      %2417 = vmatpush.xpose.msra.mxu0 %v2397
      %2418 = vmatmul.f32.gmra.mxu0 %v2391
      %v2419 = vpop.f32.mrf.mxu0
      %v2420 = vadd.f32 0.0, %v2419
      %2421 = vmatmul.f32.gmra.mxu0 %v2394
      %v2422 = vpop.f32.mrf.mxu0
      %v2423 = vadd.f32 0.0, %v2422
      %2424 = vdwg.mxu0
      %v2426 = vsel %vm2144, %v510, 0
      %v2429 = vsel %vm2144, %v513, 0
      %v2432 = vsel %vm2144, %v631, 0
      %v2435 = vsel %vm2144, %v634, 0
      %2437 = vmatpush.xpose.msra.mxu0 0.0
      %2438 = vmatpush.xpose.msra.mxu0 0.0
      %2439 = vmatpush.xpose.msra.mxu0 0.0
      %2440 = vmatpush.xpose.msra.mxu0 0.0
      %2441 = vmatpush.xpose.msra.mxu0 0.0
      %2442 = vmatpush.xpose.msra.mxu0 0.0
      %2443 = vmatpush.xpose.msra.mxu0 0.0
      %2444 = vmatpush.xpose.msra.mxu0 0.0
      %2445 = vmatpush.xpose.msra.mxu0 0.0
      %2446 = vmatpush.xpose.msra.mxu0 0.0
      %2447 = vmatpush.xpose.msra.mxu0 0.0
      %2448 = vmatpush.xpose.msra.mxu0 0.0
      %2449 = vmatpush.xpose.msra.mxu0 0.0
      %2450 = vmatpush.xpose.msra.mxu0 0.0
      %2451 = vmatpush.xpose.msra.mxu0 %v2435
      %2452 = vmatpush.xpose.msra.mxu0 %v2432
      %2453 = vmatmul.f32.gmra.mxu0 %v2426
      %v2454 = vpop.f32.mrf.mxu0
      %v2455 = vadd.f32 0.0, %v2454
      %2456 = vmatmul.f32.gmra.mxu0 %v2429
      %v2457 = vpop.f32.mrf.mxu0
      %v2458 = vadd.f32 0.0, %v2457
      %2459 = vdwg.mxu0
      %v2461 = vsel %vm2144, %v516, 0
      %v2464 = vsel %vm2144, %v519, 0
      %v2467 = vsel %vm2144, %v637, 0
      %v2470 = vsel %vm2144, %v640, 0
      %2472 = vmatpush.xpose.msra.mxu0 0.0
      %2473 = vmatpush.xpose.msra.mxu0 0.0
      %2474 = vmatpush.xpose.msra.mxu0 0.0
      %2475 = vmatpush.xpose.msra.mxu0 0.0
      %2476 = vmatpush.xpose.msra.mxu0 0.0
      %2477 = vmatpush.xpose.msra.mxu0 0.0
      %2478 = vmatpush.xpose.msra.mxu0 0.0
      %2479 = vmatpush.xpose.msra.mxu0 0.0
      %2480 = vmatpush.xpose.msra.mxu0 0.0
      %2481 = vmatpush.xpose.msra.mxu0 0.0
      %2482 = vmatpush.xpose.msra.mxu0 0.0
      %2483 = vmatpush.xpose.msra.mxu0 0.0
      %2484 = vmatpush.xpose.msra.mxu0 0.0
      %2485 = vmatpush.xpose.msra.mxu0 0.0
      %2486 = vmatpush.xpose.msra.mxu0 %v2470
      %2487 = vmatpush.xpose.msra.mxu0 %v2467
      %2488 = vmatmul.f32.gmra.mxu0 %v2461
      %v2489 = vpop.f32.mrf.mxu0
      %v2490 = vadd.f32 0.0, %v2489
      %2491 = vmatmul.f32.gmra.mxu0 %v2464
      %v2492 = vpop.f32.mrf.mxu0
      %v2493 = vadd.f32 0.0, %v2492
      %2494 = vdwg.mxu0
      %v2496 = vsel %vm2144, %v522, 0
      %v2499 = vsel %vm2144, %v525, 0
      %v2502 = vsel %vm2144, %v643, 0
      %v2505 = vsel %vm2144, %v646, 0
      %2507 = vmatpush.xpose.msra.mxu0 0.0
      %2508 = vmatpush.xpose.msra.mxu0 0.0
      %2509 = vmatpush.xpose.msra.mxu0 0.0
      %2510 = vmatpush.xpose.msra.mxu0 0.0
      %2511 = vmatpush.xpose.msra.mxu0 0.0
      %2512 = vmatpush.xpose.msra.mxu0 0.0
      %2513 = vmatpush.xpose.msra.mxu0 0.0
      %2514 = vmatpush.xpose.msra.mxu0 0.0
      %2515 = vmatpush.xpose.msra.mxu0 0.0
      %2516 = vmatpush.xpose.msra.mxu0 0.0
      %2517 = vmatpush.xpose.msra.mxu0 0.0
      %2518 = vmatpush.xpose.msra.mxu0 0.0
      %2519 = vmatpush.xpose.msra.mxu0 0.0
      %2520 = vmatpush.xpose.msra.mxu0 0.0
      %2521 = vmatpush.xpose.msra.mxu0 %v2505
      %2522 = vmatpush.xpose.msra.mxu0 %v2502
      %2523 = vmatmul.f32.gmra.mxu0 %v2496
      %v2524 = vpop.f32.mrf.mxu0
      %v2525 = vadd.f32 0.0, %v2524
      %2526 = vmatmul.f32.gmra.mxu0 %v2499
      %v2527 = vpop.f32.mrf.mxu0
      %v2528 = vadd.f32 0.0, %v2527
      %2529 = vdwg.mxu0
      %v2531 = vsel %vm2144, %v528, 0
      %v2534 = vsel %vm2144, %v531, 0
      %v2537 = vsel %vm2144, %v649, 0
      %v2540 = vsel %vm2144, %v652, 0
      %2542 = vmatpush.xpose.msra.mxu0 0.0
      %2543 = vmatpush.xpose.msra.mxu0 0.0
      %2544 = vmatpush.xpose.msra.mxu0 0.0
      %2545 = vmatpush.xpose.msra.mxu0 0.0
      %2546 = vmatpush.xpose.msra.mxu0 0.0
      %2547 = vmatpush.xpose.msra.mxu0 0.0
      %2548 = vmatpush.xpose.msra.mxu0 0.0
      %2549 = vmatpush.xpose.msra.mxu0 0.0
      %2550 = vmatpush.xpose.msra.mxu0 0.0
      %2551 = vmatpush.xpose.msra.mxu0 0.0
      %2552 = vmatpush.xpose.msra.mxu0 0.0
      %2553 = vmatpush.xpose.msra.mxu0 0.0
      %2554 = vmatpush.xpose.msra.mxu0 0.0
      %2555 = vmatpush.xpose.msra.mxu0 0.0
      %2556 = vmatpush.xpose.msra.mxu0 %v2540
      %2557 = vmatpush.xpose.msra.mxu0 %v2537
      %2558 = vmatmul.f32.gmra.mxu0 %v2531
      %v2559 = vpop.f32.mrf.mxu0
      %v2560 = vadd.f32 0.0, %v2559
      %2561 = vmatmul.f32.gmra.mxu0 %v2534
      %v2562 = vpop.f32.mrf.mxu0
      %v2563 = vadd.f32 0.0, %v2562
      %2564 = vdwg.mxu0
      %v2566 = vsel %vm2144, %v534, 0
      %v2569 = vsel %vm2144, %v537, 0
      %v2572 = vsel %vm2144, %v655, 0
      %v2575 = vsel %vm2144, %v658, 0
      %2577 = vmatpush.xpose.msra.mxu0 0.0
      %2578 = vmatpush.xpose.msra.mxu0 0.0
      %2579 = vmatpush.xpose.msra.mxu0 0.0
      %2580 = vmatpush.xpose.msra.mxu0 0.0
      %2581 = vmatpush.xpose.msra.mxu0 0.0
      %2582 = vmatpush.xpose.msra.mxu0 0.0
      %2583 = vmatpush.xpose.msra.mxu0 0.0
      %2584 = vmatpush.xpose.msra.mxu0 0.0
      %2585 = vmatpush.xpose.msra.mxu0 0.0
      %2586 = vmatpush.xpose.msra.mxu0 0.0
      %2587 = vmatpush.xpose.msra.mxu0 0.0
      %2588 = vmatpush.xpose.msra.mxu0 0.0
      %2589 = vmatpush.xpose.msra.mxu0 0.0
      %2590 = vmatpush.xpose.msra.mxu0 0.0
      %2591 = vmatpush.xpose.msra.mxu0 %v2575
      %2592 = vmatpush.xpose.msra.mxu0 %v2572
      %2593 = vmatmul.f32.gmra.mxu0 %v2566
      %v2594 = vpop.f32.mrf.mxu0
      %v2595 = vadd.f32 0.0, %v2594
      %2596 = vmatmul.f32.gmra.mxu0 %v2569
      %v2597 = vpop.f32.mrf.mxu0
      %v2598 = vadd.f32 0.0, %v2597
      %2599 = vdwg.mxu0
      %v2601 = vsel %vm2144, %v540, 0
      %v2604 = vsel %vm2144, %v543, 0
      %v2607 = vsel %vm2144, %v661, 0
      %v2610 = vsel %vm2144, %v664, 0
      %2612 = vmatpush.xpose.msra.mxu0 0.0
      %2613 = vmatpush.xpose.msra.mxu0 0.0
      %2614 = vmatpush.xpose.msra.mxu0 0.0
      %2615 = vmatpush.xpose.msra.mxu0 0.0
      %2616 = vmatpush.xpose.msra.mxu0 0.0
      %2617 = vmatpush.xpose.msra.mxu0 0.0
      %2618 = vmatpush.xpose.msra.mxu0 0.0
      %2619 = vmatpush.xpose.msra.mxu0 0.0
      %2620 = vmatpush.xpose.msra.mxu0 0.0
      %2621 = vmatpush.xpose.msra.mxu0 0.0
      %2622 = vmatpush.xpose.msra.mxu0 0.0
      %2623 = vmatpush.xpose.msra.mxu0 0.0
      %2624 = vmatpush.xpose.msra.mxu0 0.0
      %2625 = vmatpush.xpose.msra.mxu0 0.0
      %2626 = vmatpush.xpose.msra.mxu0 %v2610
      %2627 = vmatpush.xpose.msra.mxu0 %v2607
      %2628 = vmatmul.f32.gmra.mxu0 %v2601
      %v2629 = vpop.f32.mrf.mxu0
      %v2630 = vadd.f32 0.0, %v2629
      %2631 = vmatmul.f32.gmra.mxu0 %v2604
      %v2632 = vpop.f32.mrf.mxu0
      %v2633 = vadd.f32 0.0, %v2632
      %2634 = vdwg.mxu0
      %v2636 = vsel %vm2144, %v546, 0
      %v2639 = vsel %vm2144, %v549, 0
      %v2642 = vsel %vm2144, %v667, 0
      %v2645 = vsel %vm2144, %v670, 0
      %2647 = vmatpush.xpose.msra.mxu0 0.0
      %2648 = vmatpush.xpose.msra.mxu0 0.0
      %2649 = vmatpush.xpose.msra.mxu0 0.0
      %2650 = vmatpush.xpose.msra.mxu0 0.0
      %2651 = vmatpush.xpose.msra.mxu0 0.0
      %2652 = vmatpush.xpose.msra.mxu0 0.0
      %2653 = vmatpush.xpose.msra.mxu0 0.0
      %2654 = vmatpush.xpose.msra.mxu0 0.0
      %2655 = vmatpush.xpose.msra.mxu0 0.0
      %2656 = vmatpush.xpose.msra.mxu0 0.0
      %2657 = vmatpush.xpose.msra.mxu0 0.0
      %2658 = vmatpush.xpose.msra.mxu0 0.0
      %2659 = vmatpush.xpose.msra.mxu0 0.0
      %2660 = vmatpush.xpose.msra.mxu0 0.0
      %2661 = vmatpush.xpose.msra.mxu0 %v2645
      %2662 = vmatpush.xpose.msra.mxu0 %v2642
      %2663 = vmatmul.f32.gmra.mxu0 %v2636
      %v2664 = vpop.f32.mrf.mxu0
      %v2665 = vadd.f32 0.0, %v2664
      %2666 = vmatmul.f32.gmra.mxu0 %v2639
      %v2667 = vpop.f32.mrf.mxu0
      %v2668 = vadd.f32 0.0, %v2667
      %2669 = vdwg.mxu0
      %v2671 = vsel %vm2144, %v552, 0
      %v2674 = vsel %vm2144, %v555, 0
      %v2677 = vsel %vm2144, %v673, 0
      %v2680 = vsel %vm2144, %v676, 0
      %2682 = vmatpush.xpose.msra.mxu0 0.0
      %2683 = vmatpush.xpose.msra.mxu0 0.0
      %2684 = vmatpush.xpose.msra.mxu0 0.0
      %2685 = vmatpush.xpose.msra.mxu0 0.0
      %2686 = vmatpush.xpose.msra.mxu0 0.0
      %2687 = vmatpush.xpose.msra.mxu0 0.0
      %2688 = vmatpush.xpose.msra.mxu0 0.0
      %2689 = vmatpush.xpose.msra.mxu0 0.0
      %2690 = vmatpush.xpose.msra.mxu0 0.0
      %2691 = vmatpush.xpose.msra.mxu0 0.0
      %2692 = vmatpush.xpose.msra.mxu0 0.0
      %2693 = vmatpush.xpose.msra.mxu0 0.0
      %2694 = vmatpush.xpose.msra.mxu0 0.0
      %2695 = vmatpush.xpose.msra.mxu0 0.0
      %2696 = vmatpush.xpose.msra.mxu0 %v2680
      %2697 = vmatpush.xpose.msra.mxu0 %v2677
      %2698 = vmatmul.f32.gmra.mxu0 %v2671
      %v2699 = vpop.f32.mrf.mxu0
      %v2700 = vadd.f32 0.0, %v2699
      %2701 = vmatmul.f32.gmra.mxu0 %v2674
      %v2702 = vpop.f32.mrf.mxu0
      %v2703 = vadd.f32 0.0, %v2702
      %2704 = vdwg.mxu0
      %v2706 = vsel %vm2144, %v897, 0
      %v2709 = vsel %vm2144, %v1009, 0
      %v2712 = vsel %vm2144, %v1345, 0
      %v2715 = vsel %vm2144, %v1457, 0
      %2717 = vmatpush.xpose.msra.mxu0 0.0
      %2718 = vmatpush.xpose.msra.mxu0 0.0
      %2719 = vmatpush.xpose.msra.mxu0 0.0
      %2720 = vmatpush.xpose.msra.mxu0 0.0
      %2721 = vmatpush.xpose.msra.mxu0 0.0
      %2722 = vmatpush.xpose.msra.mxu0 0.0
      %2723 = vmatpush.xpose.msra.mxu0 0.0
      %2724 = vmatpush.xpose.msra.mxu0 0.0
      %2725 = vmatpush.xpose.msra.mxu0 0.0
      %2726 = vmatpush.xpose.msra.mxu0 0.0
      %2727 = vmatpush.xpose.msra.mxu0 0.0
      %2728 = vmatpush.xpose.msra.mxu0 0.0
      %2729 = vmatpush.xpose.msra.mxu0 0.0
      %2730 = vmatpush.xpose.msra.mxu0 0.0
      %2731 = vmatpush.xpose.msra.mxu0 %v2715
      %2732 = vmatpush.xpose.msra.mxu0 %v2712
      %2733 = vmatmul.f32.gmra.mxu0 %v2706
      %v2734 = vpop.f32.mrf.mxu0
      %v2735 = vadd.f32 0.0, %v2734
      %2736 = vmatmul.f32.gmra.mxu0 %v2709
      %v2737 = vpop.f32.mrf.mxu0
      %v2738 = vadd.f32 0.0, %v2737
      %2739 = vdwg.mxu0
      %v2741 = vsel %vm2144, %v899, 0
      %v2744 = vsel %vm2144, %v1011, 0
      %v2747 = vsel %vm2144, %v1347, 0
      %v2750 = vsel %vm2144, %v1459, 0
      %2752 = vmatpush.xpose.msra.mxu0 0.0
      %2753 = vmatpush.xpose.msra.mxu0 0.0
      %2754 = vmatpush.xpose.msra.mxu0 0.0
      %2755 = vmatpush.xpose.msra.mxu0 0.0
      %2756 = vmatpush.xpose.msra.mxu0 0.0
      %2757 = vmatpush.xpose.msra.mxu0 0.0
      %2758 = vmatpush.xpose.msra.mxu0 0.0
      %2759 = vmatpush.xpose.msra.mxu0 0.0
      %2760 = vmatpush.xpose.msra.mxu0 0.0
      %2761 = vmatpush.xpose.msra.mxu0 0.0
      %2762 = vmatpush.xpose.msra.mxu0 0.0
      %2763 = vmatpush.xpose.msra.mxu0 0.0
      %2764 = vmatpush.xpose.msra.mxu0 0.0
      %2765 = vmatpush.xpose.msra.mxu0 0.0
      %2766 = vmatpush.xpose.msra.mxu0 %v2750
      %2767 = vmatpush.xpose.msra.mxu0 %v2747
      %2768 = vmatmul.f32.gmra.mxu0 %v2741
      %v2769 = vpop.f32.mrf.mxu0
      %v2770 = vadd.f32 0.0, %v2769
      %2771 = vmatmul.f32.gmra.mxu0 %v2744
      %v2772 = vpop.f32.mrf.mxu0
      %v2773 = vadd.f32 0.0, %v2772
      %2774 = vdwg.mxu0
      %v2776 = vsel %vm2144, %v901, 0
      %v2779 = vsel %vm2144, %v1013, 0
      %v2782 = vsel %vm2144, %v1349, 0
      %v2785 = vsel %vm2144, %v1461, 0
      %2787 = vmatpush.xpose.msra.mxu0 0.0
      %2788 = vmatpush.xpose.msra.mxu0 0.0
      %2789 = vmatpush.xpose.msra.mxu0 0.0
      %2790 = vmatpush.xpose.msra.mxu0 0.0
      %2791 = vmatpush.xpose.msra.mxu0 0.0
      %2792 = vmatpush.xpose.msra.mxu0 0.0
      %2793 = vmatpush.xpose.msra.mxu0 0.0
      %2794 = vmatpush.xpose.msra.mxu0 0.0
      %2795 = vmatpush.xpose.msra.mxu0 0.0
      %2796 = vmatpush.xpose.msra.mxu0 0.0
      %2797 = vmatpush.xpose.msra.mxu0 0.0
      %2798 = vmatpush.xpose.msra.mxu0 0.0
      %2799 = vmatpush.xpose.msra.mxu0 0.0
      %2800 = vmatpush.xpose.msra.mxu0 0.0
      %2801 = vmatpush.xpose.msra.mxu0 %v2785
      %2802 = vmatpush.xpose.msra.mxu0 %v2782
      %2803 = vmatmul.f32.gmra.mxu0 %v2776
      %v2804 = vpop.f32.mrf.mxu0
      %v2805 = vadd.f32 0.0, %v2804
      %2806 = vmatmul.f32.gmra.mxu0 %v2779
      %v2807 = vpop.f32.mrf.mxu0
      %v2808 = vadd.f32 0.0, %v2807
      %2809 = vdwg.mxu0
      %v2811 = vsel %vm2144, %v903, 0
      %v2814 = vsel %vm2144, %v1015, 0
      %v2817 = vsel %vm2144, %v1351, 0
      %v2820 = vsel %vm2144, %v1463, 0
      %2822 = vmatpush.xpose.msra.mxu0 0.0
      %2823 = vmatpush.xpose.msra.mxu0 0.0
      %2824 = vmatpush.xpose.msra.mxu0 0.0
      %2825 = vmatpush.xpose.msra.mxu0 0.0
      %2826 = vmatpush.xpose.msra.mxu0 0.0
      %2827 = vmatpush.xpose.msra.mxu0 0.0
      %2828 = vmatpush.xpose.msra.mxu0 0.0
      %2829 = vmatpush.xpose.msra.mxu0 0.0
      %2830 = vmatpush.xpose.msra.mxu0 0.0
      %2831 = vmatpush.xpose.msra.mxu0 0.0
      %2832 = vmatpush.xpose.msra.mxu0 0.0
      %2833 = vmatpush.xpose.msra.mxu0 0.0
      %2834 = vmatpush.xpose.msra.mxu0 0.0
      %2835 = vmatpush.xpose.msra.mxu0 0.0
      %2836 = vmatpush.xpose.msra.mxu0 %v2820
      %2837 = vmatpush.xpose.msra.mxu0 %v2817
      %2838 = vmatmul.f32.gmra.mxu0 %v2811
      %v2839 = vpop.f32.mrf.mxu0
      %v2840 = vadd.f32 0.0, %v2839
      %2841 = vmatmul.f32.gmra.mxu0 %v2814
      %v2842 = vpop.f32.mrf.mxu0
      %v2843 = vadd.f32 0.0, %v2842
      %2844 = vdwg.mxu0
      %v2846 = vsel %vm2144, %v905, 0
      %v2849 = vsel %vm2144, %v1017, 0
      %v2852 = vsel %vm2144, %v1353, 0
      %v2855 = vsel %vm2144, %v1465, 0
      %2857 = vmatpush.xpose.msra.mxu0 0.0
      %2858 = vmatpush.xpose.msra.mxu0 0.0
      %2859 = vmatpush.xpose.msra.mxu0 0.0
      %2860 = vmatpush.xpose.msra.mxu0 0.0
      %2861 = vmatpush.xpose.msra.mxu0 0.0
      %2862 = vmatpush.xpose.msra.mxu0 0.0
      %2863 = vmatpush.xpose.msra.mxu0 0.0
      %2864 = vmatpush.xpose.msra.mxu0 0.0
      %2865 = vmatpush.xpose.msra.mxu0 0.0
      %2866 = vmatpush.xpose.msra.mxu0 0.0
      %2867 = vmatpush.xpose.msra.mxu0 0.0
      %2868 = vmatpush.xpose.msra.mxu0 0.0
      %2869 = vmatpush.xpose.msra.mxu0 0.0
      %2870 = vmatpush.xpose.msra.mxu0 0.0
      %2871 = vmatpush.xpose.msra.mxu0 %v2855
      %2872 = vmatpush.xpose.msra.mxu0 %v2852
      %2873 = vmatmul.f32.gmra.mxu0 %v2846
      %v2874 = vpop.f32.mrf.mxu0
      %v2875 = vadd.f32 0.0, %v2874
      %2876 = vmatmul.f32.gmra.mxu0 %v2849
      %v2877 = vpop.f32.mrf.mxu0
      %v2878 = vadd.f32 0.0, %v2877
      %2879 = vdwg.mxu0
      %v2881 = vsel %vm2144, %v907, 0
      %v2884 = vsel %vm2144, %v1019, 0
      %v2887 = vsel %vm2144, %v1355, 0
      %v2890 = vsel %vm2144, %v1467, 0
      %2892 = vmatpush.xpose.msra.mxu0 0.0
      %2893 = vmatpush.xpose.msra.mxu0 0.0
      %2894 = vmatpush.xpose.msra.mxu0 0.0
      %2895 = vmatpush.xpose.msra.mxu0 0.0
      %2896 = vmatpush.xpose.msra.mxu0 0.0
      %2897 = vmatpush.xpose.msra.mxu0 0.0
      %2898 = vmatpush.xpose.msra.mxu0 0.0
      %2899 = vmatpush.xpose.msra.mxu0 0.0
      %2900 = vmatpush.xpose.msra.mxu0 0.0
      %2901 = vmatpush.xpose.msra.mxu0 0.0
      %2902 = vmatpush.xpose.msra.mxu0 0.0
      %2903 = vmatpush.xpose.msra.mxu0 0.0
      %2904 = vmatpush.xpose.msra.mxu0 0.0
      %2905 = vmatpush.xpose.msra.mxu0 0.0
      %2906 = vmatpush.xpose.msra.mxu0 %v2890
      %2907 = vmatpush.xpose.msra.mxu0 %v2887
      %2908 = vmatmul.f32.gmra.mxu0 %v2881
      %v2909 = vpop.f32.mrf.mxu0
      %v2910 = vadd.f32 0.0, %v2909
      %2911 = vmatmul.f32.gmra.mxu0 %v2884
      %v2912 = vpop.f32.mrf.mxu0
      %v2913 = vadd.f32 0.0, %v2912
      %2914 = vdwg.mxu0
      %v2916 = vsel %vm2144, %v909, 0
      %v2919 = vsel %vm2144, %v1021, 0
      %v2922 = vsel %vm2144, %v1357, 0
      %v2925 = vsel %vm2144, %v1469, 0
      %2927 = vmatpush.xpose.msra.mxu0 0.0
      %2928 = vmatpush.xpose.msra.mxu0 0.0
      %2929 = vmatpush.xpose.msra.mxu0 0.0
      %2930 = vmatpush.xpose.msra.mxu0 0.0
      %2931 = vmatpush.xpose.msra.mxu0 0.0
      %2932 = vmatpush.xpose.msra.mxu0 0.0
      %2933 = vmatpush.xpose.msra.mxu0 0.0
      %2934 = vmatpush.xpose.msra.mxu0 0.0
      %2935 = vmatpush.xpose.msra.mxu0 0.0
      %2936 = vmatpush.xpose.msra.mxu0 0.0
      %2937 = vmatpush.xpose.msra.mxu0 0.0
      %2938 = vmatpush.xpose.msra.mxu0 0.0
      %2939 = vmatpush.xpose.msra.mxu0 0.0
      %2940 = vmatpush.xpose.msra.mxu0 0.0
      %2941 = vmatpush.xpose.msra.mxu0 %v2925
      %2942 = vmatpush.xpose.msra.mxu0 %v2922
      %2943 = vmatmul.f32.gmra.mxu0 %v2916
      %v2944 = vpop.f32.mrf.mxu0
      %v2945 = vadd.f32 0.0, %v2944
      %2946 = vmatmul.f32.gmra.mxu0 %v2919
      %v2947 = vpop.f32.mrf.mxu0
      %v2948 = vadd.f32 0.0, %v2947
      %2949 = vdwg.mxu0
      %v2951 = vsel %vm2144, %v911, 0
      %v2954 = vsel %vm2144, %v1023, 0
      %v2957 = vsel %vm2144, %v1359, 0
      %v2960 = vsel %vm2144, %v1471, 0
      %2962 = vmatpush.xpose.msra.mxu0 0.0
      %2963 = vmatpush.xpose.msra.mxu0 0.0
      %2964 = vmatpush.xpose.msra.mxu0 0.0
      %2965 = vmatpush.xpose.msra.mxu0 0.0
      %2966 = vmatpush.xpose.msra.mxu0 0.0
      %2967 = vmatpush.xpose.msra.mxu0 0.0
      %2968 = vmatpush.xpose.msra.mxu0 0.0
      %2969 = vmatpush.xpose.msra.mxu0 0.0
      %2970 = vmatpush.xpose.msra.mxu0 0.0
      %2971 = vmatpush.xpose.msra.mxu0 0.0
      %2972 = vmatpush.xpose.msra.mxu0 0.0
      %2973 = vmatpush.xpose.msra.mxu0 0.0
      %2974 = vmatpush.xpose.msra.mxu0 0.0
      %2975 = vmatpush.xpose.msra.mxu0 0.0
      %2976 = vmatpush.xpose.msra.mxu0 %v2960
      %2977 = vmatpush.xpose.msra.mxu0 %v2957
      %2978 = vmatmul.f32.gmra.mxu0 %v2951
      %v2979 = vpop.f32.mrf.mxu0
      %v2980 = vadd.f32 0.0, %v2979
      %2981 = vmatmul.f32.gmra.mxu0 %v2954
      %v2982 = vpop.f32.mrf.mxu0
      %v2983 = vadd.f32 0.0, %v2982
      %2984 = vdwg.mxu0
      %v2986 = vsel %vm2144, %v1121, 0
      %v2989 = vsel %vm2144, %v1233, 0
      %v2992 = vsel %vm2144, %v1569, 0
      %v2995 = vsel %vm2144, %v1681, 0
      %2997 = vmatpush.xpose.msra.mxu0 0.0
      %2998 = vmatpush.xpose.msra.mxu0 0.0
      %2999 = vmatpush.xpose.msra.mxu0 0.0
      %3000 = vmatpush.xpose.msra.mxu0 0.0
      %3001 = vmatpush.xpose.msra.mxu0 0.0
      %3002 = vmatpush.xpose.msra.mxu0 0.0
      %3003 = vmatpush.xpose.msra.mxu0 0.0
      %3004 = vmatpush.xpose.msra.mxu0 0.0
      %3005 = vmatpush.xpose.msra.mxu0 0.0
      %3006 = vmatpush.xpose.msra.mxu0 0.0
      %3007 = vmatpush.xpose.msra.mxu0 0.0
      %3008 = vmatpush.xpose.msra.mxu0 0.0
      %3009 = vmatpush.xpose.msra.mxu0 0.0
      %3010 = vmatpush.xpose.msra.mxu0 0.0
      %3011 = vmatpush.xpose.msra.mxu0 %v2995
      %3012 = vmatpush.xpose.msra.mxu0 %v2992
      %3013 = vmatmul.f32.gmra.mxu0 %v2986
      %v3014 = vpop.f32.mrf.mxu0
      %v3015 = vadd.f32 0.0, %v3014
      %3016 = vmatmul.f32.gmra.mxu0 %v2989
      %v3017 = vpop.f32.mrf.mxu0
      %v3018 = vadd.f32 0.0, %v3017
      %3019 = vdwg.mxu0
      %v3021 = vsel %vm2144, %v1123, 0
      %v3024 = vsel %vm2144, %v1235, 0
      %v3027 = vsel %vm2144, %v1571, 0
      %v3030 = vsel %vm2144, %v1683, 0
      %3032 = vmatpush.xpose.msra.mxu0 0.0
      %3033 = vmatpush.xpose.msra.mxu0 0.0
      %3034 = vmatpush.xpose.msra.mxu0 0.0
      %3035 = vmatpush.xpose.msra.mxu0 0.0
      %3036 = vmatpush.xpose.msra.mxu0 0.0
      %3037 = vmatpush.xpose.msra.mxu0 0.0
      %3038 = vmatpush.xpose.msra.mxu0 0.0
      %3039 = vmatpush.xpose.msra.mxu0 0.0
      %3040 = vmatpush.xpose.msra.mxu0 0.0
      %3041 = vmatpush.xpose.msra.mxu0 0.0
      %3042 = vmatpush.xpose.msra.mxu0 0.0
      %3043 = vmatpush.xpose.msra.mxu0 0.0
      %3044 = vmatpush.xpose.msra.mxu0 0.0
      %3045 = vmatpush.xpose.msra.mxu0 0.0
      %3046 = vmatpush.xpose.msra.mxu0 %v3030
      %3047 = vmatpush.xpose.msra.mxu0 %v3027
      %3048 = vmatmul.f32.gmra.mxu0 %v3021
      %v3049 = vpop.f32.mrf.mxu0
      %v3050 = vadd.f32 0.0, %v3049
      %3051 = vmatmul.f32.gmra.mxu0 %v3024
      %v3052 = vpop.f32.mrf.mxu0
      %v3053 = vadd.f32 0.0, %v3052
      %3054 = vdwg.mxu0
      %v3056 = vsel %vm2144, %v1125, 0
      %v3059 = vsel %vm2144, %v1237, 0
      %v3062 = vsel %vm2144, %v1573, 0
      %v3065 = vsel %vm2144, %v1685, 0
      %3067 = vmatpush.xpose.msra.mxu0 0.0
      %3068 = vmatpush.xpose.msra.mxu0 0.0
      %3069 = vmatpush.xpose.msra.mxu0 0.0
      %3070 = vmatpush.xpose.msra.mxu0 0.0
      %3071 = vmatpush.xpose.msra.mxu0 0.0
      %3072 = vmatpush.xpose.msra.mxu0 0.0
      %3073 = vmatpush.xpose.msra.mxu0 0.0
      %3074 = vmatpush.xpose.msra.mxu0 0.0
      %3075 = vmatpush.xpose.msra.mxu0 0.0
      %3076 = vmatpush.xpose.msra.mxu0 0.0
      %3077 = vmatpush.xpose.msra.mxu0 0.0
      %3078 = vmatpush.xpose.msra.mxu0 0.0
      %3079 = vmatpush.xpose.msra.mxu0 0.0
      %3080 = vmatpush.xpose.msra.mxu0 0.0
      %3081 = vmatpush.xpose.msra.mxu0 %v3065
      %3082 = vmatpush.xpose.msra.mxu0 %v3062
      %3083 = vmatmul.f32.gmra.mxu0 %v3056
      %v3084 = vpop.f32.mrf.mxu0
      %v3085 = vadd.f32 0.0, %v3084
      %3086 = vmatmul.f32.gmra.mxu0 %v3059
      %v3087 = vpop.f32.mrf.mxu0
      %v3088 = vadd.f32 0.0, %v3087
      %3089 = vdwg.mxu0
      %v3091 = vsel %vm2144, %v1127, 0
      %v3094 = vsel %vm2144, %v1239, 0
      %v3097 = vsel %vm2144, %v1575, 0
      %v3100 = vsel %vm2144, %v1687, 0
      %3102 = vmatpush.xpose.msra.mxu0 0.0
      %3103 = vmatpush.xpose.msra.mxu0 0.0
      %3104 = vmatpush.xpose.msra.mxu0 0.0
      %3105 = vmatpush.xpose.msra.mxu0 0.0
      %3106 = vmatpush.xpose.msra.mxu0 0.0
      %3107 = vmatpush.xpose.msra.mxu0 0.0
      %3108 = vmatpush.xpose.msra.mxu0 0.0
      %3109 = vmatpush.xpose.msra.mxu0 0.0
      %3110 = vmatpush.xpose.msra.mxu0 0.0
      %3111 = vmatpush.xpose.msra.mxu0 0.0
      %3112 = vmatpush.xpose.msra.mxu0 0.0
      %3113 = vmatpush.xpose.msra.mxu0 0.0
      %3114 = vmatpush.xpose.msra.mxu0 0.0
      %3115 = vmatpush.xpose.msra.mxu0 0.0
      %3116 = vmatpush.xpose.msra.mxu0 %v3100
      %3117 = vmatpush.xpose.msra.mxu0 %v3097
      %3118 = vmatmul.f32.gmra.mxu0 %v3091
      %v3119 = vpop.f32.mrf.mxu0
      %v3120 = vadd.f32 0.0, %v3119
      %3121 = vmatmul.f32.gmra.mxu0 %v3094
      %v3122 = vpop.f32.mrf.mxu0
      %v3123 = vadd.f32 0.0, %v3122
      %3124 = vdwg.mxu0
      %v3126 = vsel %vm2144, %v1129, 0
      %v3129 = vsel %vm2144, %v1241, 0
      %v3132 = vsel %vm2144, %v1577, 0
      %v3135 = vsel %vm2144, %v1689, 0
      %3137 = vmatpush.xpose.msra.mxu0 0.0
      %3138 = vmatpush.xpose.msra.mxu0 0.0
      %3139 = vmatpush.xpose.msra.mxu0 0.0
      %3140 = vmatpush.xpose.msra.mxu0 0.0
      %3141 = vmatpush.xpose.msra.mxu0 0.0
      %3142 = vmatpush.xpose.msra.mxu0 0.0
      %3143 = vmatpush.xpose.msra.mxu0 0.0
      %3144 = vmatpush.xpose.msra.mxu0 0.0
      %3145 = vmatpush.xpose.msra.mxu0 0.0
      %3146 = vmatpush.xpose.msra.mxu0 0.0
      %3147 = vmatpush.xpose.msra.mxu0 0.0
      %3148 = vmatpush.xpose.msra.mxu0 0.0
      %3149 = vmatpush.xpose.msra.mxu0 0.0
      %3150 = vmatpush.xpose.msra.mxu0 0.0
      %3151 = vmatpush.xpose.msra.mxu0 %v3135
      %3152 = vmatpush.xpose.msra.mxu0 %v3132
      %3153 = vmatmul.f32.gmra.mxu0 %v3126
      %v3154 = vpop.f32.mrf.mxu0
      %v3155 = vadd.f32 0.0, %v3154
      %3156 = vmatmul.f32.gmra.mxu0 %v3129
      %v3157 = vpop.f32.mrf.mxu0
      %v3158 = vadd.f32 0.0, %v3157
      %3159 = vdwg.mxu0
      %v3161 = vsel %vm2144, %v1131, 0
      %v3164 = vsel %vm2144, %v1243, 0
      %v3167 = vsel %vm2144, %v1579, 0
      %v3170 = vsel %vm2144, %v1691, 0
      %3172 = vmatpush.xpose.msra.mxu0 0.0
      %3173 = vmatpush.xpose.msra.mxu0 0.0
      %3174 = vmatpush.xpose.msra.mxu0 0.0
      %3175 = vmatpush.xpose.msra.mxu0 0.0
      %3176 = vmatpush.xpose.msra.mxu0 0.0
      %3177 = vmatpush.xpose.msra.mxu0 0.0
      %3178 = vmatpush.xpose.msra.mxu0 0.0
      %3179 = vmatpush.xpose.msra.mxu0 0.0
      %3180 = vmatpush.xpose.msra.mxu0 0.0
      %3181 = vmatpush.xpose.msra.mxu0 0.0
      %3182 = vmatpush.xpose.msra.mxu0 0.0
      %3183 = vmatpush.xpose.msra.mxu0 0.0
      %3184 = vmatpush.xpose.msra.mxu0 0.0
      %3185 = vmatpush.xpose.msra.mxu0 0.0
      %3186 = vmatpush.xpose.msra.mxu0 %v3170
      %3187 = vmatpush.xpose.msra.mxu0 %v3167
      %3188 = vmatmul.f32.gmra.mxu0 %v3161
      %v3189 = vpop.f32.mrf.mxu0
      %v3190 = vadd.f32 0.0, %v3189
      %3191 = vmatmul.f32.gmra.mxu0 %v3164
      %v3192 = vpop.f32.mrf.mxu0
      %v3193 = vadd.f32 0.0, %v3192
      %3194 = vdwg.mxu0
      %v3196 = vsel %vm2144, %v1133, 0
      %v3199 = vsel %vm2144, %v1245, 0
      %v3202 = vsel %vm2144, %v1581, 0
      %v3205 = vsel %vm2144, %v1693, 0
      %3207 = vmatpush.xpose.msra.mxu0 0.0
      %3208 = vmatpush.xpose.msra.mxu0 0.0
      %3209 = vmatpush.xpose.msra.mxu0 0.0
      %3210 = vmatpush.xpose.msra.mxu0 0.0
      %3211 = vmatpush.xpose.msra.mxu0 0.0
      %3212 = vmatpush.xpose.msra.mxu0 0.0
      %3213 = vmatpush.xpose.msra.mxu0 0.0
      %3214 = vmatpush.xpose.msra.mxu0 0.0
      %3215 = vmatpush.xpose.msra.mxu0 0.0
      %3216 = vmatpush.xpose.msra.mxu0 0.0
      %3217 = vmatpush.xpose.msra.mxu0 0.0
      %3218 = vmatpush.xpose.msra.mxu0 0.0
      %3219 = vmatpush.xpose.msra.mxu0 0.0
      %3220 = vmatpush.xpose.msra.mxu0 0.0
      %3221 = vmatpush.xpose.msra.mxu0 %v3205
      %3222 = vmatpush.xpose.msra.mxu0 %v3202
      %3223 = vmatmul.f32.gmra.mxu0 %v3196
      %v3224 = vpop.f32.mrf.mxu0
      %v3225 = vadd.f32 0.0, %v3224
      %3226 = vmatmul.f32.gmra.mxu0 %v3199
      %v3227 = vpop.f32.mrf.mxu0
      %v3228 = vadd.f32 0.0, %v3227
      %3229 = vdwg.mxu0
      %v3231 = vsel %vm2144, %v1135, 0
      %v3234 = vsel %vm2144, %v1247, 0
      %v3237 = vsel %vm2144, %v1583, 0
      %v3240 = vsel %vm2144, %v1695, 0
      %3242 = vmatpush.xpose.msra.mxu0 0.0
      %3243 = vmatpush.xpose.msra.mxu0 0.0
      %3244 = vmatpush.xpose.msra.mxu0 0.0
      %3245 = vmatpush.xpose.msra.mxu0 0.0
      %3246 = vmatpush.xpose.msra.mxu0 0.0
      %3247 = vmatpush.xpose.msra.mxu0 0.0
      %3248 = vmatpush.xpose.msra.mxu0 0.0
      %3249 = vmatpush.xpose.msra.mxu0 0.0
      %3250 = vmatpush.xpose.msra.mxu0 0.0
      %3251 = vmatpush.xpose.msra.mxu0 0.0
      %3252 = vmatpush.xpose.msra.mxu0 0.0
      %3253 = vmatpush.xpose.msra.mxu0 0.0
      %3254 = vmatpush.xpose.msra.mxu0 0.0
      %3255 = vmatpush.xpose.msra.mxu0 0.0
      %3256 = vmatpush.xpose.msra.mxu0 %v3240
      %3257 = vmatpush.xpose.msra.mxu0 %v3237
      %3258 = vmatmul.f32.gmra.mxu0 %v3231
      %v3259 = vpop.f32.mrf.mxu0
      %v3260 = vadd.f32 0.0, %v3259
      %3261 = vmatmul.f32.gmra.mxu0 %v3234
      %v3262 = vpop.f32.mrf.mxu0
      %v3263 = vadd.f32 0.0, %v3262
      %3264 = vdwg.mxu0
      %v3265 = vlaneseq
      %v3266 = vshrl.u32 %v3265, 7
      %v3267 = vadd.s32 %v3266, 8
      %v3268 = vlaneseq
      %v3269 = vand.u32 %v3268, 127
      %vm3270 = vcmp.eq.s32.totalorder %v3266, %v3269
      %vm3271 = vcmp.eq.s32.totalorder %v3267, %v3269
      %v3272 = vsel %vm3270, 1, 0
      %v3273 = vsel %vm3271, 1, 0
      %vm3274 = vcmp.eq.s32.totalorder %v3272, 1
      %vm3275 = vcmp.eq.s32.totalorder %v3273, 1
      %v3276 = vsel %vm3274, -inf, %v2735
      %v3277 = vsel %vm3275, -inf, %v2738
      %v3278 = vsel %vm3274, -inf, %v2770
      %v3279 = vsel %vm3275, -inf, %v2773
      %v3280 = vsel %vm3274, -inf, %v2805
      %v3281 = vsel %vm3275, -inf, %v2808
      %v3282 = vsel %vm3274, -inf, %v2840
      %v3283 = vsel %vm3275, -inf, %v2843
      %v3284 = vsel %vm3274, -inf, %v2875
      %v3285 = vsel %vm3275, -inf, %v2878
      %v3286 = vsel %vm3274, -inf, %v2910
      %v3287 = vsel %vm3275, -inf, %v2913
      %v3288 = vsel %vm3274, -inf, %v2945
      %v3289 = vsel %vm3275, -inf, %v2948
      %v3290 = vsel %vm3274, -inf, %v2980
      %v3291 = vsel %vm3275, -inf, %v2983
      %v3292 = vsel %vm3274, -inf, %v3015
      %v3293 = vsel %vm3275, -inf, %v3018
      %v3294 = vsel %vm3274, -inf, %v3050
      %v3295 = vsel %vm3275, -inf, %v3053
      %v3296 = vsel %vm3274, -inf, %v3085
      %v3297 = vsel %vm3275, -inf, %v3088
      %v3298 = vsel %vm3274, -inf, %v3120
      %v3299 = vsel %vm3275, -inf, %v3123
      %v3300 = vsel %vm3274, -inf, %v3155
      %v3301 = vsel %vm3275, -inf, %v3158
      %v3302 = vsel %vm3274, -inf, %v3190
      %v3303 = vsel %vm3275, -inf, %v3193
      %v3304 = vsel %vm3274, -inf, %v3225
      %v3305 = vsel %vm3275, -inf, %v3228
      %v3306 = vsel %vm3274, -inf, %v3260
      %v3307 = vsel %vm3275, -inf, %v3263
      %vm3308 = vcmask 130048
      %v3309 = vsel %vm3308, %v2175, -inf
      %3310 = vmax.xlane.f32.xlu0 %v3309
      %v3311 = vpop.xlane.xlu0 %3310
      %v3312 = vsel %vm3308, %v2178, -inf
      %3313 = vmax.xlane.f32.xlu0 %v3312
      %v3314 = vpop.xlane.xlu0 %3313
      %v3315 = vsel %vm3308, %v2210, -inf
      %3316 = vmax.xlane.f32.xlu0 %v3315
      %v3317 = vpop.xlane.xlu0 %3316
      %v3318 = vsel %vm3308, %v2213, -inf
      %3319 = vmax.xlane.f32.xlu0 %v3318
      %v3320 = vpop.xlane.xlu0 %3319
      %v3321 = vsel %vm3308, %v2245, -inf
      %3322 = vmax.xlane.f32.xlu0 %v3321
      %v3323 = vpop.xlane.xlu0 %3322
      %v3324 = vsel %vm3308, %v2248, -inf
      %3325 = vmax.xlane.f32.xlu0 %v3324
      %v3326 = vpop.xlane.xlu0 %3325
      %v3327 = vsel %vm3308, %v2280, -inf
      %3328 = vmax.xlane.f32.xlu0 %v3327
      %v3329 = vpop.xlane.xlu0 %3328
      %v3330 = vsel %vm3308, %v2283, -inf
      %3331 = vmax.xlane.f32.xlu0 %v3330
      %v3332 = vpop.xlane.xlu0 %3331
      %v3333 = vsel %vm3308, %v2315, -inf
      %3334 = vmax.xlane.f32.xlu0 %v3333
      %v3335 = vpop.xlane.xlu0 %3334
      %v3336 = vsel %vm3308, %v2318, -inf
      %3337 = vmax.xlane.f32.xlu0 %v3336
      %v3338 = vpop.xlane.xlu0 %3337
      %v3339 = vsel %vm3308, %v2350, -inf
      %3340 = vmax.xlane.f32.xlu0 %v3339
      %v3341 = vpop.xlane.xlu0 %3340
      %v3342 = vsel %vm3308, %v2353, -inf
      %3343 = vmax.xlane.f32.xlu0 %v3342
      %v3344 = vpop.xlane.xlu0 %3343
      %v3345 = vsel %vm3308, %v2385, -inf
      %3346 = vmax.xlane.f32.xlu0 %v3345
      %v3347 = vpop.xlane.xlu0 %3346
      %v3348 = vsel %vm3308, %v2388, -inf
      %3349 = vmax.xlane.f32.xlu0 %v3348
      %v3350 = vpop.xlane.xlu0 %3349
      %v3351 = vsel %vm3308, %v2420, -inf
      %3352 = vmax.xlane.f32.xlu0 %v3351
      %v3353 = vpop.xlane.xlu0 %3352
      %v3354 = vsel %vm3308, %v2423, -inf
      %3355 = vmax.xlane.f32.xlu0 %v3354
      %v3356 = vpop.xlane.xlu0 %3355
      %v3357 = vsel %vm3308, %v2455, -inf
      %3358 = vmax.xlane.f32.xlu0 %v3357
      %v3359 = vpop.xlane.xlu0 %3358
      %v3360 = vsel %vm3308, %v2458, -inf
      %3361 = vmax.xlane.f32.xlu0 %v3360
      %v3362 = vpop.xlane.xlu0 %3361
      %v3363 = vsel %vm3308, %v2490, -inf
      %3364 = vmax.xlane.f32.xlu0 %v3363
      %v3365 = vpop.xlane.xlu0 %3364
      %v3366 = vsel %vm3308, %v2493, -inf
      %3367 = vmax.xlane.f32.xlu0 %v3366
      %v3368 = vpop.xlane.xlu0 %3367
      %v3369 = vsel %vm3308, %v2525, -inf
      %3370 = vmax.xlane.f32.xlu0 %v3369
      %v3371 = vpop.xlane.xlu0 %3370
      %v3372 = vsel %vm3308, %v2528, -inf
      %3373 = vmax.xlane.f32.xlu0 %v3372
      %v3374 = vpop.xlane.xlu0 %3373
      %v3375 = vsel %vm3308, %v2560, -inf
      %3376 = vmax.xlane.f32.xlu0 %v3375
      %v3377 = vpop.xlane.xlu0 %3376
      %v3378 = vsel %vm3308, %v2563, -inf
      %3379 = vmax.xlane.f32.xlu0 %v3378
      %v3380 = vpop.xlane.xlu0 %3379
      %v3381 = vsel %vm3308, %v2595, -inf
      %3382 = vmax.xlane.f32.xlu0 %v3381
      %v3383 = vpop.xlane.xlu0 %3382
      %v3384 = vsel %vm3308, %v2598, -inf
      %3385 = vmax.xlane.f32.xlu0 %v3384
      %v3386 = vpop.xlane.xlu0 %3385
      %v3387 = vsel %vm3308, %v2630, -inf
      %3388 = vmax.xlane.f32.xlu0 %v3387
      %v3389 = vpop.xlane.xlu0 %3388
      %v3390 = vsel %vm3308, %v2633, -inf
      %3391 = vmax.xlane.f32.xlu0 %v3390
      %v3392 = vpop.xlane.xlu0 %3391
      %v3393 = vsel %vm3308, %v2665, -inf
      %3394 = vmax.xlane.f32.xlu0 %v3393
      %v3395 = vpop.xlane.xlu0 %3394
      %v3396 = vsel %vm3308, %v2668, -inf
      %3397 = vmax.xlane.f32.xlu0 %v3396
      %v3398 = vpop.xlane.xlu0 %3397
      %v3399 = vsel %vm3308, %v2700, -inf
      %3400 = vmax.xlane.f32.xlu0 %v3399
      %v3401 = vpop.xlane.xlu0 %3400
      %v3402 = vsel %vm3308, %v2703, -inf
      %3403 = vmax.xlane.f32.xlu0 %v3402
      %v3404 = vpop.xlane.xlu0 %3403
      %v3405 = vsel %vm3308, %v3276, -inf
      %3406 = vmax.xlane.f32.xlu0 %v3405
      %v3407 = vpop.xlane.xlu0 %3406
      %v3408 = vsel %vm3308, %v3277, -inf
      %3409 = vmax.xlane.f32.xlu0 %v3408
      %v3410 = vpop.xlane.xlu0 %3409
      %v3411 = vsel %vm3308, %v3278, -inf
      %3412 = vmax.xlane.f32.xlu0 %v3411
      %v3413 = vpop.xlane.xlu0 %3412
      %v3414 = vsel %vm3308, %v3279, -inf
      %3415 = vmax.xlane.f32.xlu0 %v3414
      %v3416 = vpop.xlane.xlu0 %3415
      %v3417 = vsel %vm3308, %v3280, -inf
      %3418 = vmax.xlane.f32.xlu0 %v3417
      %v3419 = vpop.xlane.xlu0 %3418
      %v3420 = vsel %vm3308, %v3281, -inf
      %3421 = vmax.xlane.f32.xlu0 %v3420
      %v3422 = vpop.xlane.xlu0 %3421
      %v3423 = vsel %vm3308, %v3282, -inf
      %3424 = vmax.xlane.f32.xlu0 %v3423
      %v3425 = vpop.xlane.xlu0 %3424
      %v3426 = vsel %vm3308, %v3283, -inf
      %3427 = vmax.xlane.f32.xlu0 %v3426
      %v3428 = vpop.xlane.xlu0 %3427
      %v3429 = vsel %vm3308, %v3284, -inf
      %3430 = vmax.xlane.f32.xlu0 %v3429
      %v3431 = vpop.xlane.xlu0 %3430
      %v3432 = vsel %vm3308, %v3285, -inf
      %3433 = vmax.xlane.f32.xlu0 %v3432
      %v3434 = vpop.xlane.xlu0 %3433
      %v3435 = vsel %vm3308, %v3286, -inf
      %3436 = vmax.xlane.f32.xlu0 %v3435
      %v3437 = vpop.xlane.xlu0 %3436
      %v3438 = vsel %vm3308, %v3287, -inf
      %3439 = vmax.xlane.f32.xlu0 %v3438
      %v3440 = vpop.xlane.xlu0 %3439
      %v3441 = vsel %vm3308, %v3288, -inf
      %3442 = vmax.xlane.f32.xlu0 %v3441
      %v3443 = vpop.xlane.xlu0 %3442
      %v3444 = vsel %vm3308, %v3289, -inf
      %3445 = vmax.xlane.f32.xlu0 %v3444
      %v3446 = vpop.xlane.xlu0 %3445
      %v3447 = vsel %vm3308, %v3290, -inf
      %3448 = vmax.xlane.f32.xlu0 %v3447
      %v3449 = vpop.xlane.xlu0 %3448
      %v3450 = vsel %vm3308, %v3291, -inf
      %3451 = vmax.xlane.f32.xlu0 %v3450
      %v3452 = vpop.xlane.xlu0 %3451
      %v3453 = vsel %vm3308, %v3292, -inf
      %3454 = vmax.xlane.f32.xlu0 %v3453
      %v3455 = vpop.xlane.xlu0 %3454
      %v3456 = vsel %vm3308, %v3293, -inf
      %3457 = vmax.xlane.f32.xlu0 %v3456
      %v3458 = vpop.xlane.xlu0 %3457
      %v3459 = vsel %vm3308, %v3294, -inf
      %3460 = vmax.xlane.f32.xlu0 %v3459
      %v3461 = vpop.xlane.xlu0 %3460
      %v3462 = vsel %vm3308, %v3295, -inf
      %3463 = vmax.xlane.f32.xlu0 %v3462
      %v3464 = vpop.xlane.xlu0 %3463
      %v3465 = vsel %vm3308, %v3296, -inf
      %3466 = vmax.xlane.f32.xlu0 %v3465
      %v3467 = vpop.xlane.xlu0 %3466
      %v3468 = vsel %vm3308, %v3297, -inf
      %3469 = vmax.xlane.f32.xlu0 %v3468
      %v3470 = vpop.xlane.xlu0 %3469
      %v3471 = vsel %vm3308, %v3298, -inf
      %3472 = vmax.xlane.f32.xlu0 %v3471
      %v3473 = vpop.xlane.xlu0 %3472
      %v3474 = vsel %vm3308, %v3299, -inf
      %3475 = vmax.xlane.f32.xlu0 %v3474
      %v3476 = vpop.xlane.xlu0 %3475
      %v3477 = vsel %vm3308, %v3300, -inf
      %3478 = vmax.xlane.f32.xlu0 %v3477
      %v3479 = vpop.xlane.xlu0 %3478
      %v3480 = vsel %vm3308, %v3301, -inf
      %3481 = vmax.xlane.f32.xlu0 %v3480
      %v3482 = vpop.xlane.xlu0 %3481
      %v3483 = vsel %vm3308, %v3302, -inf
      %3484 = vmax.xlane.f32.xlu0 %v3483
      %v3485 = vpop.xlane.xlu0 %3484
      %v3486 = vsel %vm3308, %v3303, -inf
      %3487 = vmax.xlane.f32.xlu0 %v3486
      %v3488 = vpop.xlane.xlu0 %3487
      %v3489 = vsel %vm3308, %v3304, -inf
      %3490 = vmax.xlane.f32.xlu0 %v3489
      %v3491 = vpop.xlane.xlu0 %3490
      %v3492 = vsel %vm3308, %v3305, -inf
      %3493 = vmax.xlane.f32.xlu0 %v3492
      %v3494 = vpop.xlane.xlu0 %3493
      %v3495 = vsel %vm3308, %v3306, -inf
      %3496 = vmax.xlane.f32.xlu0 %v3495
      %v3497 = vpop.xlane.xlu0 %3496
      %v3498 = vsel %vm3308, %v3307, -inf
      %3499 = vmax.xlane.f32.xlu0 %v3498
      %v3500 = vpop.xlane.xlu0 %3499
      %v3533 = vperm.slane %v3407, %v3269
      %v3534 = vadd.s32 %v3269, 4294967288
      %v3535 = vperm.slane %v3410, %v3534
      %vm3536 = vcmask 130112
      %v3537 = vsel %vm3536, %v3535, %v3533
      %v3538 = vperm.slane %v3413, %v3269
      %v3539 = vperm.slane %v3416, %v3534
      %v3540 = vsel %vm3536, %v3539, %v3538
      %v3541 = vperm.slane %v3419, %v3269
      %v3542 = vperm.slane %v3422, %v3534
      %v3543 = vsel %vm3536, %v3542, %v3541
      %v3544 = vperm.slane %v3425, %v3269
      %v3545 = vperm.slane %v3428, %v3534
      %v3546 = vsel %vm3536, %v3545, %v3544
      %v3547 = vperm.slane %v3431, %v3269
      %v3548 = vperm.slane %v3434, %v3534
      %v3549 = vsel %vm3536, %v3548, %v3547
      %v3550 = vperm.slane %v3437, %v3269
      %v3551 = vperm.slane %v3440, %v3534
      %v3552 = vsel %vm3536, %v3551, %v3550
      %v3553 = vperm.slane %v3443, %v3269
      %v3554 = vperm.slane %v3446, %v3534
      %v3555 = vsel %vm3536, %v3554, %v3553
      %v3556 = vperm.slane %v3449, %v3269
      %v3557 = vperm.slane %v3452, %v3534
      %v3558 = vsel %vm3536, %v3557, %v3556
      %v3559 = vperm.slane %v3455, %v3269
      %v3560 = vperm.slane %v3458, %v3534
      %v3561 = vsel %vm3536, %v3560, %v3559
      %v3562 = vperm.slane %v3461, %v3269
      %v3563 = vperm.slane %v3464, %v3534
      %v3564 = vsel %vm3536, %v3563, %v3562
      %v3565 = vperm.slane %v3467, %v3269
      %v3566 = vperm.slane %v3470, %v3534
      %v3567 = vsel %vm3536, %v3566, %v3565
      %v3568 = vperm.slane %v3473, %v3269
      %v3569 = vperm.slane %v3476, %v3534
      %v3570 = vsel %vm3536, %v3569, %v3568
      %v3571 = vperm.slane %v3479, %v3269
      %v3572 = vperm.slane %v3482, %v3534
      %v3573 = vsel %vm3536, %v3572, %v3571
      %v3574 = vperm.slane %v3485, %v3269
      %v3575 = vperm.slane %v3488, %v3534
      %v3576 = vsel %vm3536, %v3575, %v3574
      %v3577 = vperm.slane %v3491, %v3269
      %v3578 = vperm.slane %v3494, %v3534
      %v3579 = vsel %vm3536, %v3578, %v3577
      %v3580 = vperm.slane %v3497, %v3269
      %v3581 = vperm.slane %v3500, %v3534
      %v3582 = vsel %vm3536, %v3581, %v3580
      %vm3583 = vcmask 1041409
      %v3584 = vsel %vm3583, %v3540, %v3537
      %vm3585 = vcmask 1042434
      %v3586 = vsel %vm3585, %v3543, %v3584
      %vm3587 = vcmask 1043459
      %v3588 = vsel %vm3587, %v3546, %v3586
      %vm3589 = vcmask 1044484
      %v3590 = vsel %vm3589, %v3549, %v3588
      %vm3591 = vcmask 1045509
      %v3592 = vsel %vm3591, %v3552, %v3590
      %vm3593 = vcmask 1046534
      %v3594 = vsel %vm3593, %v3555, %v3592
      %vm3595 = vcmask 1047559
      %v3596 = vsel %vm3595, %v3558, %v3594
      %v3597 = vsel %vm3583, %v3564, %v3561
      %v3598 = vsel %vm3585, %v3567, %v3597
      %v3599 = vsel %vm3587, %v3570, %v3598
      %v3600 = vsel %vm3589, %v3573, %v3599
      %v3601 = vsel %vm3591, %v3576, %v3600
      %v3602 = vsel %vm3593, %v3579, %v3601
      %v3603 = vsel %vm3595, %v3582, %v3602
      %3606 = vxpose.xlu0.b32.start [1/16] %v3596, 128
      %3607 = vxpose.xlu0.b32.cont [2/16] %v3603, 128
      %3608 = vxpose.xlu0.b32.cont [3/16] 0.0, 128
      %3609 = vxpose.xlu0.b32.cont [4/16] 0.0, 128
      %3610 = vxpose.xlu0.b32.cont [5/16] 0.0, 128
      %3611 = vxpose.xlu0.b32.cont [6/16] 0.0, 128
      %3612 = vxpose.xlu0.b32.cont [7/16] 0.0, 128
      %3613 = vxpose.xlu0.b32.cont [8/16] 0.0, 128
      %3614 = vxpose.xlu0.b32.cont [9/16] 0.0, 128
      %3615 = vxpose.xlu0.b32.cont [10/16] 0.0, 128
      %3616 = vxpose.xlu0.b32.cont [11/16] 0.0, 128
      %3617 = vxpose.xlu0.b32.cont [12/16] 0.0, 128
      %3618 = vxpose.xlu0.b32.cont [13/16] 0.0, 128
      %3619 = vxpose.xlu0.b32.cont [14/16] 0.0, 128
      %3620 = vxpose.xlu0.b32.cont [15/16] 0.0, 128
      %3621 = vxpose.xlu0.b32.end [16/16] 0.0, 128
      %v3622 = vpop.trf.xlu0
      %v3623 = vpop.trf.xlu0
      %v3624 = vpop.trf.xlu0
      %v3625 = vpop.trf.xlu0
      %v3626 = vpop.trf.xlu0
      %v3627 = vpop.trf.xlu0
      %v3628 = vpop.trf.xlu0
      %v3629 = vpop.trf.xlu0
      %v3630 = vpop.trf.xlu0
      %v3631 = vpop.trf.xlu0
      %v3632 = vpop.trf.xlu0
      %v3633 = vpop.trf.xlu0
      %v3634 = vpop.trf.xlu0
      %v3635 = vpop.trf.xlu0
      %v3636 = vpop.trf.xlu0
      %v3637 = vpop.trf.xlu0
      %v3640 = vperm.slane %v3622, 0
      %v3641 = vlaneseq
      %v3642 = vshrl.u32 %v3641, 7
      %3644 = vset.pattern.permute.xlu0 %v3642
      %3645 = vperm.xlu0 %3644, %v3640
      %v3646 = vpop.permute.xlu0 %3645
      %v3647 = vlaneseq
      %v3648 = vshrl.u32 %v3647, 7
      %v3649 = vadd.s32 %v3648, 8
      %3650 = vset.pattern.permute.xlu0 %v3649
      %3651 = vperm.xlu0 %3650, %v3640
      %v3652 = vpop.permute.xlu0 %3651
      %v3653 = vperm.slane %v3622, 1
      %v3654 = vlaneseq
      %v3655 = vshrl.u32 %v3654, 7
      %3657 = vset.pattern.permute.xlu0 %v3655
      %3658 = vperm.xlu0 %3657, %v3653
      %v3659 = vpop.permute.xlu0 %3658
      %v3660 = vlaneseq
      %v3661 = vshrl.u32 %v3660, 7
      %v3662 = vadd.s32 %v3661, 8
      %3663 = vset.pattern.permute.xlu0 %v3662
      %3664 = vperm.xlu0 %3663, %v3653
      %v3665 = vpop.permute.xlu0 %3664
      %v3666 = vperm.slane %v3622, 2
      %v3667 = vlaneseq
      %v3668 = vshrl.u32 %v3667, 7
      %3670 = vset.pattern.permute.xlu0 %v3668
      %3671 = vperm.xlu0 %3670, %v3666
      %v3672 = vpop.permute.xlu0 %3671
      %v3673 = vlaneseq
      %v3674 = vshrl.u32 %v3673, 7
      %v3675 = vadd.s32 %v3674, 8
      %3676 = vset.pattern.permute.xlu0 %v3675
      %3677 = vperm.xlu0 %3676, %v3666
      %v3678 = vpop.permute.xlu0 %3677
      %v3679 = vperm.slane %v3622, 3
      %v3680 = vlaneseq
      %v3681 = vshrl.u32 %v3680, 7
      %3683 = vset.pattern.permute.xlu0 %v3681
      %3684 = vperm.xlu0 %3683, %v3679
      %v3685 = vpop.permute.xlu0 %3684
      %v3686 = vlaneseq
      %v3687 = vshrl.u32 %v3686, 7
      %v3688 = vadd.s32 %v3687, 8
      %3689 = vset.pattern.permute.xlu0 %v3688
      %3690 = vperm.xlu0 %3689, %v3679
      %v3691 = vpop.permute.xlu0 %3690
      %v3692 = vperm.slane %v3622, 4
      %v3693 = vlaneseq
      %v3694 = vshrl.u32 %v3693, 7
      %3696 = vset.pattern.permute.xlu0 %v3694
      %3697 = vperm.xlu0 %3696, %v3692
      %v3698 = vpop.permute.xlu0 %3697
      %v3699 = vlaneseq
      %v3700 = vshrl.u32 %v3699, 7
      %v3701 = vadd.s32 %v3700, 8
      %3702 = vset.pattern.permute.xlu0 %v3701
      %3703 = vperm.xlu0 %3702, %v3692
      %v3704 = vpop.permute.xlu0 %3703
      %v3705 = vperm.slane %v3622, 5
      %v3706 = vlaneseq
      %v3707 = vshrl.u32 %v3706, 7
      %3709 = vset.pattern.permute.xlu0 %v3707
      %3710 = vperm.xlu0 %3709, %v3705
      %v3711 = vpop.permute.xlu0 %3710
      %v3712 = vlaneseq
      %v3713 = vshrl.u32 %v3712, 7
      %v3714 = vadd.s32 %v3713, 8
      %3715 = vset.pattern.permute.xlu0 %v3714
      %3716 = vperm.xlu0 %3715, %v3705
      %v3717 = vpop.permute.xlu0 %3716
      %v3718 = vperm.slane %v3622, 6
      %v3719 = vlaneseq
      %v3720 = vshrl.u32 %v3719, 7
      %3722 = vset.pattern.permute.xlu0 %v3720
      %3723 = vperm.xlu0 %3722, %v3718
      %v3724 = vpop.permute.xlu0 %3723
      %v3725 = vlaneseq
      %v3726 = vshrl.u32 %v3725, 7
      %v3727 = vadd.s32 %v3726, 8
      %3728 = vset.pattern.permute.xlu0 %v3727
      %3729 = vperm.xlu0 %3728, %v3718
      %v3730 = vpop.permute.xlu0 %3729
      %v3731 = vperm.slane %v3622, 7
      %v3732 = vlaneseq
      %v3733 = vshrl.u32 %v3732, 7
      %3735 = vset.pattern.permute.xlu0 %v3733
      %3736 = vperm.xlu0 %3735, %v3731
      %v3737 = vpop.permute.xlu0 %3736
      %v3738 = vlaneseq
      %v3739 = vshrl.u32 %v3738, 7
      %v3740 = vadd.s32 %v3739, 8
      %3741 = vset.pattern.permute.xlu0 %v3740
      %3742 = vperm.xlu0 %3741, %v3731
      %v3743 = vpop.permute.xlu0 %3742
      %v3744 = vperm.slane %v3623, 0
      %v3745 = vlaneseq
      %v3746 = vshrl.u32 %v3745, 7
      %3748 = vset.pattern.permute.xlu0 %v3746
      %3749 = vperm.xlu0 %3748, %v3744
      %v3750 = vpop.permute.xlu0 %3749
      %v3751 = vlaneseq
      %v3752 = vshrl.u32 %v3751, 7
      %v3753 = vadd.s32 %v3752, 8
      %3754 = vset.pattern.permute.xlu0 %v3753
      %3755 = vperm.xlu0 %3754, %v3744
      %v3756 = vpop.permute.xlu0 %3755
      %v3757 = vperm.slane %v3623, 1
      %v3758 = vlaneseq
      %v3759 = vshrl.u32 %v3758, 7
      %3761 = vset.pattern.permute.xlu0 %v3759
      %3762 = vperm.xlu0 %3761, %v3757
      %v3763 = vpop.permute.xlu0 %3762
      %v3764 = vlaneseq
      %v3765 = vshrl.u32 %v3764, 7
      %v3766 = vadd.s32 %v3765, 8
      %3767 = vset.pattern.permute.xlu0 %v3766
      %3768 = vperm.xlu0 %3767, %v3757
      %v3769 = vpop.permute.xlu0 %3768
      %v3770 = vperm.slane %v3623, 2
      %v3771 = vlaneseq
      %v3772 = vshrl.u32 %v3771, 7
      %3774 = vset.pattern.permute.xlu0 %v3772
      %3775 = vperm.xlu0 %3774, %v3770
      %v3776 = vpop.permute.xlu0 %3775
      %v3777 = vlaneseq
      %v3778 = vshrl.u32 %v3777, 7
      %v3779 = vadd.s32 %v3778, 8
      %3780 = vset.pattern.permute.xlu0 %v3779
      %3781 = vperm.xlu0 %3780, %v3770
      %v3782 = vpop.permute.xlu0 %3781
      %v3783 = vperm.slane %v3623, 3
      %v3784 = vlaneseq
      %v3785 = vshrl.u32 %v3784, 7
      %3787 = vset.pattern.permute.xlu0 %v3785
      %3788 = vperm.xlu0 %3787, %v3783
      %v3789 = vpop.permute.xlu0 %3788
      %v3790 = vlaneseq
      %v3791 = vshrl.u32 %v3790, 7
      %v3792 = vadd.s32 %v3791, 8
      %3793 = vset.pattern.permute.xlu0 %v3792
      %3794 = vperm.xlu0 %3793, %v3783
      %v3795 = vpop.permute.xlu0 %3794
      %v3796 = vperm.slane %v3623, 4
      %v3797 = vlaneseq
      %v3798 = vshrl.u32 %v3797, 7
      %3800 = vset.pattern.permute.xlu0 %v3798
      %3801 = vperm.xlu0 %3800, %v3796
      %v3802 = vpop.permute.xlu0 %3801
      %v3803 = vlaneseq
      %v3804 = vshrl.u32 %v3803, 7
      %v3805 = vadd.s32 %v3804, 8
      %3806 = vset.pattern.permute.xlu0 %v3805
      %3807 = vperm.xlu0 %3806, %v3796
      %v3808 = vpop.permute.xlu0 %3807
      %v3809 = vperm.slane %v3623, 5
      %v3810 = vlaneseq
      %v3811 = vshrl.u32 %v3810, 7
      %3813 = vset.pattern.permute.xlu0 %v3811
      %3814 = vperm.xlu0 %3813, %v3809
      %v3815 = vpop.permute.xlu0 %3814
      %v3816 = vlaneseq
      %v3817 = vshrl.u32 %v3816, 7
      %v3818 = vadd.s32 %v3817, 8
      %3819 = vset.pattern.permute.xlu0 %v3818
      %3820 = vperm.xlu0 %3819, %v3809
      %v3821 = vpop.permute.xlu0 %3820
      %v3822 = vperm.slane %v3623, 6
      %v3823 = vlaneseq
      %v3824 = vshrl.u32 %v3823, 7
      %3826 = vset.pattern.permute.xlu0 %v3824
      %3827 = vperm.xlu0 %3826, %v3822
      %v3828 = vpop.permute.xlu0 %3827
      %v3829 = vlaneseq
      %v3830 = vshrl.u32 %v3829, 7
      %v3831 = vadd.s32 %v3830, 8
      %3832 = vset.pattern.permute.xlu0 %v3831
      %3833 = vperm.xlu0 %3832, %v3822
      %v3834 = vpop.permute.xlu0 %3833
      %v3835 = vperm.slane %v3623, 7
      %v3836 = vlaneseq
      %v3837 = vshrl.u32 %v3836, 7
      %3839 = vset.pattern.permute.xlu0 %v3837
      %3840 = vperm.xlu0 %3839, %v3835
      %v3841 = vpop.permute.xlu0 %3840
      %v3842 = vlaneseq
      %v3843 = vshrl.u32 %v3842, 7
      %v3844 = vadd.s32 %v3843, 8
      %3845 = vset.pattern.permute.xlu0 %v3844
      %3846 = vperm.xlu0 %3845, %v3835
      %v3847 = vpop.permute.xlu0 %3846
      %v3880 = vmax.f32 %v3311, %v3646
      %v3881 = vmax.f32 %v3314, %v3652
      %v3882 = vmax.f32 %v3317, %v3659
      %v3883 = vmax.f32 %v3320, %v3665
      %v3884 = vmax.f32 %v3323, %v3672
      %v3885 = vmax.f32 %v3326, %v3678
      %v3886 = vmax.f32 %v3329, %v3685
      %v3887 = vmax.f32 %v3332, %v3691
      %v3888 = vmax.f32 %v3335, %v3698
      %v3889 = vmax.f32 %v3338, %v3704
      %v3890 = vmax.f32 %v3341, %v3711
      %v3891 = vmax.f32 %v3344, %v3717
      %v3892 = vmax.f32 %v3347, %v3724
      %v3893 = vmax.f32 %v3350, %v3730
      %v3894 = vmax.f32 %v3353, %v3737
      %v3895 = vmax.f32 %v3356, %v3743
      %v3896 = vmax.f32 %v3359, %v3750
      %v3897 = vmax.f32 %v3362, %v3756
      %v3898 = vmax.f32 %v3365, %v3763
      %v3899 = vmax.f32 %v3368, %v3769
      %v3900 = vmax.f32 %v3371, %v3776
      %v3901 = vmax.f32 %v3374, %v3782
      %v3902 = vmax.f32 %v3377, %v3789
      %v3903 = vmax.f32 %v3380, %v3795
      %v3904 = vmax.f32 %v3383, %v3802
      %v3905 = vmax.f32 %v3386, %v3808
      %v3906 = vmax.f32 %v3389, %v3815
      %v3907 = vmax.f32 %v3392, %v3821
      %v3908 = vmax.f32 %v3395, %v3828
      %v3909 = vmax.f32 %v3398, %v3834
      %v3910 = vmax.f32 %v3401, %v3841
      %v3911 = vmax.f32 %v3404, %v3847
      %3944 = vset.pattern.permute.xlu0 0
      %3945 = vperm.xlu0 %3944, %v3880
      %v3946 = vpop.permute.xlu0 %3945
      %3947 = vset.pattern.permute.xlu0 0
      %3948 = vperm.xlu0 %3947, %v3881
      %v3949 = vpop.permute.xlu0 %3948
      %3950 = vset.pattern.permute.xlu0 0
      %3951 = vperm.xlu0 %3950, %v3882
      %v3952 = vpop.permute.xlu0 %3951
      %3953 = vset.pattern.permute.xlu0 0
      %3954 = vperm.xlu0 %3953, %v3883
      %v3955 = vpop.permute.xlu0 %3954
      %3956 = vset.pattern.permute.xlu0 0
      %3957 = vperm.xlu0 %3956, %v3884
      %v3958 = vpop.permute.xlu0 %3957
      %3959 = vset.pattern.permute.xlu0 0
      %3960 = vperm.xlu0 %3959, %v3885
      %v3961 = vpop.permute.xlu0 %3960
      %3962 = vset.pattern.permute.xlu0 0
      %3963 = vperm.xlu0 %3962, %v3886
      %v3964 = vpop.permute.xlu0 %3963
      %3965 = vset.pattern.permute.xlu0 0
      %3966 = vperm.xlu0 %3965, %v3887
      %v3967 = vpop.permute.xlu0 %3966
      %3968 = vset.pattern.permute.xlu0 0
      %3969 = vperm.xlu0 %3968, %v3888
      %v3970 = vpop.permute.xlu0 %3969
      %3971 = vset.pattern.permute.xlu0 0
      %3972 = vperm.xlu0 %3971, %v3889
      %v3973 = vpop.permute.xlu0 %3972
      %3974 = vset.pattern.permute.xlu0 0
      %3975 = vperm.xlu0 %3974, %v3890
      %v3976 = vpop.permute.xlu0 %3975
      %3977 = vset.pattern.permute.xlu0 0
      %3978 = vperm.xlu0 %3977, %v3891
      %v3979 = vpop.permute.xlu0 %3978
      %3980 = vset.pattern.permute.xlu0 0
      %3981 = vperm.xlu0 %3980, %v3892
      %v3982 = vpop.permute.xlu0 %3981
      %3983 = vset.pattern.permute.xlu0 0
      %3984 = vperm.xlu0 %3983, %v3893
      %v3985 = vpop.permute.xlu0 %3984
      %3986 = vset.pattern.permute.xlu0 0
      %3987 = vperm.xlu0 %3986, %v3894
      %v3988 = vpop.permute.xlu0 %3987
      %3989 = vset.pattern.permute.xlu0 0
      %3990 = vperm.xlu0 %3989, %v3895
      %v3991 = vpop.permute.xlu0 %3990
      %3992 = vset.pattern.permute.xlu0 0
      %3993 = vperm.xlu0 %3992, %v3896
      %v3994 = vpop.permute.xlu0 %3993
      %3995 = vset.pattern.permute.xlu0 0
      %3996 = vperm.xlu0 %3995, %v3897
      %v3997 = vpop.permute.xlu0 %3996
      %3998 = vset.pattern.permute.xlu0 0
      %3999 = vperm.xlu0 %3998, %v3898
      %v4000 = vpop.permute.xlu0 %3999
      %4001 = vset.pattern.permute.xlu0 0
      %4002 = vperm.xlu0 %4001, %v3899
      %v4003 = vpop.permute.xlu0 %4002
      %4004 = vset.pattern.permute.xlu0 0
      %4005 = vperm.xlu0 %4004, %v3900
      %v4006 = vpop.permute.xlu0 %4005
      %4007 = vset.pattern.permute.xlu0 0
      %4008 = vperm.xlu0 %4007, %v3901
      %v4009 = vpop.permute.xlu0 %4008
      %4010 = vset.pattern.permute.xlu0 0
      %4011 = vperm.xlu0 %4010, %v3902
      %v4012 = vpop.permute.xlu0 %4011
      %4013 = vset.pattern.permute.xlu0 0
      %4014 = vperm.xlu0 %4013, %v3903
      %v4015 = vpop.permute.xlu0 %4014
      %4016 = vset.pattern.permute.xlu0 0
      %4017 = vperm.xlu0 %4016, %v3904
      %v4018 = vpop.permute.xlu0 %4017
      %4019 = vset.pattern.permute.xlu0 0
      %4020 = vperm.xlu0 %4019, %v3905
      %v4021 = vpop.permute.xlu0 %4020
      %4022 = vset.pattern.permute.xlu0 0
      %4023 = vperm.xlu0 %4022, %v3906
      %v4024 = vpop.permute.xlu0 %4023
      %4025 = vset.pattern.permute.xlu0 0
      %4026 = vperm.xlu0 %4025, %v3907
      %v4027 = vpop.permute.xlu0 %4026
      %4028 = vset.pattern.permute.xlu0 0
      %4029 = vperm.xlu0 %4028, %v3908
      %v4030 = vpop.permute.xlu0 %4029
      %4031 = vset.pattern.permute.xlu0 0
      %4032 = vperm.xlu0 %4031, %v3909
      %v4033 = vpop.permute.xlu0 %4032
      %4034 = vset.pattern.permute.xlu0 0
      %4035 = vperm.xlu0 %4034, %v3910
      %v4036 = vpop.permute.xlu0 %4035
      %4037 = vset.pattern.permute.xlu0 0
      %4038 = vperm.xlu0 %4037, %v3911
      %v4039 = vpop.permute.xlu0 %4038
      %v4040 = vperm.slane %v3946, %v3269
      %v4041 = vperm.slane %v3949, %v3534
      %v4042 = vsel %vm3536, %v4041, %v4040
      %v4043 = vperm.slane %v3952, %v3269
      %v4044 = vperm.slane %v3955, %v3534
      %v4045 = vsel %vm3536, %v4044, %v4043
      %v4046 = vperm.slane %v3958, %v3269
      %v4047 = vperm.slane %v3961, %v3534
      %v4048 = vsel %vm3536, %v4047, %v4046
      %v4049 = vperm.slane %v3964, %v3269
      %v4050 = vperm.slane %v3967, %v3534
      %v4051 = vsel %vm3536, %v4050, %v4049
      %v4052 = vperm.slane %v3970, %v3269
      %v4053 = vperm.slane %v3973, %v3534
      %v4054 = vsel %vm3536, %v4053, %v4052
      %v4055 = vperm.slane %v3976, %v3269
      %v4056 = vperm.slane %v3979, %v3534
      %v4057 = vsel %vm3536, %v4056, %v4055
      %v4058 = vperm.slane %v3982, %v3269
      %v4059 = vperm.slane %v3985, %v3534
      %v4060 = vsel %vm3536, %v4059, %v4058
      %v4061 = vperm.slane %v3988, %v3269
      %v4062 = vperm.slane %v3991, %v3534
      %v4063 = vsel %vm3536, %v4062, %v4061
      %v4064 = vperm.slane %v3994, %v3269
      %v4065 = vperm.slane %v3997, %v3534
      %v4066 = vsel %vm3536, %v4065, %v4064
      %v4067 = vperm.slane %v4000, %v3269
      %v4068 = vperm.slane %v4003, %v3534
      %v4069 = vsel %vm3536, %v4068, %v4067
      %v4070 = vperm.slane %v4006, %v3269
      %v4071 = vperm.slane %v4009, %v3534
      %v4072 = vsel %vm3536, %v4071, %v4070
      %v4073 = vperm.slane %v4012, %v3269
      %v4074 = vperm.slane %v4015, %v3534
      %v4075 = vsel %vm3536, %v4074, %v4073
      %v4076 = vperm.slane %v4018, %v3269
      %v4077 = vperm.slane %v4021, %v3534
      %v4078 = vsel %vm3536, %v4077, %v4076
      %v4079 = vperm.slane %v4024, %v3269
      %v4080 = vperm.slane %v4027, %v3534
      %v4081 = vsel %vm3536, %v4080, %v4079
      %v4082 = vperm.slane %v4030, %v3269
      %v4083 = vperm.slane %v4033, %v3534
      %v4084 = vsel %vm3536, %v4083, %v4082
      %v4085 = vperm.slane %v4036, %v3269
      %v4086 = vperm.slane %v4039, %v3534
      %v4087 = vsel %vm3536, %v4086, %v4085
      %v4088 = vsel %vm3583, %v4045, %v4042
      %v4089 = vsel %vm3585, %v4048, %v4088
      %v4090 = vsel %vm3587, %v4051, %v4089
      %v4091 = vsel %vm3589, %v4054, %v4090
      %v4092 = vsel %vm3591, %v4057, %v4091
      %v4093 = vsel %vm3593, %v4060, %v4092
      %v4094 = vsel %vm3595, %v4063, %v4093
      %v4095 = vsel %vm3583, %v4069, %v4066
      %v4096 = vsel %vm3585, %v4072, %v4095
      %v4097 = vsel %vm3587, %v4075, %v4096
      %v4098 = vsel %vm3589, %v4078, %v4097
      %v4099 = vsel %vm3591, %v4081, %v4098
      %v4100 = vsel %vm3593, %v4084, %v4099
      %v4101 = vsel %vm3595, %v4087, %v4100
      %4104 = vxpose.xlu0.b32.start [1/16] %v4094, 128
      %4105 = vxpose.xlu0.b32.cont [2/16] %v4101, 128
      %4106 = vxpose.xlu0.b32.cont [3/16] 0.0, 128
      %4107 = vxpose.xlu0.b32.cont [4/16] 0.0, 128
      %4108 = vxpose.xlu0.b32.cont [5/16] 0.0, 128
      %4109 = vxpose.xlu0.b32.cont [6/16] 0.0, 128
      %4110 = vxpose.xlu0.b32.cont [7/16] 0.0, 128
      %4111 = vxpose.xlu0.b32.cont [8/16] 0.0, 128
      %4112 = vxpose.xlu0.b32.cont [9/16] 0.0, 128
      %4113 = vxpose.xlu0.b32.cont [10/16] 0.0, 128
      %4114 = vxpose.xlu0.b32.cont [11/16] 0.0, 128
      %4115 = vxpose.xlu0.b32.cont [12/16] 0.0, 128
      %4116 = vxpose.xlu0.b32.cont [13/16] 0.0, 128
      %4117 = vxpose.xlu0.b32.cont [14/16] 0.0, 128
      %4118 = vxpose.xlu0.b32.cont [15/16] 0.0, 128
      %4119 = vxpose.xlu0.b32.end [16/16] 0.0, 128
      %v4120 = vpop.trf.xlu0
      %v4121 = vpop.trf.xlu0
      %v4122 = vpop.trf.xlu0
      %v4123 = vpop.trf.xlu0
      %v4124 = vpop.trf.xlu0
      %v4125 = vpop.trf.xlu0
      %v4126 = vpop.trf.xlu0
      %v4127 = vpop.trf.xlu0
      %v4128 = vpop.trf.xlu0
      %v4129 = vpop.trf.xlu0
      %v4130 = vpop.trf.xlu0
      %v4131 = vpop.trf.xlu0
      %v4132 = vpop.trf.xlu0
      %v4133 = vpop.trf.xlu0
      %v4134 = vpop.trf.xlu0
      %v4135 = vpop.trf.xlu0
      %v4168 = vsub.f32 %v2175, %v3946
      %v4169 = vsub.f32 %v2178, %v3949
      %v4170 = vsub.f32 %v2210, %v3952
      %v4171 = vsub.f32 %v2213, %v3955
      %v4172 = vsub.f32 %v2245, %v3958
      %v4173 = vsub.f32 %v2248, %v3961
      %v4174 = vsub.f32 %v2280, %v3964
      %v4175 = vsub.f32 %v2283, %v3967
      %v4176 = vsub.f32 %v2315, %v3970
      %v4177 = vsub.f32 %v2318, %v3973
      %v4178 = vsub.f32 %v2350, %v3976
      %v4179 = vsub.f32 %v2353, %v3979
      %v4180 = vsub.f32 %v2385, %v3982
      %v4181 = vsub.f32 %v2388, %v3985
      %v4182 = vsub.f32 %v2420, %v3988
      %v4183 = vsub.f32 %v2423, %v3991
      %v4184 = vsub.f32 %v2455, %v3994
      %v4185 = vsub.f32 %v2458, %v3997
      %v4186 = vsub.f32 %v2490, %v4000
      %v4187 = vsub.f32 %v2493, %v4003
      %v4188 = vsub.f32 %v2525, %v4006
      %v4189 = vsub.f32 %v2528, %v4009
      %v4190 = vsub.f32 %v2560, %v4012
      %v4191 = vsub.f32 %v2563, %v4015
      %v4192 = vsub.f32 %v2595, %v4018
      %v4193 = vsub.f32 %v2598, %v4021
      %v4194 = vsub.f32 %v2630, %v4024
      %v4195 = vsub.f32 %v2633, %v4027
      %v4196 = vsub.f32 %v2665, %v4030
      %v4197 = vsub.f32 %v2668, %v4033
      %v4198 = vsub.f32 %v2700, %v4036
      %v4199 = vsub.f32 %v2703, %v4039
      %v4200 = vmul.f32 %v4168, 1.442695
      %v4201 = vpow.pop %v4200
      %v4202 = vmul.f32 %v4169, 1.442695
      %v4203 = vpow.pop %v4202
      %v4204 = vmul.f32 %v4170, 1.442695
      %v4205 = vpow.pop %v4204
      %v4206 = vmul.f32 %v4171, 1.442695
      %v4207 = vpow.pop %v4206
      %v4208 = vmul.f32 %v4172, 1.442695
      %v4209 = vpow.pop %v4208
      %v4210 = vmul.f32 %v4173, 1.442695
      %v4211 = vpow.pop %v4210
      %v4212 = vmul.f32 %v4174, 1.442695
      %v4213 = vpow.pop %v4212
      %v4214 = vmul.f32 %v4175, 1.442695
      %v4215 = vpow.pop %v4214
      %v4216 = vmul.f32 %v4176, 1.442695
      %v4217 = vpow.pop %v4216
      %v4218 = vmul.f32 %v4177, 1.442695
      %v4219 = vpow.pop %v4218
      %v4220 = vmul.f32 %v4178, 1.442695
      %v4221 = vpow.pop %v4220
      %v4222 = vmul.f32 %v4179, 1.442695
      %v4223 = vpow.pop %v4222
      %v4224 = vmul.f32 %v4180, 1.442695
      %v4225 = vpow.pop %v4224
      %v4226 = vmul.f32 %v4181, 1.442695
      %v4227 = vpow.pop %v4226
      %v4228 = vmul.f32 %v4182, 1.442695
      %v4229 = vpow.pop %v4228
      %v4230 = vmul.f32 %v4183, 1.442695
      %v4231 = vpow.pop %v4230
      %v4232 = vmul.f32 %v4184, 1.442695
      %v4233 = vpow.pop %v4232
      %v4234 = vmul.f32 %v4185, 1.442695
      %v4235 = vpow.pop %v4234
      %v4236 = vmul.f32 %v4186, 1.442695
      %v4237 = vpow.pop %v4236
      %v4238 = vmul.f32 %v4187, 1.442695
      %v4239 = vpow.pop %v4238
      %v4240 = vmul.f32 %v4188, 1.442695
      %v4241 = vpow.pop %v4240
      %v4242 = vmul.f32 %v4189, 1.442695
      %v4243 = vpow.pop %v4242
      %v4244 = vmul.f32 %v4190, 1.442695
      %v4245 = vpow.pop %v4244
      %v4246 = vmul.f32 %v4191, 1.442695
      %v4247 = vpow.pop %v4246
      %v4248 = vmul.f32 %v4192, 1.442695
      %v4249 = vpow.pop %v4248
      %v4250 = vmul.f32 %v4193, 1.442695
      %v4251 = vpow.pop %v4250
      %v4252 = vmul.f32 %v4194, 1.442695
      %v4253 = vpow.pop %v4252
      %v4254 = vmul.f32 %v4195, 1.442695
      %v4255 = vpow.pop %v4254
      %v4256 = vmul.f32 %v4196, 1.442695
      %v4257 = vpow.pop %v4256
      %v4258 = vmul.f32 %v4197, 1.442695
      %v4259 = vpow.pop %v4258
      %v4260 = vmul.f32 %v4198, 1.442695
      %v4261 = vpow.pop %v4260
      %v4262 = vmul.f32 %v4199, 1.442695
      %v4263 = vpow.pop %v4262
      %v4264 = vperm.slane %v4120, 0
      %v4265 = vlaneseq
      %v4266 = vshrl.u32 %v4265, 7
      %4268 = vset.pattern.permute.xlu0 %v4266
      %4269 = vperm.xlu0 %4268, %v4264
      %v4270 = vpop.permute.xlu0 %4269
      %v4271 = vlaneseq
      %v4272 = vshrl.u32 %v4271, 7
      %v4273 = vadd.s32 %v4272, 8
      %4274 = vset.pattern.permute.xlu0 %v4273
      %4275 = vperm.xlu0 %4274, %v4264
      %v4276 = vpop.permute.xlu0 %4275
      %v4277 = vperm.slane %v4120, 1
      %v4278 = vlaneseq
      %v4279 = vshrl.u32 %v4278, 7
      %4281 = vset.pattern.permute.xlu0 %v4279
      %4282 = vperm.xlu0 %4281, %v4277
      %v4283 = vpop.permute.xlu0 %4282
      %v4284 = vlaneseq
      %v4285 = vshrl.u32 %v4284, 7
      %v4286 = vadd.s32 %v4285, 8
      %4287 = vset.pattern.permute.xlu0 %v4286
      %4288 = vperm.xlu0 %4287, %v4277
      %v4289 = vpop.permute.xlu0 %4288
      %v4290 = vperm.slane %v4120, 2
      %v4291 = vlaneseq
      %v4292 = vshrl.u32 %v4291, 7
      %4294 = vset.pattern.permute.xlu0 %v4292
      %4295 = vperm.xlu0 %4294, %v4290
      %v4296 = vpop.permute.xlu0 %4295
      %v4297 = vlaneseq
      %v4298 = vshrl.u32 %v4297, 7
      %v4299 = vadd.s32 %v4298, 8
      %4300 = vset.pattern.permute.xlu0 %v4299
      %4301 = vperm.xlu0 %4300, %v4290
      %v4302 = vpop.permute.xlu0 %4301
      %v4303 = vperm.slane %v4120, 3
      %v4304 = vlaneseq
      %v4305 = vshrl.u32 %v4304, 7
      %4307 = vset.pattern.permute.xlu0 %v4305
      %4308 = vperm.xlu0 %4307, %v4303
      %v4309 = vpop.permute.xlu0 %4308
      %v4310 = vlaneseq
      %v4311 = vshrl.u32 %v4310, 7
      %v4312 = vadd.s32 %v4311, 8
      %4313 = vset.pattern.permute.xlu0 %v4312
      %4314 = vperm.xlu0 %4313, %v4303
      %v4315 = vpop.permute.xlu0 %4314
      %v4316 = vperm.slane %v4120, 4
      %v4317 = vlaneseq
      %v4318 = vshrl.u32 %v4317, 7
      %4320 = vset.pattern.permute.xlu0 %v4318
      %4321 = vperm.xlu0 %4320, %v4316
      %v4322 = vpop.permute.xlu0 %4321
      %v4323 = vlaneseq
      %v4324 = vshrl.u32 %v4323, 7
      %v4325 = vadd.s32 %v4324, 8
      %4326 = vset.pattern.permute.xlu0 %v4325
      %4327 = vperm.xlu0 %4326, %v4316
      %v4328 = vpop.permute.xlu0 %4327
      %v4329 = vperm.slane %v4120, 5
      %v4330 = vlaneseq
      %v4331 = vshrl.u32 %v4330, 7
      %4333 = vset.pattern.permute.xlu0 %v4331
      %4334 = vperm.xlu0 %4333, %v4329
      %v4335 = vpop.permute.xlu0 %4334
      %v4336 = vlaneseq
      %v4337 = vshrl.u32 %v4336, 7
      %v4338 = vadd.s32 %v4337, 8
      %4339 = vset.pattern.permute.xlu0 %v4338
      %4340 = vperm.xlu0 %4339, %v4329
      %v4341 = vpop.permute.xlu0 %4340
      %v4342 = vperm.slane %v4120, 6
      %v4343 = vlaneseq
      %v4344 = vshrl.u32 %v4343, 7
      %4346 = vset.pattern.permute.xlu0 %v4344
      %4347 = vperm.xlu0 %4346, %v4342
      %v4348 = vpop.permute.xlu0 %4347
      %v4349 = vlaneseq
      %v4350 = vshrl.u32 %v4349, 7
      %v4351 = vadd.s32 %v4350, 8
      %4352 = vset.pattern.permute.xlu0 %v4351
      %4353 = vperm.xlu0 %4352, %v4342
      %v4354 = vpop.permute.xlu0 %4353
      %v4355 = vperm.slane %v4120, 7
      %v4356 = vlaneseq
      %v4357 = vshrl.u32 %v4356, 7
      %4359 = vset.pattern.permute.xlu0 %v4357
      %4360 = vperm.xlu0 %4359, %v4355
      %v4361 = vpop.permute.xlu0 %4360
      %v4362 = vlaneseq
      %v4363 = vshrl.u32 %v4362, 7
      %v4364 = vadd.s32 %v4363, 8
      %4365 = vset.pattern.permute.xlu0 %v4364
      %4366 = vperm.xlu0 %4365, %v4355
      %v4367 = vpop.permute.xlu0 %4366
      %v4368 = vperm.slane %v4121, 0
      %v4369 = vlaneseq
      %v4370 = vshrl.u32 %v4369, 7
      %4372 = vset.pattern.permute.xlu0 %v4370
      %4373 = vperm.xlu0 %4372, %v4368
      %v4374 = vpop.permute.xlu0 %4373
      %v4375 = vlaneseq
      %v4376 = vshrl.u32 %v4375, 7
      %v4377 = vadd.s32 %v4376, 8
      %4378 = vset.pattern.permute.xlu0 %v4377
      %4379 = vperm.xlu0 %4378, %v4368
      %v4380 = vpop.permute.xlu0 %4379
      %v4381 = vperm.slane %v4121, 1
      %v4382 = vlaneseq
      %v4383 = vshrl.u32 %v4382, 7
      %4385 = vset.pattern.permute.xlu0 %v4383
      %4386 = vperm.xlu0 %4385, %v4381
      %v4387 = vpop.permute.xlu0 %4386
      %v4388 = vlaneseq
      %v4389 = vshrl.u32 %v4388, 7
      %v4390 = vadd.s32 %v4389, 8
      %4391 = vset.pattern.permute.xlu0 %v4390
      %4392 = vperm.xlu0 %4391, %v4381
      %v4393 = vpop.permute.xlu0 %4392
      %v4394 = vperm.slane %v4121, 2
      %v4395 = vlaneseq
      %v4396 = vshrl.u32 %v4395, 7
      %4398 = vset.pattern.permute.xlu0 %v4396
      %4399 = vperm.xlu0 %4398, %v4394
      %v4400 = vpop.permute.xlu0 %4399
      %v4401 = vlaneseq
      %v4402 = vshrl.u32 %v4401, 7
      %v4403 = vadd.s32 %v4402, 8
      %4404 = vset.pattern.permute.xlu0 %v4403
      %4405 = vperm.xlu0 %4404, %v4394
      %v4406 = vpop.permute.xlu0 %4405
      %v4407 = vperm.slane %v4121, 3
      %v4408 = vlaneseq
      %v4409 = vshrl.u32 %v4408, 7
      %4411 = vset.pattern.permute.xlu0 %v4409
      %4412 = vperm.xlu0 %4411, %v4407
      %v4413 = vpop.permute.xlu0 %4412
      %v4414 = vlaneseq
      %v4415 = vshrl.u32 %v4414, 7
      %v4416 = vadd.s32 %v4415, 8
      %4417 = vset.pattern.permute.xlu0 %v4416
      %4418 = vperm.xlu0 %4417, %v4407
      %v4419 = vpop.permute.xlu0 %4418
      %v4420 = vperm.slane %v4121, 4
      %v4421 = vlaneseq
      %v4422 = vshrl.u32 %v4421, 7
      %4424 = vset.pattern.permute.xlu0 %v4422
      %4425 = vperm.xlu0 %4424, %v4420
      %v4426 = vpop.permute.xlu0 %4425
      %v4427 = vlaneseq
      %v4428 = vshrl.u32 %v4427, 7
      %v4429 = vadd.s32 %v4428, 8
      %4430 = vset.pattern.permute.xlu0 %v4429
      %4431 = vperm.xlu0 %4430, %v4420
      %v4432 = vpop.permute.xlu0 %4431
      %v4433 = vperm.slane %v4121, 5
      %v4434 = vlaneseq
      %v4435 = vshrl.u32 %v4434, 7
      %4437 = vset.pattern.permute.xlu0 %v4435
      %4438 = vperm.xlu0 %4437, %v4433
      %v4439 = vpop.permute.xlu0 %4438
      %v4440 = vlaneseq
      %v4441 = vshrl.u32 %v4440, 7
      %v4442 = vadd.s32 %v4441, 8
      %4443 = vset.pattern.permute.xlu0 %v4442
      %4444 = vperm.xlu0 %4443, %v4433
      %v4445 = vpop.permute.xlu0 %4444
      %v4446 = vperm.slane %v4121, 6
      %v4447 = vlaneseq
      %v4448 = vshrl.u32 %v4447, 7
      %4450 = vset.pattern.permute.xlu0 %v4448
      %4451 = vperm.xlu0 %4450, %v4446
      %v4452 = vpop.permute.xlu0 %4451
      %v4453 = vlaneseq
      %v4454 = vshrl.u32 %v4453, 7
      %v4455 = vadd.s32 %v4454, 8
      %4456 = vset.pattern.permute.xlu0 %v4455
      %4457 = vperm.xlu0 %4456, %v4446
      %v4458 = vpop.permute.xlu0 %4457
      %v4459 = vperm.slane %v4121, 7
      %v4460 = vlaneseq
      %v4461 = vshrl.u32 %v4460, 7
      %4463 = vset.pattern.permute.xlu0 %v4461
      %4464 = vperm.xlu0 %4463, %v4459
      %v4465 = vpop.permute.xlu0 %4464
      %v4466 = vlaneseq
      %v4467 = vshrl.u32 %v4466, 7
      %v4468 = vadd.s32 %v4467, 8
      %4469 = vset.pattern.permute.xlu0 %v4468
      %4470 = vperm.xlu0 %4469, %v4459
      %v4471 = vpop.permute.xlu0 %4470
      %v4472 = vsub.f32 %v3276, %v4270
      %v4473 = vsub.f32 %v3277, %v4276
      %v4474 = vsub.f32 %v3278, %v4283
      %v4475 = vsub.f32 %v3279, %v4289
      %v4476 = vsub.f32 %v3280, %v4296
      %v4477 = vsub.f32 %v3281, %v4302
      %v4478 = vsub.f32 %v3282, %v4309
      %v4479 = vsub.f32 %v3283, %v4315
      %v4480 = vsub.f32 %v3284, %v4322
      %v4481 = vsub.f32 %v3285, %v4328
      %v4482 = vsub.f32 %v3286, %v4335
      %v4483 = vsub.f32 %v3287, %v4341
      %v4484 = vsub.f32 %v3288, %v4348
      %v4485 = vsub.f32 %v3289, %v4354
      %v4486 = vsub.f32 %v3290, %v4361
      %v4487 = vsub.f32 %v3291, %v4367
      %v4488 = vsub.f32 %v3292, %v4374
      %v4489 = vsub.f32 %v3293, %v4380
      %v4490 = vsub.f32 %v3294, %v4387
      %v4491 = vsub.f32 %v3295, %v4393
      %v4492 = vsub.f32 %v3296, %v4400
      %v4493 = vsub.f32 %v3297, %v4406
      %v4494 = vsub.f32 %v3298, %v4413
      %v4495 = vsub.f32 %v3299, %v4419
      %v4496 = vsub.f32 %v3300, %v4426
      %v4497 = vsub.f32 %v3301, %v4432
      %v4498 = vsub.f32 %v3302, %v4439
      %v4499 = vsub.f32 %v3303, %v4445
      %v4500 = vsub.f32 %v3304, %v4452
      %v4501 = vsub.f32 %v3305, %v4458
      %v4502 = vsub.f32 %v3306, %v4465
      %v4503 = vsub.f32 %v3307, %v4471
      %v4504 = vmul.f32 %v4472, 1.442695
      %v4505 = vpow.pop %v4504
      %v4506 = vmul.f32 %v4473, 1.442695
      %v4507 = vpow.pop %v4506
      %v4508 = vmul.f32 %v4474, 1.442695
      %v4509 = vpow.pop %v4508
      %v4510 = vmul.f32 %v4475, 1.442695
      %v4511 = vpow.pop %v4510
      %v4512 = vmul.f32 %v4476, 1.442695
      %v4513 = vpow.pop %v4512
      %v4514 = vmul.f32 %v4477, 1.442695
      %v4515 = vpow.pop %v4514
      %v4516 = vmul.f32 %v4478, 1.442695
      %v4517 = vpow.pop %v4516
      %v4518 = vmul.f32 %v4479, 1.442695
      %v4519 = vpow.pop %v4518
      %v4520 = vmul.f32 %v4480, 1.442695
      %v4521 = vpow.pop %v4520
      %v4522 = vmul.f32 %v4481, 1.442695
      %v4523 = vpow.pop %v4522
      %v4524 = vmul.f32 %v4482, 1.442695
      %v4525 = vpow.pop %v4524
      %v4526 = vmul.f32 %v4483, 1.442695
      %v4527 = vpow.pop %v4526
      %v4528 = vmul.f32 %v4484, 1.442695
      %v4529 = vpow.pop %v4528
      %v4530 = vmul.f32 %v4485, 1.442695
      %v4531 = vpow.pop %v4530
      %v4532 = vmul.f32 %v4486, 1.442695
      %v4533 = vpow.pop %v4532
      %v4534 = vmul.f32 %v4487, 1.442695
      %v4535 = vpow.pop %v4534
      %v4536 = vmul.f32 %v4488, 1.442695
      %v4537 = vpow.pop %v4536
      %v4538 = vmul.f32 %v4489, 1.442695
      %v4539 = vpow.pop %v4538
      %v4540 = vmul.f32 %v4490, 1.442695
      %v4541 = vpow.pop %v4540
      %v4542 = vmul.f32 %v4491, 1.442695
      %v4543 = vpow.pop %v4542
      %v4544 = vmul.f32 %v4492, 1.442695
      %v4545 = vpow.pop %v4544
      %v4546 = vmul.f32 %v4493, 1.442695
      %v4547 = vpow.pop %v4546
      %v4548 = vmul.f32 %v4494, 1.442695
      %v4549 = vpow.pop %v4548
      %v4550 = vmul.f32 %v4495, 1.442695
      %v4551 = vpow.pop %v4550
      %v4552 = vmul.f32 %v4496, 1.442695
      %v4553 = vpow.pop %v4552
      %v4554 = vmul.f32 %v4497, 1.442695
      %v4555 = vpow.pop %v4554
      %v4556 = vmul.f32 %v4498, 1.442695
      %v4557 = vpow.pop %v4556
      %v4558 = vmul.f32 %v4499, 1.442695
      %v4559 = vpow.pop %v4558
      %v4560 = vmul.f32 %v4500, 1.442695
      %v4561 = vpow.pop %v4560
      %v4562 = vmul.f32 %v4501, 1.442695
      %v4563 = vpow.pop %v4562
      %v4564 = vmul.f32 %v4502, 1.442695
      %v4565 = vpow.pop %v4564
      %v4566 = vmul.f32 %v4503, 1.442695
      %v4567 = vpow.pop %v4566
      %v4568 = vsel %vm3308, %v4201, 0.0
      %4569 = vadd.xlane.f32.xlu0 %v4568
      %v4570 = vpop.xlane.xlu0 %4569
      %v4571 = vsel %vm3308, %v4203, 0.0
      %4572 = vadd.xlane.f32.xlu0 %v4571
      %v4573 = vpop.xlane.xlu0 %4572
      %v4574 = vsel %vm3308, %v4205, 0.0
      %4575 = vadd.xlane.f32.xlu0 %v4574
      %v4576 = vpop.xlane.xlu0 %4575
      %v4577 = vsel %vm3308, %v4207, 0.0
      %4578 = vadd.xlane.f32.xlu0 %v4577
      %v4579 = vpop.xlane.xlu0 %4578
      %v4580 = vsel %vm3308, %v4209, 0.0
      %4581 = vadd.xlane.f32.xlu0 %v4580
      %v4582 = vpop.xlane.xlu0 %4581
      %v4583 = vsel %vm3308, %v4211, 0.0
      %4584 = vadd.xlane.f32.xlu0 %v4583
      %v4585 = vpop.xlane.xlu0 %4584
      %v4586 = vsel %vm3308, %v4213, 0.0
      %4587 = vadd.xlane.f32.xlu0 %v4586
      %v4588 = vpop.xlane.xlu0 %4587
      %v4589 = vsel %vm3308, %v4215, 0.0
      %4590 = vadd.xlane.f32.xlu0 %v4589
      %v4591 = vpop.xlane.xlu0 %4590
      %v4592 = vsel %vm3308, %v4217, 0.0
      %4593 = vadd.xlane.f32.xlu0 %v4592
      %v4594 = vpop.xlane.xlu0 %4593
      %v4595 = vsel %vm3308, %v4219, 0.0
      %4596 = vadd.xlane.f32.xlu0 %v4595
      %v4597 = vpop.xlane.xlu0 %4596
      %v4598 = vsel %vm3308, %v4221, 0.0
      %4599 = vadd.xlane.f32.xlu0 %v4598
      %v4600 = vpop.xlane.xlu0 %4599
      %v4601 = vsel %vm3308, %v4223, 0.0
      %4602 = vadd.xlane.f32.xlu0 %v4601
      %v4603 = vpop.xlane.xlu0 %4602
      %v4604 = vsel %vm3308, %v4225, 0.0
      %4605 = vadd.xlane.f32.xlu0 %v4604
      %v4606 = vpop.xlane.xlu0 %4605
      %v4607 = vsel %vm3308, %v4227, 0.0
      %4608 = vadd.xlane.f32.xlu0 %v4607
      %v4609 = vpop.xlane.xlu0 %4608
      %v4610 = vsel %vm3308, %v4229, 0.0
      %4611 = vadd.xlane.f32.xlu0 %v4610
      %v4612 = vpop.xlane.xlu0 %4611
      %v4613 = vsel %vm3308, %v4231, 0.0
      %4614 = vadd.xlane.f32.xlu0 %v4613
      %v4615 = vpop.xlane.xlu0 %4614
      %v4616 = vsel %vm3308, %v4233, 0.0
      %4617 = vadd.xlane.f32.xlu0 %v4616
      %v4618 = vpop.xlane.xlu0 %4617
      %v4619 = vsel %vm3308, %v4235, 0.0
      %4620 = vadd.xlane.f32.xlu0 %v4619
      %v4621 = vpop.xlane.xlu0 %4620
      %v4622 = vsel %vm3308, %v4237, 0.0
      %4623 = vadd.xlane.f32.xlu0 %v4622
      %v4624 = vpop.xlane.xlu0 %4623
      %v4625 = vsel %vm3308, %v4239, 0.0
      %4626 = vadd.xlane.f32.xlu0 %v4625
      %v4627 = vpop.xlane.xlu0 %4626
      %v4628 = vsel %vm3308, %v4241, 0.0
      %4629 = vadd.xlane.f32.xlu0 %v4628
      %v4630 = vpop.xlane.xlu0 %4629
      %v4631 = vsel %vm3308, %v4243, 0.0
      %4632 = vadd.xlane.f32.xlu0 %v4631
      %v4633 = vpop.xlane.xlu0 %4632
      %v4634 = vsel %vm3308, %v4245, 0.0
      %4635 = vadd.xlane.f32.xlu0 %v4634
      %v4636 = vpop.xlane.xlu0 %4635
      %v4637 = vsel %vm3308, %v4247, 0.0
      %4638 = vadd.xlane.f32.xlu0 %v4637
      %v4639 = vpop.xlane.xlu0 %4638
      %v4640 = vsel %vm3308, %v4249, 0.0
      %4641 = vadd.xlane.f32.xlu0 %v4640
      %v4642 = vpop.xlane.xlu0 %4641
      %v4643 = vsel %vm3308, %v4251, 0.0
      %4644 = vadd.xlane.f32.xlu0 %v4643
      %v4645 = vpop.xlane.xlu0 %4644
      %v4646 = vsel %vm3308, %v4253, 0.0
      %4647 = vadd.xlane.f32.xlu0 %v4646
      %v4648 = vpop.xlane.xlu0 %4647
      %v4649 = vsel %vm3308, %v4255, 0.0
      %4650 = vadd.xlane.f32.xlu0 %v4649
      %v4651 = vpop.xlane.xlu0 %4650
      %v4652 = vsel %vm3308, %v4257, 0.0
      %4653 = vadd.xlane.f32.xlu0 %v4652
      %v4654 = vpop.xlane.xlu0 %4653
      %v4655 = vsel %vm3308, %v4259, 0.0
      %4656 = vadd.xlane.f32.xlu0 %v4655
      %v4657 = vpop.xlane.xlu0 %4656
      %v4658 = vsel %vm3308, %v4261, 0.0
      %4659 = vadd.xlane.f32.xlu0 %v4658
      %v4660 = vpop.xlane.xlu0 %4659
      %v4661 = vsel %vm3308, %v4263, 0.0
      %4662 = vadd.xlane.f32.xlu0 %v4661
      %v4663 = vpop.xlane.xlu0 %4662
      %v4664 = vsel %vm3308, %v4505, 0.0
      %4665 = vadd.xlane.f32.xlu0 %v4664
      %v4666 = vpop.xlane.xlu0 %4665
      %v4667 = vsel %vm3308, %v4507, 0.0
      %4668 = vadd.xlane.f32.xlu0 %v4667
      %v4669 = vpop.xlane.xlu0 %4668
      %v4670 = vsel %vm3308, %v4509, 0.0
      %4671 = vadd.xlane.f32.xlu0 %v4670
      %v4672 = vpop.xlane.xlu0 %4671
      %v4673 = vsel %vm3308, %v4511, 0.0
      %4674 = vadd.xlane.f32.xlu0 %v4673
      %v4675 = vpop.xlane.xlu0 %4674
      %v4676 = vsel %vm3308, %v4513, 0.0
      %4677 = vadd.xlane.f32.xlu0 %v4676
      %v4678 = vpop.xlane.xlu0 %4677
      %v4679 = vsel %vm3308, %v4515, 0.0
      %4680 = vadd.xlane.f32.xlu0 %v4679
      %v4681 = vpop.xlane.xlu0 %4680
      %v4682 = vsel %vm3308, %v4517, 0.0
      %4683 = vadd.xlane.f32.xlu0 %v4682
      %v4684 = vpop.xlane.xlu0 %4683
      %v4685 = vsel %vm3308, %v4519, 0.0
      %4686 = vadd.xlane.f32.xlu0 %v4685
      %v4687 = vpop.xlane.xlu0 %4686
      %v4688 = vsel %vm3308, %v4521, 0.0
      %4689 = vadd.xlane.f32.xlu0 %v4688
      %v4690 = vpop.xlane.xlu0 %4689
      %v4691 = vsel %vm3308, %v4523, 0.0
      %4692 = vadd.xlane.f32.xlu0 %v4691
      %v4693 = vpop.xlane.xlu0 %4692
      %v4694 = vsel %vm3308, %v4525, 0.0
      %4695 = vadd.xlane.f32.xlu0 %v4694
      %v4696 = vpop.xlane.xlu0 %4695
      %v4697 = vsel %vm3308, %v4527, 0.0
      %4698 = vadd.xlane.f32.xlu0 %v4697
      %v4699 = vpop.xlane.xlu0 %4698
      %v4700 = vsel %vm3308, %v4529, 0.0
      %4701 = vadd.xlane.f32.xlu0 %v4700
      %v4702 = vpop.xlane.xlu0 %4701
      %v4703 = vsel %vm3308, %v4531, 0.0
      %4704 = vadd.xlane.f32.xlu0 %v4703
      %v4705 = vpop.xlane.xlu0 %4704
      %v4706 = vsel %vm3308, %v4533, 0.0
      %4707 = vadd.xlane.f32.xlu0 %v4706
      %v4708 = vpop.xlane.xlu0 %4707
      %v4709 = vsel %vm3308, %v4535, 0.0
      %4710 = vadd.xlane.f32.xlu0 %v4709
      %v4711 = vpop.xlane.xlu0 %4710
      %v4712 = vsel %vm3308, %v4537, 0.0
      %4713 = vadd.xlane.f32.xlu0 %v4712
      %v4714 = vpop.xlane.xlu0 %4713
      %v4715 = vsel %vm3308, %v4539, 0.0
      %4716 = vadd.xlane.f32.xlu0 %v4715
      %v4717 = vpop.xlane.xlu0 %4716
      %v4718 = vsel %vm3308, %v4541, 0.0
      %4719 = vadd.xlane.f32.xlu0 %v4718
      %v4720 = vpop.xlane.xlu0 %4719
      %v4721 = vsel %vm3308, %v4543, 0.0
      %4722 = vadd.xlane.f32.xlu0 %v4721
      %v4723 = vpop.xlane.xlu0 %4722
      %v4724 = vsel %vm3308, %v4545, 0.0
      %4725 = vadd.xlane.f32.xlu0 %v4724
      %v4726 = vpop.xlane.xlu0 %4725
      %v4727 = vsel %vm3308, %v4547, 0.0
      %4728 = vadd.xlane.f32.xlu0 %v4727
      %v4729 = vpop.xlane.xlu0 %4728
      %v4730 = vsel %vm3308, %v4549, 0.0
      %4731 = vadd.xlane.f32.xlu0 %v4730
      %v4732 = vpop.xlane.xlu0 %4731
      %v4733 = vsel %vm3308, %v4551, 0.0
      %4734 = vadd.xlane.f32.xlu0 %v4733
      %v4735 = vpop.xlane.xlu0 %4734
      %v4736 = vsel %vm3308, %v4553, 0.0
      %4737 = vadd.xlane.f32.xlu0 %v4736
      %v4738 = vpop.xlane.xlu0 %4737
      %v4739 = vsel %vm3308, %v4555, 0.0
      %4740 = vadd.xlane.f32.xlu0 %v4739
      %v4741 = vpop.xlane.xlu0 %4740
      %v4742 = vsel %vm3308, %v4557, 0.0
      %4743 = vadd.xlane.f32.xlu0 %v4742
      %v4744 = vpop.xlane.xlu0 %4743
      %v4745 = vsel %vm3308, %v4559, 0.0
      %4746 = vadd.xlane.f32.xlu0 %v4745
      %v4747 = vpop.xlane.xlu0 %4746
      %v4748 = vsel %vm3308, %v4561, 0.0
      %4749 = vadd.xlane.f32.xlu0 %v4748
      %v4750 = vpop.xlane.xlu0 %4749
      %v4751 = vsel %vm3308, %v4563, 0.0
      %4752 = vadd.xlane.f32.xlu0 %v4751
      %v4753 = vpop.xlane.xlu0 %4752
      %v4754 = vsel %vm3308, %v4565, 0.0
      %4755 = vadd.xlane.f32.xlu0 %v4754
      %v4756 = vpop.xlane.xlu0 %4755
      %v4757 = vsel %vm3308, %v4567, 0.0
      %4758 = vadd.xlane.f32.xlu0 %v4757
      %v4759 = vpop.xlane.xlu0 %4758
      %v4792 = vperm.slane %v4666, %v3269
      %v4793 = vperm.slane %v4669, %v3534
      %v4794 = vsel %vm3536, %v4793, %v4792
      %v4795 = vperm.slane %v4672, %v3269
      %v4796 = vperm.slane %v4675, %v3534
      %v4797 = vsel %vm3536, %v4796, %v4795
      %v4798 = vperm.slane %v4678, %v3269
      %v4799 = vperm.slane %v4681, %v3534
      %v4800 = vsel %vm3536, %v4799, %v4798
      %v4801 = vperm.slane %v4684, %v3269
      %v4802 = vperm.slane %v4687, %v3534
      %v4803 = vsel %vm3536, %v4802, %v4801
      %v4804 = vperm.slane %v4690, %v3269
      %v4805 = vperm.slane %v4693, %v3534
      %v4806 = vsel %vm3536, %v4805, %v4804
      %v4807 = vperm.slane %v4696, %v3269
      %v4808 = vperm.slane %v4699, %v3534
      %v4809 = vsel %vm3536, %v4808, %v4807
      %v4810 = vperm.slane %v4702, %v3269
      %v4811 = vperm.slane %v4705, %v3534
      %v4812 = vsel %vm3536, %v4811, %v4810
      %v4813 = vperm.slane %v4708, %v3269
      %v4814 = vperm.slane %v4711, %v3534
      %v4815 = vsel %vm3536, %v4814, %v4813
      %v4816 = vperm.slane %v4714, %v3269
      %v4817 = vperm.slane %v4717, %v3534
      %v4818 = vsel %vm3536, %v4817, %v4816
      %v4819 = vperm.slane %v4720, %v3269
      %v4820 = vperm.slane %v4723, %v3534
      %v4821 = vsel %vm3536, %v4820, %v4819
      %v4822 = vperm.slane %v4726, %v3269
      %v4823 = vperm.slane %v4729, %v3534
      %v4824 = vsel %vm3536, %v4823, %v4822
      %v4825 = vperm.slane %v4732, %v3269
      %v4826 = vperm.slane %v4735, %v3534
      %v4827 = vsel %vm3536, %v4826, %v4825
      %v4828 = vperm.slane %v4738, %v3269
      %v4829 = vperm.slane %v4741, %v3534
      %v4830 = vsel %vm3536, %v4829, %v4828
      %v4831 = vperm.slane %v4744, %v3269
      %v4832 = vperm.slane %v4747, %v3534
      %v4833 = vsel %vm3536, %v4832, %v4831
      %v4834 = vperm.slane %v4750, %v3269
      %v4835 = vperm.slane %v4753, %v3534
      %v4836 = vsel %vm3536, %v4835, %v4834
      %v4837 = vperm.slane %v4756, %v3269
      %v4838 = vperm.slane %v4759, %v3534
      %v4839 = vsel %vm3536, %v4838, %v4837
      %v4840 = vsel %vm3583, %v4797, %v4794
      %v4841 = vsel %vm3585, %v4800, %v4840
      %v4842 = vsel %vm3587, %v4803, %v4841
      %v4843 = vsel %vm3589, %v4806, %v4842
      %v4844 = vsel %vm3591, %v4809, %v4843
      %v4845 = vsel %vm3593, %v4812, %v4844
      %v4846 = vsel %vm3595, %v4815, %v4845
      %v4847 = vsel %vm3583, %v4821, %v4818
      %v4848 = vsel %vm3585, %v4824, %v4847
      %v4849 = vsel %vm3587, %v4827, %v4848
      %v4850 = vsel %vm3589, %v4830, %v4849
      %v4851 = vsel %vm3591, %v4833, %v4850
      %v4852 = vsel %vm3593, %v4836, %v4851
      %v4853 = vsel %vm3595, %v4839, %v4852
      %4856 = vxpose.xlu0.b32.start [1/16] %v4846, 128
      %4857 = vxpose.xlu0.b32.cont [2/16] %v4853, 128
      %4858 = vxpose.xlu0.b32.cont [3/16] 0.0, 128
      %4859 = vxpose.xlu0.b32.cont [4/16] 0.0, 128
      %4860 = vxpose.xlu0.b32.cont [5/16] 0.0, 128
      %4861 = vxpose.xlu0.b32.cont [6/16] 0.0, 128
      %4862 = vxpose.xlu0.b32.cont [7/16] 0.0, 128
      %4863 = vxpose.xlu0.b32.cont [8/16] 0.0, 128
      %4864 = vxpose.xlu0.b32.cont [9/16] 0.0, 128
      %4865 = vxpose.xlu0.b32.cont [10/16] 0.0, 128
      %4866 = vxpose.xlu0.b32.cont [11/16] 0.0, 128
      %4867 = vxpose.xlu0.b32.cont [12/16] 0.0, 128
      %4868 = vxpose.xlu0.b32.cont [13/16] 0.0, 128
      %4869 = vxpose.xlu0.b32.cont [14/16] 0.0, 128
      %4870 = vxpose.xlu0.b32.cont [15/16] 0.0, 128
      %4871 = vxpose.xlu0.b32.end [16/16] 0.0, 128
      %v4872 = vpop.trf.xlu0
      %v4873 = vpop.trf.xlu0
      %v4874 = vpop.trf.xlu0
      %v4875 = vpop.trf.xlu0
      %v4876 = vpop.trf.xlu0
      %v4877 = vpop.trf.xlu0
      %v4878 = vpop.trf.xlu0
      %v4879 = vpop.trf.xlu0
      %v4880 = vpop.trf.xlu0
      %v4881 = vpop.trf.xlu0
      %v4882 = vpop.trf.xlu0
      %v4883 = vpop.trf.xlu0
      %v4884 = vpop.trf.xlu0
      %v4885 = vpop.trf.xlu0
      %v4886 = vpop.trf.xlu0
      %v4887 = vpop.trf.xlu0
      %v4890 = vperm.slane %v4872, 0
      %v4891 = vlaneseq
      %v4892 = vshrl.u32 %v4891, 7
      %4894 = vset.pattern.permute.xlu0 %v4892
      %4895 = vperm.xlu0 %4894, %v4890
      %v4896 = vpop.permute.xlu0 %4895
      %v4897 = vlaneseq
      %v4898 = vshrl.u32 %v4897, 7
      %v4899 = vadd.s32 %v4898, 8
      %4900 = vset.pattern.permute.xlu0 %v4899
      %4901 = vperm.xlu0 %4900, %v4890
      %v4902 = vpop.permute.xlu0 %4901
      %v4903 = vperm.slane %v4872, 1
      %v4904 = vlaneseq
      %v4905 = vshrl.u32 %v4904, 7
      %4907 = vset.pattern.permute.xlu0 %v4905
      %4908 = vperm.xlu0 %4907, %v4903
      %v4909 = vpop.permute.xlu0 %4908
      %v4910 = vlaneseq
      %v4911 = vshrl.u32 %v4910, 7
      %v4912 = vadd.s32 %v4911, 8
      %4913 = vset.pattern.permute.xlu0 %v4912
      %4914 = vperm.xlu0 %4913, %v4903
      %v4915 = vpop.permute.xlu0 %4914
      %v4916 = vperm.slane %v4872, 2
      %v4917 = vlaneseq
      %v4918 = vshrl.u32 %v4917, 7
      %4920 = vset.pattern.permute.xlu0 %v4918
      %4921 = vperm.xlu0 %4920, %v4916
      %v4922 = vpop.permute.xlu0 %4921
      %v4923 = vlaneseq
      %v4924 = vshrl.u32 %v4923, 7
      %v4925 = vadd.s32 %v4924, 8
      %4926 = vset.pattern.permute.xlu0 %v4925
      %4927 = vperm.xlu0 %4926, %v4916
      %v4928 = vpop.permute.xlu0 %4927
      %v4929 = vperm.slane %v4872, 3
      %v4930 = vlaneseq
      %v4931 = vshrl.u32 %v4930, 7
      %4933 = vset.pattern.permute.xlu0 %v4931
      %4934 = vperm.xlu0 %4933, %v4929
      %v4935 = vpop.permute.xlu0 %4934
      %v4936 = vlaneseq
      %v4937 = vshrl.u32 %v4936, 7
      %v4938 = vadd.s32 %v4937, 8
      %4939 = vset.pattern.permute.xlu0 %v4938
      %4940 = vperm.xlu0 %4939, %v4929
      %v4941 = vpop.permute.xlu0 %4940
      %v4942 = vperm.slane %v4872, 4
      %v4943 = vlaneseq
      %v4944 = vshrl.u32 %v4943, 7
      %4946 = vset.pattern.permute.xlu0 %v4944
      %4947 = vperm.xlu0 %4946, %v4942
      %v4948 = vpop.permute.xlu0 %4947
      %v4949 = vlaneseq
      %v4950 = vshrl.u32 %v4949, 7
      %v4951 = vadd.s32 %v4950, 8
      %4952 = vset.pattern.permute.xlu0 %v4951
      %4953 = vperm.xlu0 %4952, %v4942
      %v4954 = vpop.permute.xlu0 %4953
      %v4955 = vperm.slane %v4872, 5
      %v4956 = vlaneseq
      %v4957 = vshrl.u32 %v4956, 7
      %4959 = vset.pattern.permute.xlu0 %v4957
      %4960 = vperm.xlu0 %4959, %v4955
      %v4961 = vpop.permute.xlu0 %4960
      %v4962 = vlaneseq
      %v4963 = vshrl.u32 %v4962, 7
      %v4964 = vadd.s32 %v4963, 8
      %4965 = vset.pattern.permute.xlu0 %v4964
      %4966 = vperm.xlu0 %4965, %v4955
      %v4967 = vpop.permute.xlu0 %4966
      %v4968 = vperm.slane %v4872, 6
      %v4969 = vlaneseq
      %v4970 = vshrl.u32 %v4969, 7
      %4972 = vset.pattern.permute.xlu0 %v4970
      %4973 = vperm.xlu0 %4972, %v4968
      %v4974 = vpop.permute.xlu0 %4973
      %v4975 = vlaneseq
      %v4976 = vshrl.u32 %v4975, 7
      %v4977 = vadd.s32 %v4976, 8
      %4978 = vset.pattern.permute.xlu0 %v4977
      %4979 = vperm.xlu0 %4978, %v4968
      %v4980 = vpop.permute.xlu0 %4979
      %v4981 = vperm.slane %v4872, 7
      %v4982 = vlaneseq
      %v4983 = vshrl.u32 %v4982, 7
      %4985 = vset.pattern.permute.xlu0 %v4983
      %4986 = vperm.xlu0 %4985, %v4981
      %v4987 = vpop.permute.xlu0 %4986
      %v4988 = vlaneseq
      %v4989 = vshrl.u32 %v4988, 7
      %v4990 = vadd.s32 %v4989, 8
      %4991 = vset.pattern.permute.xlu0 %v4990
      %4992 = vperm.xlu0 %4991, %v4981
      %v4993 = vpop.permute.xlu0 %4992
      %v4994 = vperm.slane %v4873, 0
      %v4995 = vlaneseq
      %v4996 = vshrl.u32 %v4995, 7
      %4998 = vset.pattern.permute.xlu0 %v4996
      %4999 = vperm.xlu0 %4998, %v4994
      %v5000 = vpop.permute.xlu0 %4999
      %v5001 = vlaneseq
      %v5002 = vshrl.u32 %v5001, 7
      %v5003 = vadd.s32 %v5002, 8
      %5004 = vset.pattern.permute.xlu0 %v5003
      %5005 = vperm.xlu0 %5004, %v4994
      %v5006 = vpop.permute.xlu0 %5005
      %v5007 = vperm.slane %v4873, 1
      %v5008 = vlaneseq
      %v5009 = vshrl.u32 %v5008, 7
      %5011 = vset.pattern.permute.xlu0 %v5009
      %5012 = vperm.xlu0 %5011, %v5007
      %v5013 = vpop.permute.xlu0 %5012
      %v5014 = vlaneseq
      %v5015 = vshrl.u32 %v5014, 7
      %v5016 = vadd.s32 %v5015, 8
      %5017 = vset.pattern.permute.xlu0 %v5016
      %5018 = vperm.xlu0 %5017, %v5007
      %v5019 = vpop.permute.xlu0 %5018
      %v5020 = vperm.slane %v4873, 2
      %v5021 = vlaneseq
      %v5022 = vshrl.u32 %v5021, 7
      %5024 = vset.pattern.permute.xlu0 %v5022
      %5025 = vperm.xlu0 %5024, %v5020
      %v5026 = vpop.permute.xlu0 %5025
      %v5027 = vlaneseq
      %v5028 = vshrl.u32 %v5027, 7
      %v5029 = vadd.s32 %v5028, 8
      %5030 = vset.pattern.permute.xlu0 %v5029
      %5031 = vperm.xlu0 %5030, %v5020
      %v5032 = vpop.permute.xlu0 %5031
      %v5033 = vperm.slane %v4873, 3
      %v5034 = vlaneseq
      %v5035 = vshrl.u32 %v5034, 7
      %5037 = vset.pattern.permute.xlu0 %v5035
      %5038 = vperm.xlu0 %5037, %v5033
      %v5039 = vpop.permute.xlu0 %5038
      %v5040 = vlaneseq
      %v5041 = vshrl.u32 %v5040, 7
      %v5042 = vadd.s32 %v5041, 8
      %5043 = vset.pattern.permute.xlu0 %v5042
      %5044 = vperm.xlu0 %5043, %v5033
      %v5045 = vpop.permute.xlu0 %5044
      %v5046 = vperm.slane %v4873, 4
      %v5047 = vlaneseq
      %v5048 = vshrl.u32 %v5047, 7
      %5050 = vset.pattern.permute.xlu0 %v5048
      %5051 = vperm.xlu0 %5050, %v5046
      %v5052 = vpop.permute.xlu0 %5051
      %v5053 = vlaneseq
      %v5054 = vshrl.u32 %v5053, 7
      %v5055 = vadd.s32 %v5054, 8
      %5056 = vset.pattern.permute.xlu0 %v5055
      %5057 = vperm.xlu0 %5056, %v5046
      %v5058 = vpop.permute.xlu0 %5057
      %v5059 = vperm.slane %v4873, 5
      %v5060 = vlaneseq
      %v5061 = vshrl.u32 %v5060, 7
      %5063 = vset.pattern.permute.xlu0 %v5061
      %5064 = vperm.xlu0 %5063, %v5059
      %v5065 = vpop.permute.xlu0 %5064
      %v5066 = vlaneseq
      %v5067 = vshrl.u32 %v5066, 7
      %v5068 = vadd.s32 %v5067, 8
      %5069 = vset.pattern.permute.xlu0 %v5068
      %5070 = vperm.xlu0 %5069, %v5059
      %v5071 = vpop.permute.xlu0 %5070
      %v5072 = vperm.slane %v4873, 6
      %v5073 = vlaneseq
      %v5074 = vshrl.u32 %v5073, 7
      %5076 = vset.pattern.permute.xlu0 %v5074
      %5077 = vperm.xlu0 %5076, %v5072
      %v5078 = vpop.permute.xlu0 %5077
      %v5079 = vlaneseq
      %v5080 = vshrl.u32 %v5079, 7
      %v5081 = vadd.s32 %v5080, 8
      %5082 = vset.pattern.permute.xlu0 %v5081
      %5083 = vperm.xlu0 %5082, %v5072
      %v5084 = vpop.permute.xlu0 %5083
      %v5085 = vperm.slane %v4873, 7
      %v5086 = vlaneseq
      %v5087 = vshrl.u32 %v5086, 7
      %5089 = vset.pattern.permute.xlu0 %v5087
      %5090 = vperm.xlu0 %5089, %v5085
      %v5091 = vpop.permute.xlu0 %5090
      %v5092 = vlaneseq
      %v5093 = vshrl.u32 %v5092, 7
      %v5094 = vadd.s32 %v5093, 8
      %5095 = vset.pattern.permute.xlu0 %v5094
      %5096 = vperm.xlu0 %5095, %v5085
      %v5097 = vpop.permute.xlu0 %5096
      %v5130 = vadd.f32 %v4570, %v4896
      %v5131 = vadd.f32 %v4573, %v4902
      %v5132 = vadd.f32 %v4576, %v4909
      %v5133 = vadd.f32 %v4579, %v4915
      %v5134 = vadd.f32 %v4582, %v4922
      %v5135 = vadd.f32 %v4585, %v4928
      %v5136 = vadd.f32 %v4588, %v4935
      %v5137 = vadd.f32 %v4591, %v4941
      %v5138 = vadd.f32 %v4594, %v4948
      %v5139 = vadd.f32 %v4597, %v4954
      %v5140 = vadd.f32 %v4600, %v4961
      %v5141 = vadd.f32 %v4603, %v4967
      %v5142 = vadd.f32 %v4606, %v4974
      %v5143 = vadd.f32 %v4609, %v4980
      %v5144 = vadd.f32 %v4612, %v4987
      %v5145 = vadd.f32 %v4615, %v4993
      %v5146 = vadd.f32 %v4618, %v5000
      %v5147 = vadd.f32 %v4621, %v5006
      %v5148 = vadd.f32 %v4624, %v5013
      %v5149 = vadd.f32 %v4627, %v5019
      %v5150 = vadd.f32 %v4630, %v5026
      %v5151 = vadd.f32 %v4633, %v5032
      %v5152 = vadd.f32 %v4636, %v5039
      %v5153 = vadd.f32 %v4639, %v5045
      %v5154 = vadd.f32 %v4642, %v5052
      %v5155 = vadd.f32 %v4645, %v5058
      %v5156 = vadd.f32 %v4648, %v5065
      %v5157 = vadd.f32 %v4651, %v5071
      %v5158 = vadd.f32 %v4654, %v5078
      %v5159 = vadd.f32 %v4657, %v5084
      %v5160 = vadd.f32 %v4660, %v5091
      %v5161 = vadd.f32 %v4663, %v5097
      %v5163 = vsel %vm3308, %v4505, 0
      %v5166 = vsel %vm3308, %v4507, 0
      %5168 = vmatpush.msra.mxu0 0.0
      %5169 = vmatpush.msra.mxu0 0.0
      %5170 = vmatpush.msra.mxu0 0.0
      %5171 = vmatpush.msra.mxu0 0.0
      %5172 = vmatpush.msra.mxu0 0.0
      %5173 = vmatpush.msra.mxu0 0.0
      %5174 = vmatpush.msra.mxu0 0.0
      %5175 = vmatpush.msra.mxu0 0.0
      %5176 = vmatpush.msra.mxu0 0.0
      %5177 = vmatpush.msra.mxu0 0.0
      %5178 = vmatpush.msra.mxu0 0.0
      %5179 = vmatpush.msra.mxu0 0.0
      %5180 = vmatpush.msra.mxu0 0.0
      %5181 = vmatpush.msra.mxu0 0.0
      %5182 = vmatpush.msra.mxu0 %v1905
      %5183 = vmatpush.msra.mxu0 %v1793
      %5184 = vmatmul.f32.gmra.mxu0 %v5163
      %v5185 = vpop.f32.mrf.mxu0
      %v5186 = vadd.f32 0.0, %v5185
      %5187 = vmatmul.f32.gmra.mxu0 %v5166
      %v5188 = vpop.f32.mrf.mxu0
      %v5189 = vadd.f32 0.0, %v5188
      %5190 = vdwg.mxu0
      %v5192 = vsel %vm3308, %v4509, 0
      %v5195 = vsel %vm3308, %v4511, 0
      %5197 = vmatpush.msra.mxu0 0.0
      %5198 = vmatpush.msra.mxu0 0.0
      %5199 = vmatpush.msra.mxu0 0.0
      %5200 = vmatpush.msra.mxu0 0.0
      %5201 = vmatpush.msra.mxu0 0.0
      %5202 = vmatpush.msra.mxu0 0.0
      %5203 = vmatpush.msra.mxu0 0.0
      %5204 = vmatpush.msra.mxu0 0.0
      %5205 = vmatpush.msra.mxu0 0.0
      %5206 = vmatpush.msra.mxu0 0.0
      %5207 = vmatpush.msra.mxu0 0.0
      %5208 = vmatpush.msra.mxu0 0.0
      %5209 = vmatpush.msra.mxu0 0.0
      %5210 = vmatpush.msra.mxu0 0.0
      %5211 = vmatpush.msra.mxu0 %v1907
      %5212 = vmatpush.msra.mxu0 %v1795
      %5213 = vmatmul.f32.gmra.mxu0 %v5192
      %v5214 = vpop.f32.mrf.mxu0
      %v5215 = vadd.f32 0.0, %v5214
      %5216 = vmatmul.f32.gmra.mxu0 %v5195
      %v5217 = vpop.f32.mrf.mxu0
      %v5218 = vadd.f32 0.0, %v5217
      %5219 = vdwg.mxu0
      %v5221 = vsel %vm3308, %v4513, 0
      %v5224 = vsel %vm3308, %v4515, 0
      %5226 = vmatpush.msra.mxu0 0.0
      %5227 = vmatpush.msra.mxu0 0.0
      %5228 = vmatpush.msra.mxu0 0.0
      %5229 = vmatpush.msra.mxu0 0.0
      %5230 = vmatpush.msra.mxu0 0.0
      %5231 = vmatpush.msra.mxu0 0.0
      %5232 = vmatpush.msra.mxu0 0.0
      %5233 = vmatpush.msra.mxu0 0.0
      %5234 = vmatpush.msra.mxu0 0.0
      %5235 = vmatpush.msra.mxu0 0.0
      %5236 = vmatpush.msra.mxu0 0.0
      %5237 = vmatpush.msra.mxu0 0.0
      %5238 = vmatpush.msra.mxu0 0.0
      %5239 = vmatpush.msra.mxu0 0.0
      %5240 = vmatpush.msra.mxu0 %v1909
      %5241 = vmatpush.msra.mxu0 %v1797
      %5242 = vmatmul.f32.gmra.mxu0 %v5221
      %v5243 = vpop.f32.mrf.mxu0
      %v5244 = vadd.f32 0.0, %v5243
      %5245 = vmatmul.f32.gmra.mxu0 %v5224
      %v5246 = vpop.f32.mrf.mxu0
      %v5247 = vadd.f32 0.0, %v5246
      %5248 = vdwg.mxu0
      %v5250 = vsel %vm3308, %v4517, 0
      %v5253 = vsel %vm3308, %v4519, 0
      %5255 = vmatpush.msra.mxu0 0.0
      %5256 = vmatpush.msra.mxu0 0.0
      %5257 = vmatpush.msra.mxu0 0.0
      %5258 = vmatpush.msra.mxu0 0.0
      %5259 = vmatpush.msra.mxu0 0.0
      %5260 = vmatpush.msra.mxu0 0.0
      %5261 = vmatpush.msra.mxu0 0.0
      %5262 = vmatpush.msra.mxu0 0.0
      %5263 = vmatpush.msra.mxu0 0.0
      %5264 = vmatpush.msra.mxu0 0.0
      %5265 = vmatpush.msra.mxu0 0.0
      %5266 = vmatpush.msra.mxu0 0.0
      %5267 = vmatpush.msra.mxu0 0.0
      %5268 = vmatpush.msra.mxu0 0.0
      %5269 = vmatpush.msra.mxu0 %v1911
      %5270 = vmatpush.msra.mxu0 %v1799
      %5271 = vmatmul.f32.gmra.mxu0 %v5250
      %v5272 = vpop.f32.mrf.mxu0
      %v5273 = vadd.f32 0.0, %v5272
      %5274 = vmatmul.f32.gmra.mxu0 %v5253
      %v5275 = vpop.f32.mrf.mxu0
      %v5276 = vadd.f32 0.0, %v5275
      %5277 = vdwg.mxu0
      %v5279 = vsel %vm3308, %v4521, 0
      %v5282 = vsel %vm3308, %v4523, 0
      %5284 = vmatpush.msra.mxu0 0.0
      %5285 = vmatpush.msra.mxu0 0.0
      %5286 = vmatpush.msra.mxu0 0.0
      %5287 = vmatpush.msra.mxu0 0.0
      %5288 = vmatpush.msra.mxu0 0.0
      %5289 = vmatpush.msra.mxu0 0.0
      %5290 = vmatpush.msra.mxu0 0.0
      %5291 = vmatpush.msra.mxu0 0.0
      %5292 = vmatpush.msra.mxu0 0.0
      %5293 = vmatpush.msra.mxu0 0.0
      %5294 = vmatpush.msra.mxu0 0.0
      %5295 = vmatpush.msra.mxu0 0.0
      %5296 = vmatpush.msra.mxu0 0.0
      %5297 = vmatpush.msra.mxu0 0.0
      %5298 = vmatpush.msra.mxu0 %v1913
      %5299 = vmatpush.msra.mxu0 %v1801
      %5300 = vmatmul.f32.gmra.mxu0 %v5279
      %v5301 = vpop.f32.mrf.mxu0
      %v5302 = vadd.f32 0.0, %v5301
      %5303 = vmatmul.f32.gmra.mxu0 %v5282
      %v5304 = vpop.f32.mrf.mxu0
      %v5305 = vadd.f32 0.0, %v5304
      %5306 = vdwg.mxu0
      %v5308 = vsel %vm3308, %v4525, 0
      %v5311 = vsel %vm3308, %v4527, 0
      %5313 = vmatpush.msra.mxu0 0.0
      %5314 = vmatpush.msra.mxu0 0.0
      %5315 = vmatpush.msra.mxu0 0.0
      %5316 = vmatpush.msra.mxu0 0.0
      %5317 = vmatpush.msra.mxu0 0.0
      %5318 = vmatpush.msra.mxu0 0.0
      %5319 = vmatpush.msra.mxu0 0.0
      %5320 = vmatpush.msra.mxu0 0.0
      %5321 = vmatpush.msra.mxu0 0.0
      %5322 = vmatpush.msra.mxu0 0.0
      %5323 = vmatpush.msra.mxu0 0.0
      %5324 = vmatpush.msra.mxu0 0.0
      %5325 = vmatpush.msra.mxu0 0.0
      %5326 = vmatpush.msra.mxu0 0.0
      %5327 = vmatpush.msra.mxu0 %v1915
      %5328 = vmatpush.msra.mxu0 %v1803
      %5329 = vmatmul.f32.gmra.mxu0 %v5308
      %v5330 = vpop.f32.mrf.mxu0
      %v5331 = vadd.f32 0.0, %v5330
      %5332 = vmatmul.f32.gmra.mxu0 %v5311
      %v5333 = vpop.f32.mrf.mxu0
      %v5334 = vadd.f32 0.0, %v5333
      %5335 = vdwg.mxu0
      %v5337 = vsel %vm3308, %v4529, 0
      %v5340 = vsel %vm3308, %v4531, 0
      %5342 = vmatpush.msra.mxu0 0.0
      %5343 = vmatpush.msra.mxu0 0.0
      %5344 = vmatpush.msra.mxu0 0.0
      %5345 = vmatpush.msra.mxu0 0.0
      %5346 = vmatpush.msra.mxu0 0.0
      %5347 = vmatpush.msra.mxu0 0.0
      %5348 = vmatpush.msra.mxu0 0.0
      %5349 = vmatpush.msra.mxu0 0.0
      %5350 = vmatpush.msra.mxu0 0.0
      %5351 = vmatpush.msra.mxu0 0.0
      %5352 = vmatpush.msra.mxu0 0.0
      %5353 = vmatpush.msra.mxu0 0.0
      %5354 = vmatpush.msra.mxu0 0.0
      %5355 = vmatpush.msra.mxu0 0.0
      %5356 = vmatpush.msra.mxu0 %v1917
      %5357 = vmatpush.msra.mxu0 %v1805
      %5358 = vmatmul.f32.gmra.mxu0 %v5337
      %v5359 = vpop.f32.mrf.mxu0
      %v5360 = vadd.f32 0.0, %v5359
      %5361 = vmatmul.f32.gmra.mxu0 %v5340
      %v5362 = vpop.f32.mrf.mxu0
      %v5363 = vadd.f32 0.0, %v5362
      %5364 = vdwg.mxu0
      %v5366 = vsel %vm3308, %v4533, 0
      %v5369 = vsel %vm3308, %v4535, 0
      %5371 = vmatpush.msra.mxu0 0.0
      %5372 = vmatpush.msra.mxu0 0.0
      %5373 = vmatpush.msra.mxu0 0.0
      %5374 = vmatpush.msra.mxu0 0.0
      %5375 = vmatpush.msra.mxu0 0.0
      %5376 = vmatpush.msra.mxu0 0.0
      %5377 = vmatpush.msra.mxu0 0.0
      %5378 = vmatpush.msra.mxu0 0.0
      %5379 = vmatpush.msra.mxu0 0.0
      %5380 = vmatpush.msra.mxu0 0.0
      %5381 = vmatpush.msra.mxu0 0.0
      %5382 = vmatpush.msra.mxu0 0.0
      %5383 = vmatpush.msra.mxu0 0.0
      %5384 = vmatpush.msra.mxu0 0.0
      %5385 = vmatpush.msra.mxu0 %v1919
      %5386 = vmatpush.msra.mxu0 %v1807
      %5387 = vmatmul.f32.gmra.mxu0 %v5366
      %v5388 = vpop.f32.mrf.mxu0
      %v5389 = vadd.f32 0.0, %v5388
      %5390 = vmatmul.f32.gmra.mxu0 %v5369
      %v5391 = vpop.f32.mrf.mxu0
      %v5392 = vadd.f32 0.0, %v5391
      %5393 = vdwg.mxu0
      %v5395 = vsel %vm3308, %v4537, 0
      %v5398 = vsel %vm3308, %v4539, 0
      %5400 = vmatpush.msra.mxu0 0.0
      %5401 = vmatpush.msra.mxu0 0.0
      %5402 = vmatpush.msra.mxu0 0.0
      %5403 = vmatpush.msra.mxu0 0.0
      %5404 = vmatpush.msra.mxu0 0.0
      %5405 = vmatpush.msra.mxu0 0.0
      %5406 = vmatpush.msra.mxu0 0.0
      %5407 = vmatpush.msra.mxu0 0.0
      %5408 = vmatpush.msra.mxu0 0.0
      %5409 = vmatpush.msra.mxu0 0.0
      %5410 = vmatpush.msra.mxu0 0.0
      %5411 = vmatpush.msra.mxu0 0.0
      %5412 = vmatpush.msra.mxu0 0.0
      %5413 = vmatpush.msra.mxu0 0.0
      %5414 = vmatpush.msra.mxu0 %v2129
      %5415 = vmatpush.msra.mxu0 %v2017
      %5416 = vmatmul.f32.gmra.mxu0 %v5395
      %v5417 = vpop.f32.mrf.mxu0
      %v5418 = vadd.f32 0.0, %v5417
      %5419 = vmatmul.f32.gmra.mxu0 %v5398
      %v5420 = vpop.f32.mrf.mxu0
      %v5421 = vadd.f32 0.0, %v5420
      %5422 = vdwg.mxu0
      %v5424 = vsel %vm3308, %v4541, 0
      %v5427 = vsel %vm3308, %v4543, 0
      %5429 = vmatpush.msra.mxu0 0.0
      %5430 = vmatpush.msra.mxu0 0.0
      %5431 = vmatpush.msra.mxu0 0.0
      %5432 = vmatpush.msra.mxu0 0.0
      %5433 = vmatpush.msra.mxu0 0.0
      %5434 = vmatpush.msra.mxu0 0.0
      %5435 = vmatpush.msra.mxu0 0.0
      %5436 = vmatpush.msra.mxu0 0.0
      %5437 = vmatpush.msra.mxu0 0.0
      %5438 = vmatpush.msra.mxu0 0.0
      %5439 = vmatpush.msra.mxu0 0.0
      %5440 = vmatpush.msra.mxu0 0.0
      %5441 = vmatpush.msra.mxu0 0.0
      %5442 = vmatpush.msra.mxu0 0.0
      %5443 = vmatpush.msra.mxu0 %v2131
      %5444 = vmatpush.msra.mxu0 %v2019
      %5445 = vmatmul.f32.gmra.mxu0 %v5424
      %v5446 = vpop.f32.mrf.mxu0
      %v5447 = vadd.f32 0.0, %v5446
      %5448 = vmatmul.f32.gmra.mxu0 %v5427
      %v5449 = vpop.f32.mrf.mxu0
      %v5450 = vadd.f32 0.0, %v5449
      %5451 = vdwg.mxu0
      %v5453 = vsel %vm3308, %v4545, 0
      %v5456 = vsel %vm3308, %v4547, 0
      %5458 = vmatpush.msra.mxu0 0.0
      %5459 = vmatpush.msra.mxu0 0.0
      %5460 = vmatpush.msra.mxu0 0.0
      %5461 = vmatpush.msra.mxu0 0.0
      %5462 = vmatpush.msra.mxu0 0.0
      %5463 = vmatpush.msra.mxu0 0.0
      %5464 = vmatpush.msra.mxu0 0.0
      %5465 = vmatpush.msra.mxu0 0.0
      %5466 = vmatpush.msra.mxu0 0.0
      %5467 = vmatpush.msra.mxu0 0.0
      %5468 = vmatpush.msra.mxu0 0.0
      %5469 = vmatpush.msra.mxu0 0.0
      %5470 = vmatpush.msra.mxu0 0.0
      %5471 = vmatpush.msra.mxu0 0.0
      %5472 = vmatpush.msra.mxu0 %v2133
      %5473 = vmatpush.msra.mxu0 %v2021
      %5474 = vmatmul.f32.gmra.mxu0 %v5453
      %v5475 = vpop.f32.mrf.mxu0
      %v5476 = vadd.f32 0.0, %v5475
      %5477 = vmatmul.f32.gmra.mxu0 %v5456
      %v5478 = vpop.f32.mrf.mxu0
      %v5479 = vadd.f32 0.0, %v5478
      %5480 = vdwg.mxu0
      %v5482 = vsel %vm3308, %v4549, 0
      %v5485 = vsel %vm3308, %v4551, 0
      %5487 = vmatpush.msra.mxu0 0.0
      %5488 = vmatpush.msra.mxu0 0.0
      %5489 = vmatpush.msra.mxu0 0.0
      %5490 = vmatpush.msra.mxu0 0.0
      %5491 = vmatpush.msra.mxu0 0.0
      %5492 = vmatpush.msra.mxu0 0.0
      %5493 = vmatpush.msra.mxu0 0.0
      %5494 = vmatpush.msra.mxu0 0.0
      %5495 = vmatpush.msra.mxu0 0.0
      %5496 = vmatpush.msra.mxu0 0.0
      %5497 = vmatpush.msra.mxu0 0.0
      %5498 = vmatpush.msra.mxu0 0.0
      %5499 = vmatpush.msra.mxu0 0.0
      %5500 = vmatpush.msra.mxu0 0.0
      %5501 = vmatpush.msra.mxu0 %v2135
      %5502 = vmatpush.msra.mxu0 %v2023
      %5503 = vmatmul.f32.gmra.mxu0 %v5482
      %v5504 = vpop.f32.mrf.mxu0
      %v5505 = vadd.f32 0.0, %v5504
      %5506 = vmatmul.f32.gmra.mxu0 %v5485
      %v5507 = vpop.f32.mrf.mxu0
      %v5508 = vadd.f32 0.0, %v5507
      %5509 = vdwg.mxu0
      %v5511 = vsel %vm3308, %v4553, 0
      %v5514 = vsel %vm3308, %v4555, 0
      %5516 = vmatpush.msra.mxu0 0.0
      %5517 = vmatpush.msra.mxu0 0.0
      %5518 = vmatpush.msra.mxu0 0.0
      %5519 = vmatpush.msra.mxu0 0.0
      %5520 = vmatpush.msra.mxu0 0.0
      %5521 = vmatpush.msra.mxu0 0.0
      %5522 = vmatpush.msra.mxu0 0.0
      %5523 = vmatpush.msra.mxu0 0.0
      %5524 = vmatpush.msra.mxu0 0.0
      %5525 = vmatpush.msra.mxu0 0.0
      %5526 = vmatpush.msra.mxu0 0.0
      %5527 = vmatpush.msra.mxu0 0.0
      %5528 = vmatpush.msra.mxu0 0.0
      %5529 = vmatpush.msra.mxu0 0.0
      %5530 = vmatpush.msra.mxu0 %v2137
      %5531 = vmatpush.msra.mxu0 %v2025
      %5532 = vmatmul.f32.gmra.mxu0 %v5511
      %v5533 = vpop.f32.mrf.mxu0
      %v5534 = vadd.f32 0.0, %v5533
      %5535 = vmatmul.f32.gmra.mxu0 %v5514
      %v5536 = vpop.f32.mrf.mxu0
      %v5537 = vadd.f32 0.0, %v5536
      %5538 = vdwg.mxu0
      %v5540 = vsel %vm3308, %v4557, 0
      %v5543 = vsel %vm3308, %v4559, 0
      %5545 = vmatpush.msra.mxu0 0.0
      %5546 = vmatpush.msra.mxu0 0.0
      %5547 = vmatpush.msra.mxu0 0.0
      %5548 = vmatpush.msra.mxu0 0.0
      %5549 = vmatpush.msra.mxu0 0.0
      %5550 = vmatpush.msra.mxu0 0.0
      %5551 = vmatpush.msra.mxu0 0.0
      %5552 = vmatpush.msra.mxu0 0.0
      %5553 = vmatpush.msra.mxu0 0.0
      %5554 = vmatpush.msra.mxu0 0.0
      %5555 = vmatpush.msra.mxu0 0.0
      %5556 = vmatpush.msra.mxu0 0.0
      %5557 = vmatpush.msra.mxu0 0.0
      %5558 = vmatpush.msra.mxu0 0.0
      %5559 = vmatpush.msra.mxu0 %v2139
      %5560 = vmatpush.msra.mxu0 %v2027
      %5561 = vmatmul.f32.gmra.mxu0 %v5540
      %v5562 = vpop.f32.mrf.mxu0
      %v5563 = vadd.f32 0.0, %v5562
      %5564 = vmatmul.f32.gmra.mxu0 %v5543
      %v5565 = vpop.f32.mrf.mxu0
      %v5566 = vadd.f32 0.0, %v5565
      %5567 = vdwg.mxu0
      %v5569 = vsel %vm3308, %v4561, 0
      %v5572 = vsel %vm3308, %v4563, 0
      %5574 = vmatpush.msra.mxu0 0.0
      %5575 = vmatpush.msra.mxu0 0.0
      %5576 = vmatpush.msra.mxu0 0.0
      %5577 = vmatpush.msra.mxu0 0.0
      %5578 = vmatpush.msra.mxu0 0.0
      %5579 = vmatpush.msra.mxu0 0.0
      %5580 = vmatpush.msra.mxu0 0.0
      %5581 = vmatpush.msra.mxu0 0.0
      %5582 = vmatpush.msra.mxu0 0.0
      %5583 = vmatpush.msra.mxu0 0.0
      %5584 = vmatpush.msra.mxu0 0.0
      %5585 = vmatpush.msra.mxu0 0.0
      %5586 = vmatpush.msra.mxu0 0.0
      %5587 = vmatpush.msra.mxu0 0.0
      %5588 = vmatpush.msra.mxu0 %v2141
      %5589 = vmatpush.msra.mxu0 %v2029
      %5590 = vmatmul.f32.gmra.mxu0 %v5569
      %v5591 = vpop.f32.mrf.mxu0
      %v5592 = vadd.f32 0.0, %v5591
      %5593 = vmatmul.f32.gmra.mxu0 %v5572
      %v5594 = vpop.f32.mrf.mxu0
      %v5595 = vadd.f32 0.0, %v5594
      %5596 = vdwg.mxu0
      %v5598 = vsel %vm3308, %v4565, 0
      %v5601 = vsel %vm3308, %v4567, 0
      %5603 = vmatpush.msra.mxu0 0.0
      %5604 = vmatpush.msra.mxu0 0.0
      %5605 = vmatpush.msra.mxu0 0.0
      %5606 = vmatpush.msra.mxu0 0.0
      %5607 = vmatpush.msra.mxu0 0.0
      %5608 = vmatpush.msra.mxu0 0.0
      %5609 = vmatpush.msra.mxu0 0.0
      %5610 = vmatpush.msra.mxu0 0.0
      %5611 = vmatpush.msra.mxu0 0.0
      %5612 = vmatpush.msra.mxu0 0.0
      %5613 = vmatpush.msra.mxu0 0.0
      %5614 = vmatpush.msra.mxu0 0.0
      %5615 = vmatpush.msra.mxu0 0.0
      %5616 = vmatpush.msra.mxu0 0.0
      %5617 = vmatpush.msra.mxu0 %v2143
      %5618 = vmatpush.msra.mxu0 %v2031
      %5619 = vmatmul.f32.gmra.mxu0 %v5598
      %v5620 = vpop.f32.mrf.mxu0
      %v5621 = vadd.f32 0.0, %v5620
      %5622 = vmatmul.f32.gmra.mxu0 %v5601
      %v5623 = vpop.f32.mrf.mxu0
      %v5624 = vadd.f32 0.0, %v5623
      %5625 = vdwg.mxu0
      %v5626 = vrot.slane %v5244, 4
      %v5627 = vsel %vm800, %v5626, %v5186
      %v5628 = vrot.slane %v5186, 4
      %v5629 = vsel %vm800, %v5244, %v5628
      %v5631 = vunpack.c.l.s4 1983009808
      %v5632 = vunpack.c.0.s8 %v5631
      %v5633 = vperm.slane %v5627, %v5632
      %v5635 = vunpack.c.l.s4 1983009808
      %v5636 = vunpack.c.0.s8 %v5635
      %v5637 = vperm.slane %v5629, %v5636
      %v5638 = vrot.slane %v5273, 4
      %v5639 = vsel %vm800, %v5638, %v5215
      %v5640 = vrot.slane %v5215, 4
      %v5641 = vsel %vm800, %v5273, %v5640
      %v5643 = vunpack.c.l.s4 1983009808
      %v5644 = vunpack.c.0.s8 %v5643
      %v5645 = vperm.slane %v5639, %v5644
      %v5647 = vunpack.c.l.s4 1983009808
      %v5648 = vunpack.c.0.s8 %v5647
      %v5649 = vperm.slane %v5641, %v5648
      %v5650 = vrot.slane %v5360, 4
      %v5651 = vsel %vm800, %v5650, %v5302
      %v5652 = vrot.slane %v5302, 4
      %v5653 = vsel %vm800, %v5360, %v5652
      %v5655 = vunpack.c.l.s4 1983009808
      %v5656 = vunpack.c.0.s8 %v5655
      %v5657 = vperm.slane %v5651, %v5656
      %v5659 = vunpack.c.l.s4 1983009808
      %v5660 = vunpack.c.0.s8 %v5659
      %v5661 = vperm.slane %v5653, %v5660
      %v5662 = vrot.slane %v5389, 4
      %v5663 = vsel %vm800, %v5662, %v5331
      %v5664 = vrot.slane %v5331, 4
      %v5665 = vsel %vm800, %v5389, %v5664
      %v5667 = vunpack.c.l.s4 1983009808
      %v5668 = vunpack.c.0.s8 %v5667
      %v5669 = vperm.slane %v5663, %v5668
      %v5671 = vunpack.c.l.s4 1983009808
      %v5672 = vunpack.c.0.s8 %v5671
      %v5673 = vperm.slane %v5665, %v5672
      %v5674 = vrot.slane %v5645, 4
      %v5675 = vsel %vm800, %v5674, %v5633
      %v5676 = vrot.slane %v5633, 4
      %v5677 = vsel %vm800, %v5645, %v5676
      %v5679 = vunpack.c.l.s4 1934713408
      %v5680 = vunpack.c.0.s8 %v5679
      %v5681 = vperm.slane %v5675, %v5680
      %v5683 = vunpack.c.l.s4 1934713408
      %v5684 = vunpack.c.0.s8 %v5683
      %v5685 = vperm.slane %v5677, %v5684
      %v5686 = vrot.slane %v5649, 4
      %v5687 = vsel %vm800, %v5686, %v5637
      %v5688 = vrot.slane %v5637, 4
      %v5689 = vsel %vm800, %v5649, %v5688
      %v5691 = vunpack.c.l.s4 1934713408
      %v5692 = vunpack.c.0.s8 %v5691
      %v5693 = vperm.slane %v5687, %v5692
      %v5695 = vunpack.c.l.s4 1934713408
      %v5696 = vunpack.c.0.s8 %v5695
      %v5697 = vperm.slane %v5689, %v5696
      %v5698 = vrot.slane %v5669, 4
      %v5699 = vsel %vm800, %v5698, %v5657
      %v5700 = vrot.slane %v5657, 4
      %v5701 = vsel %vm800, %v5669, %v5700
      %v5703 = vunpack.c.l.s4 1934713408
      %v5704 = vunpack.c.0.s8 %v5703
      %v5705 = vperm.slane %v5699, %v5704
      %v5707 = vunpack.c.l.s4 1934713408
      %v5708 = vunpack.c.0.s8 %v5707
      %v5709 = vperm.slane %v5701, %v5708
      %v5710 = vrot.slane %v5673, 4
      %v5711 = vsel %vm800, %v5710, %v5661
      %v5712 = vrot.slane %v5661, 4
      %v5713 = vsel %vm800, %v5673, %v5712
      %v5715 = vunpack.c.l.s4 1934713408
      %v5716 = vunpack.c.0.s8 %v5715
      %v5717 = vperm.slane %v5711, %v5716
      %v5719 = vunpack.c.l.s4 1934713408
      %v5720 = vunpack.c.0.s8 %v5719
      %v5721 = vperm.slane %v5713, %v5720
      %v5722 = vrot.slane %v5705, 4
      %v5723 = vsel %vm800, %v5722, %v5681
      %v5724 = vrot.slane %v5681, 4
      %v5725 = vsel %vm800, %v5705, %v5724
      %v5726 = vrot.slane %v5709, 4
      %v5727 = vsel %vm800, %v5726, %v5685
      %v5728 = vrot.slane %v5685, 4
      %v5729 = vsel %vm800, %v5709, %v5728
      %v5730 = vrot.slane %v5717, 4
      %v5731 = vsel %vm800, %v5730, %v5693
      %v5732 = vrot.slane %v5693, 4
      %v5733 = vsel %vm800, %v5717, %v5732
      %v5734 = vrot.slane %v5721, 4
      %v5735 = vsel %vm800, %v5734, %v5697
      %v5736 = vrot.slane %v5697, 4
      %v5737 = vsel %vm800, %v5721, %v5736
      %v5738 = vrot.slane %v5476, 4
      %v5739 = vsel %vm800, %v5738, %v5418
      %v5740 = vrot.slane %v5418, 4
      %v5741 = vsel %vm800, %v5476, %v5740
      %v5743 = vunpack.c.l.s4 1983009808
      %v5744 = vunpack.c.0.s8 %v5743
      %v5745 = vperm.slane %v5739, %v5744
      %v5747 = vunpack.c.l.s4 1983009808
      %v5748 = vunpack.c.0.s8 %v5747
      %v5749 = vperm.slane %v5741, %v5748
      %v5750 = vrot.slane %v5505, 4
      %v5751 = vsel %vm800, %v5750, %v5447
      %v5752 = vrot.slane %v5447, 4
      %v5753 = vsel %vm800, %v5505, %v5752
      %v5755 = vunpack.c.l.s4 1983009808
      %v5756 = vunpack.c.0.s8 %v5755
      %v5757 = vperm.slane %v5751, %v5756
      %v5759 = vunpack.c.l.s4 1983009808
      %v5760 = vunpack.c.0.s8 %v5759
      %v5761 = vperm.slane %v5753, %v5760
      %v5762 = vrot.slane %v5592, 4
      %v5763 = vsel %vm800, %v5762, %v5534
      %v5764 = vrot.slane %v5534, 4
      %v5765 = vsel %vm800, %v5592, %v5764
      %v5767 = vunpack.c.l.s4 1983009808
      %v5768 = vunpack.c.0.s8 %v5767
      %v5769 = vperm.slane %v5763, %v5768
      %v5771 = vunpack.c.l.s4 1983009808
      %v5772 = vunpack.c.0.s8 %v5771
      %v5773 = vperm.slane %v5765, %v5772
      %v5774 = vrot.slane %v5621, 4
      %v5775 = vsel %vm800, %v5774, %v5563
      %v5776 = vrot.slane %v5563, 4
      %v5777 = vsel %vm800, %v5621, %v5776
      %v5779 = vunpack.c.l.s4 1983009808
      %v5780 = vunpack.c.0.s8 %v5779
      %v5781 = vperm.slane %v5775, %v5780
      %v5783 = vunpack.c.l.s4 1983009808
      %v5784 = vunpack.c.0.s8 %v5783
      %v5785 = vperm.slane %v5777, %v5784
      %v5786 = vrot.slane %v5757, 4
      %v5787 = vsel %vm800, %v5786, %v5745
      %v5788 = vrot.slane %v5745, 4
      %v5789 = vsel %vm800, %v5757, %v5788
      %v5791 = vunpack.c.l.s4 1934713408
      %v5792 = vunpack.c.0.s8 %v5791
      %v5793 = vperm.slane %v5787, %v5792
      %v5795 = vunpack.c.l.s4 1934713408
      %v5796 = vunpack.c.0.s8 %v5795
      %v5797 = vperm.slane %v5789, %v5796
      %v5798 = vrot.slane %v5761, 4
      %v5799 = vsel %vm800, %v5798, %v5749
      %v5800 = vrot.slane %v5749, 4
      %v5801 = vsel %vm800, %v5761, %v5800
      %v5803 = vunpack.c.l.s4 1934713408
      %v5804 = vunpack.c.0.s8 %v5803
      %v5805 = vperm.slane %v5799, %v5804
      %v5807 = vunpack.c.l.s4 1934713408
      %v5808 = vunpack.c.0.s8 %v5807
      %v5809 = vperm.slane %v5801, %v5808
      %v5810 = vrot.slane %v5781, 4
      %v5811 = vsel %vm800, %v5810, %v5769
      %v5812 = vrot.slane %v5769, 4
      %v5813 = vsel %vm800, %v5781, %v5812
      %v5815 = vunpack.c.l.s4 1934713408
      %v5816 = vunpack.c.0.s8 %v5815
      %v5817 = vperm.slane %v5811, %v5816
      %v5819 = vunpack.c.l.s4 1934713408
      %v5820 = vunpack.c.0.s8 %v5819
      %v5821 = vperm.slane %v5813, %v5820
      %v5822 = vrot.slane %v5785, 4
      %v5823 = vsel %vm800, %v5822, %v5773
      %v5824 = vrot.slane %v5773, 4
      %v5825 = vsel %vm800, %v5785, %v5824
      %v5827 = vunpack.c.l.s4 1934713408
      %v5828 = vunpack.c.0.s8 %v5827
      %v5829 = vperm.slane %v5823, %v5828
      %v5831 = vunpack.c.l.s4 1934713408
      %v5832 = vunpack.c.0.s8 %v5831
      %v5833 = vperm.slane %v5825, %v5832
      %v5834 = vrot.slane %v5817, 4
      %v5835 = vsel %vm800, %v5834, %v5793
      %v5836 = vrot.slane %v5793, 4
      %v5837 = vsel %vm800, %v5817, %v5836
      %v5838 = vrot.slane %v5821, 4
      %v5839 = vsel %vm800, %v5838, %v5797
      %v5840 = vrot.slane %v5797, 4
      %v5841 = vsel %vm800, %v5821, %v5840
      %v5842 = vrot.slane %v5829, 4
      %v5843 = vsel %vm800, %v5842, %v5805
      %v5844 = vrot.slane %v5805, 4
      %v5845 = vsel %vm800, %v5829, %v5844
      %v5846 = vrot.slane %v5833, 4
      %v5847 = vsel %vm800, %v5846, %v5809
      %v5848 = vrot.slane %v5809, 4
      %v5849 = vsel %vm800, %v5833, %v5848
      %v5850 = vrot.slane %v5247, 4
      %v5851 = vsel %vm800, %v5850, %v5189
      %v5852 = vrot.slane %v5189, 4
      %v5853 = vsel %vm800, %v5247, %v5852
      %v5855 = vunpack.c.l.s4 1983009808
      %v5856 = vunpack.c.0.s8 %v5855
      %v5857 = vperm.slane %v5851, %v5856
      %v5859 = vunpack.c.l.s4 1983009808
      %v5860 = vunpack.c.0.s8 %v5859
      %v5861 = vperm.slane %v5853, %v5860
      %v5862 = vrot.slane %v5276, 4
      %v5863 = vsel %vm800, %v5862, %v5218
      %v5864 = vrot.slane %v5218, 4
      %v5865 = vsel %vm800, %v5276, %v5864
      %v5867 = vunpack.c.l.s4 1983009808
      %v5868 = vunpack.c.0.s8 %v5867
      %v5869 = vperm.slane %v5863, %v5868
      %v5871 = vunpack.c.l.s4 1983009808
      %v5872 = vunpack.c.0.s8 %v5871
      %v5873 = vperm.slane %v5865, %v5872
      %v5874 = vrot.slane %v5363, 4
      %v5875 = vsel %vm800, %v5874, %v5305
      %v5876 = vrot.slane %v5305, 4
      %v5877 = vsel %vm800, %v5363, %v5876
      %v5879 = vunpack.c.l.s4 1983009808
      %v5880 = vunpack.c.0.s8 %v5879
      %v5881 = vperm.slane %v5875, %v5880
      %v5883 = vunpack.c.l.s4 1983009808
      %v5884 = vunpack.c.0.s8 %v5883
      %v5885 = vperm.slane %v5877, %v5884
      %v5886 = vrot.slane %v5392, 4
      %v5887 = vsel %vm800, %v5886, %v5334
      %v5888 = vrot.slane %v5334, 4
      %v5889 = vsel %vm800, %v5392, %v5888
      %v5891 = vunpack.c.l.s4 1983009808
      %v5892 = vunpack.c.0.s8 %v5891
      %v5893 = vperm.slane %v5887, %v5892
      %v5895 = vunpack.c.l.s4 1983009808
      %v5896 = vunpack.c.0.s8 %v5895
      %v5897 = vperm.slane %v5889, %v5896
      %v5898 = vrot.slane %v5869, 4
      %v5899 = vsel %vm800, %v5898, %v5857
      %v5900 = vrot.slane %v5857, 4
      %v5901 = vsel %vm800, %v5869, %v5900
      %v5903 = vunpack.c.l.s4 1934713408
      %v5904 = vunpack.c.0.s8 %v5903
      %v5905 = vperm.slane %v5899, %v5904
      %v5907 = vunpack.c.l.s4 1934713408
      %v5908 = vunpack.c.0.s8 %v5907
      %v5909 = vperm.slane %v5901, %v5908
      %v5910 = vrot.slane %v5873, 4
      %v5911 = vsel %vm800, %v5910, %v5861
      %v5912 = vrot.slane %v5861, 4
      %v5913 = vsel %vm800, %v5873, %v5912
      %v5915 = vunpack.c.l.s4 1934713408
      %v5916 = vunpack.c.0.s8 %v5915
      %v5917 = vperm.slane %v5911, %v5916
      %v5919 = vunpack.c.l.s4 1934713408
      %v5920 = vunpack.c.0.s8 %v5919
      %v5921 = vperm.slane %v5913, %v5920
      %v5922 = vrot.slane %v5893, 4
      %v5923 = vsel %vm800, %v5922, %v5881
      %v5924 = vrot.slane %v5881, 4
      %v5925 = vsel %vm800, %v5893, %v5924
      %v5927 = vunpack.c.l.s4 1934713408
      %v5928 = vunpack.c.0.s8 %v5927
      %v5929 = vperm.slane %v5923, %v5928
      %v5931 = vunpack.c.l.s4 1934713408
      %v5932 = vunpack.c.0.s8 %v5931
      %v5933 = vperm.slane %v5925, %v5932
      %v5934 = vrot.slane %v5897, 4
      %v5935 = vsel %vm800, %v5934, %v5885
      %v5936 = vrot.slane %v5885, 4
      %v5937 = vsel %vm800, %v5897, %v5936
      %v5939 = vunpack.c.l.s4 1934713408
      %v5940 = vunpack.c.0.s8 %v5939
      %v5941 = vperm.slane %v5935, %v5940
      %v5943 = vunpack.c.l.s4 1934713408
      %v5944 = vunpack.c.0.s8 %v5943
      %v5945 = vperm.slane %v5937, %v5944
      %v5946 = vrot.slane %v5929, 4
      %v5947 = vsel %vm800, %v5946, %v5905
      %v5948 = vrot.slane %v5905, 4
      %v5949 = vsel %vm800, %v5929, %v5948
      %v5950 = vrot.slane %v5933, 4
      %v5951 = vsel %vm800, %v5950, %v5909
      %v5952 = vrot.slane %v5909, 4
      %v5953 = vsel %vm800, %v5933, %v5952
      %v5954 = vrot.slane %v5941, 4
      %v5955 = vsel %vm800, %v5954, %v5917
      %v5956 = vrot.slane %v5917, 4
      %v5957 = vsel %vm800, %v5941, %v5956
      %v5958 = vrot.slane %v5945, 4
      %v5959 = vsel %vm800, %v5958, %v5921
      %v5960 = vrot.slane %v5921, 4
      %v5961 = vsel %vm800, %v5945, %v5960
      %v5962 = vrot.slane %v5479, 4
      %v5963 = vsel %vm800, %v5962, %v5421
      %v5964 = vrot.slane %v5421, 4
      %v5965 = vsel %vm800, %v5479, %v5964
      %v5967 = vunpack.c.l.s4 1983009808
      %v5968 = vunpack.c.0.s8 %v5967
      %v5969 = vperm.slane %v5963, %v5968
      %v5971 = vunpack.c.l.s4 1983009808
      %v5972 = vunpack.c.0.s8 %v5971
      %v5973 = vperm.slane %v5965, %v5972
      %v5974 = vrot.slane %v5508, 4
      %v5975 = vsel %vm800, %v5974, %v5450
      %v5976 = vrot.slane %v5450, 4
      %v5977 = vsel %vm800, %v5508, %v5976
      %v5979 = vunpack.c.l.s4 1983009808
      %v5980 = vunpack.c.0.s8 %v5979
      %v5981 = vperm.slane %v5975, %v5980
      %v5983 = vunpack.c.l.s4 1983009808
      %v5984 = vunpack.c.0.s8 %v5983
      %v5985 = vperm.slane %v5977, %v5984
      %v5986 = vrot.slane %v5595, 4
      %v5987 = vsel %vm800, %v5986, %v5537
      %v5988 = vrot.slane %v5537, 4
      %v5989 = vsel %vm800, %v5595, %v5988
      %v5991 = vunpack.c.l.s4 1983009808
      %v5992 = vunpack.c.0.s8 %v5991
      %v5993 = vperm.slane %v5987, %v5992
      %v5995 = vunpack.c.l.s4 1983009808
      %v5996 = vunpack.c.0.s8 %v5995
      %v5997 = vperm.slane %v5989, %v5996
      %v5998 = vrot.slane %v5624, 4
      %v5999 = vsel %vm800, %v5998, %v5566
      %v6000 = vrot.slane %v5566, 4
      %v6001 = vsel %vm800, %v5624, %v6000
      %v6003 = vunpack.c.l.s4 1983009808
      %v6004 = vunpack.c.0.s8 %v6003
      %v6005 = vperm.slane %v5999, %v6004
      %v6007 = vunpack.c.l.s4 1983009808
      %v6008 = vunpack.c.0.s8 %v6007
      %v6009 = vperm.slane %v6001, %v6008
      %v6010 = vrot.slane %v5981, 4
      %v6011 = vsel %vm800, %v6010, %v5969
      %v6012 = vrot.slane %v5969, 4
      %v6013 = vsel %vm800, %v5981, %v6012
      %v6015 = vunpack.c.l.s4 1934713408
      %v6016 = vunpack.c.0.s8 %v6015
      %v6017 = vperm.slane %v6011, %v6016
      %v6019 = vunpack.c.l.s4 1934713408
      %v6020 = vunpack.c.0.s8 %v6019
      %v6021 = vperm.slane %v6013, %v6020
      %v6022 = vrot.slane %v5985, 4
      %v6023 = vsel %vm800, %v6022, %v5973
      %v6024 = vrot.slane %v5973, 4
      %v6025 = vsel %vm800, %v5985, %v6024
      %v6027 = vunpack.c.l.s4 1934713408
      %v6028 = vunpack.c.0.s8 %v6027
      %v6029 = vperm.slane %v6023, %v6028
      %v6031 = vunpack.c.l.s4 1934713408
      %v6032 = vunpack.c.0.s8 %v6031
      %v6033 = vperm.slane %v6025, %v6032
      %v6034 = vrot.slane %v6005, 4
      %v6035 = vsel %vm800, %v6034, %v5993
      %v6036 = vrot.slane %v5993, 4
      %v6037 = vsel %vm800, %v6005, %v6036
      %v6039 = vunpack.c.l.s4 1934713408
      %v6040 = vunpack.c.0.s8 %v6039
      %v6041 = vperm.slane %v6035, %v6040
      %v6043 = vunpack.c.l.s4 1934713408
      %v6044 = vunpack.c.0.s8 %v6043
      %v6045 = vperm.slane %v6037, %v6044
      %v6046 = vrot.slane %v6009, 4
      %v6047 = vsel %vm800, %v6046, %v5997
      %v6048 = vrot.slane %v5997, 4
      %v6049 = vsel %vm800, %v6009, %v6048
      %v6051 = vunpack.c.l.s4 1934713408
      %v6052 = vunpack.c.0.s8 %v6051
      %v6053 = vperm.slane %v6047, %v6052
      %v6055 = vunpack.c.l.s4 1934713408
      %v6056 = vunpack.c.0.s8 %v6055
      %v6057 = vperm.slane %v6049, %v6056
      %v6058 = vrot.slane %v6041, 4
      %v6059 = vsel %vm800, %v6058, %v6017
      %v6060 = vrot.slane %v6017, 4
      %v6061 = vsel %vm800, %v6041, %v6060
      %v6062 = vrot.slane %v6045, 4
      %v6063 = vsel %vm800, %v6062, %v6021
      %v6064 = vrot.slane %v6021, 4
      %v6065 = vsel %vm800, %v6045, %v6064
      %v6066 = vrot.slane %v6053, 4
      %v6067 = vsel %vm800, %v6066, %v6029
      %v6068 = vrot.slane %v6029, 4
      %v6069 = vsel %vm800, %v6053, %v6068
      %v6070 = vrot.slane %v6057, 4
      %v6071 = vsel %vm800, %v6070, %v6033
      %v6072 = vrot.slane %v6033, 4
      %v6073 = vsel %vm800, %v6057, %v6072
      %v6075 = vsel %vm3308, %v4201, 0
      %v6078 = vsel %vm3308, %v4203, 0
      %6080 = vmatpush.msra.mxu0 0.0
      %6081 = vmatpush.msra.mxu0 0.0
      %6082 = vmatpush.msra.mxu0 0.0
      %6083 = vmatpush.msra.mxu0 0.0
      %6084 = vmatpush.msra.mxu0 0.0
      %6085 = vmatpush.msra.mxu0 0.0
      %6086 = vmatpush.msra.mxu0 0.0
      %6087 = vmatpush.msra.mxu0 0.0
      %6088 = vmatpush.msra.mxu0 0.0
      %6089 = vmatpush.msra.mxu0 0.0
      %6090 = vmatpush.msra.mxu0 0.0
      %6091 = vmatpush.msra.mxu0 0.0
      %6092 = vmatpush.msra.mxu0 0.0
      %6093 = vmatpush.msra.mxu0 0.0
      %6094 = vmatpush.msra.mxu0 %v707
      %6095 = vmatpush.msra.mxu0 %v704
      %6096 = vmatmul.f32.gmra.mxu0 %v6075
      %v6097 = vpop.f32.mrf.mxu0
      %v6098 = vadd.f32 %v5723, %v6097
      %6099 = vmatmul.f32.gmra.mxu0 %v6078
      %v6100 = vpop.f32.mrf.mxu0
      %v6101 = vadd.f32 %v5835, %v6100
      %6102 = vdwg.mxu0
      %v6104 = vsel %vm3308, %v4205, 0
      %v6107 = vsel %vm3308, %v4207, 0
      %6109 = vmatpush.msra.mxu0 0.0
      %6110 = vmatpush.msra.mxu0 0.0
      %6111 = vmatpush.msra.mxu0 0.0
      %6112 = vmatpush.msra.mxu0 0.0
      %6113 = vmatpush.msra.mxu0 0.0
      %6114 = vmatpush.msra.mxu0 0.0
      %6115 = vmatpush.msra.mxu0 0.0
      %6116 = vmatpush.msra.mxu0 0.0
      %6117 = vmatpush.msra.mxu0 0.0
      %6118 = vmatpush.msra.mxu0 0.0
      %6119 = vmatpush.msra.mxu0 0.0
      %6120 = vmatpush.msra.mxu0 0.0
      %6121 = vmatpush.msra.mxu0 0.0
      %6122 = vmatpush.msra.mxu0 0.0
      %6123 = vmatpush.msra.mxu0 %v713
      %6124 = vmatpush.msra.mxu0 %v710
      %6125 = vmatmul.f32.gmra.mxu0 %v6104
      %v6126 = vpop.f32.mrf.mxu0
      %v6127 = vadd.f32 %v5725, %v6126
      %6128 = vmatmul.f32.gmra.mxu0 %v6107
      %v6129 = vpop.f32.mrf.mxu0
      %v6130 = vadd.f32 %v5837, %v6129
      %6131 = vdwg.mxu0
      %v6133 = vsel %vm3308, %v4209, 0
      %v6136 = vsel %vm3308, %v4211, 0
      %6138 = vmatpush.msra.mxu0 0.0
      %6139 = vmatpush.msra.mxu0 0.0
      %6140 = vmatpush.msra.mxu0 0.0
      %6141 = vmatpush.msra.mxu0 0.0
      %6142 = vmatpush.msra.mxu0 0.0
      %6143 = vmatpush.msra.mxu0 0.0
      %6144 = vmatpush.msra.mxu0 0.0
      %6145 = vmatpush.msra.mxu0 0.0
      %6146 = vmatpush.msra.mxu0 0.0
      %6147 = vmatpush.msra.mxu0 0.0
      %6148 = vmatpush.msra.mxu0 0.0
      %6149 = vmatpush.msra.mxu0 0.0
      %6150 = vmatpush.msra.mxu0 0.0
      %6151 = vmatpush.msra.mxu0 0.0
      %6152 = vmatpush.msra.mxu0 %v719
      %6153 = vmatpush.msra.mxu0 %v716
      %6154 = vmatmul.f32.gmra.mxu0 %v6133
      %v6155 = vpop.f32.mrf.mxu0
      %v6156 = vadd.f32 %v5727, %v6155
      %6157 = vmatmul.f32.gmra.mxu0 %v6136
      %v6158 = vpop.f32.mrf.mxu0
      %v6159 = vadd.f32 %v5839, %v6158
      %6160 = vdwg.mxu0
      %v6162 = vsel %vm3308, %v4213, 0
      %v6165 = vsel %vm3308, %v4215, 0
      %6167 = vmatpush.msra.mxu0 0.0
      %6168 = vmatpush.msra.mxu0 0.0
      %6169 = vmatpush.msra.mxu0 0.0
      %6170 = vmatpush.msra.mxu0 0.0
      %6171 = vmatpush.msra.mxu0 0.0
      %6172 = vmatpush.msra.mxu0 0.0
      %6173 = vmatpush.msra.mxu0 0.0
      %6174 = vmatpush.msra.mxu0 0.0
      %6175 = vmatpush.msra.mxu0 0.0
      %6176 = vmatpush.msra.mxu0 0.0
      %6177 = vmatpush.msra.mxu0 0.0
      %6178 = vmatpush.msra.mxu0 0.0
      %6179 = vmatpush.msra.mxu0 0.0
      %6180 = vmatpush.msra.mxu0 0.0
      %6181 = vmatpush.msra.mxu0 %v725
      %6182 = vmatpush.msra.mxu0 %v722
      %6183 = vmatmul.f32.gmra.mxu0 %v6162
      %v6184 = vpop.f32.mrf.mxu0
      %v6185 = vadd.f32 %v5729, %v6184
      %6186 = vmatmul.f32.gmra.mxu0 %v6165
      %v6187 = vpop.f32.mrf.mxu0
      %v6188 = vadd.f32 %v5841, %v6187
      %6189 = vdwg.mxu0
      %v6191 = vsel %vm3308, %v4217, 0
      %v6194 = vsel %vm3308, %v4219, 0
      %6196 = vmatpush.msra.mxu0 0.0
      %6197 = vmatpush.msra.mxu0 0.0
      %6198 = vmatpush.msra.mxu0 0.0
      %6199 = vmatpush.msra.mxu0 0.0
      %6200 = vmatpush.msra.mxu0 0.0
      %6201 = vmatpush.msra.mxu0 0.0
      %6202 = vmatpush.msra.mxu0 0.0
      %6203 = vmatpush.msra.mxu0 0.0
      %6204 = vmatpush.msra.mxu0 0.0
      %6205 = vmatpush.msra.mxu0 0.0
      %6206 = vmatpush.msra.mxu0 0.0
      %6207 = vmatpush.msra.mxu0 0.0
      %6208 = vmatpush.msra.mxu0 0.0
      %6209 = vmatpush.msra.mxu0 0.0
      %6210 = vmatpush.msra.mxu0 %v731
      %6211 = vmatpush.msra.mxu0 %v728
      %6212 = vmatmul.f32.gmra.mxu0 %v6191
      %v6213 = vpop.f32.mrf.mxu0
      %v6214 = vadd.f32 %v5731, %v6213
      %6215 = vmatmul.f32.gmra.mxu0 %v6194
      %v6216 = vpop.f32.mrf.mxu0
      %v6217 = vadd.f32 %v5843, %v6216
      %6218 = vdwg.mxu0
      %v6220 = vsel %vm3308, %v4221, 0
      %v6223 = vsel %vm3308, %v4223, 0
      %6225 = vmatpush.msra.mxu0 0.0
      %6226 = vmatpush.msra.mxu0 0.0
      %6227 = vmatpush.msra.mxu0 0.0
      %6228 = vmatpush.msra.mxu0 0.0
      %6229 = vmatpush.msra.mxu0 0.0
      %6230 = vmatpush.msra.mxu0 0.0
      %6231 = vmatpush.msra.mxu0 0.0
      %6232 = vmatpush.msra.mxu0 0.0
      %6233 = vmatpush.msra.mxu0 0.0
      %6234 = vmatpush.msra.mxu0 0.0
      %6235 = vmatpush.msra.mxu0 0.0
      %6236 = vmatpush.msra.mxu0 0.0
      %6237 = vmatpush.msra.mxu0 0.0
      %6238 = vmatpush.msra.mxu0 0.0
      %6239 = vmatpush.msra.mxu0 %v737
      %6240 = vmatpush.msra.mxu0 %v734
      %6241 = vmatmul.f32.gmra.mxu0 %v6220
      %v6242 = vpop.f32.mrf.mxu0
      %v6243 = vadd.f32 %v5733, %v6242
      %6244 = vmatmul.f32.gmra.mxu0 %v6223
      %v6245 = vpop.f32.mrf.mxu0
      %v6246 = vadd.f32 %v5845, %v6245
      %6247 = vdwg.mxu0
      %v6249 = vsel %vm3308, %v4225, 0
      %v6252 = vsel %vm3308, %v4227, 0
      %6254 = vmatpush.msra.mxu0 0.0
      %6255 = vmatpush.msra.mxu0 0.0
      %6256 = vmatpush.msra.mxu0 0.0
      %6257 = vmatpush.msra.mxu0 0.0
      %6258 = vmatpush.msra.mxu0 0.0
      %6259 = vmatpush.msra.mxu0 0.0
      %6260 = vmatpush.msra.mxu0 0.0
      %6261 = vmatpush.msra.mxu0 0.0
      %6262 = vmatpush.msra.mxu0 0.0
      %6263 = vmatpush.msra.mxu0 0.0
      %6264 = vmatpush.msra.mxu0 0.0
      %6265 = vmatpush.msra.mxu0 0.0
      %6266 = vmatpush.msra.mxu0 0.0
      %6267 = vmatpush.msra.mxu0 0.0
      %6268 = vmatpush.msra.mxu0 %v743
      %6269 = vmatpush.msra.mxu0 %v740
      %6270 = vmatmul.f32.gmra.mxu0 %v6249
      %v6271 = vpop.f32.mrf.mxu0
      %v6272 = vadd.f32 %v5735, %v6271
      %6273 = vmatmul.f32.gmra.mxu0 %v6252
      %v6274 = vpop.f32.mrf.mxu0
      %v6275 = vadd.f32 %v5847, %v6274
      %6276 = vdwg.mxu0
      %v6278 = vsel %vm3308, %v4229, 0
      %v6281 = vsel %vm3308, %v4231, 0
      %6283 = vmatpush.msra.mxu0 0.0
      %6284 = vmatpush.msra.mxu0 0.0
      %6285 = vmatpush.msra.mxu0 0.0
      %6286 = vmatpush.msra.mxu0 0.0
      %6287 = vmatpush.msra.mxu0 0.0
      %6288 = vmatpush.msra.mxu0 0.0
      %6289 = vmatpush.msra.mxu0 0.0
      %6290 = vmatpush.msra.mxu0 0.0
      %6291 = vmatpush.msra.mxu0 0.0
      %6292 = vmatpush.msra.mxu0 0.0
      %6293 = vmatpush.msra.mxu0 0.0
      %6294 = vmatpush.msra.mxu0 0.0
      %6295 = vmatpush.msra.mxu0 0.0
      %6296 = vmatpush.msra.mxu0 0.0
      %6297 = vmatpush.msra.mxu0 %v749
      %6298 = vmatpush.msra.mxu0 %v746
      %6299 = vmatmul.f32.gmra.mxu0 %v6278
      %v6300 = vpop.f32.mrf.mxu0
      %v6301 = vadd.f32 %v5737, %v6300
      %6302 = vmatmul.f32.gmra.mxu0 %v6281
      %v6303 = vpop.f32.mrf.mxu0
      %v6304 = vadd.f32 %v5849, %v6303
      %6305 = vdwg.mxu0
      %v6307 = vsel %vm3308, %v4233, 0
      %v6310 = vsel %vm3308, %v4235, 0
      %6312 = vmatpush.msra.mxu0 0.0
      %6313 = vmatpush.msra.mxu0 0.0
      %6314 = vmatpush.msra.mxu0 0.0
      %6315 = vmatpush.msra.mxu0 0.0
      %6316 = vmatpush.msra.mxu0 0.0
      %6317 = vmatpush.msra.mxu0 0.0
      %6318 = vmatpush.msra.mxu0 0.0
      %6319 = vmatpush.msra.mxu0 0.0
      %6320 = vmatpush.msra.mxu0 0.0
      %6321 = vmatpush.msra.mxu0 0.0
      %6322 = vmatpush.msra.mxu0 0.0
      %6323 = vmatpush.msra.mxu0 0.0
      %6324 = vmatpush.msra.mxu0 0.0
      %6325 = vmatpush.msra.mxu0 0.0
      %6326 = vmatpush.msra.mxu0 %v755
      %6327 = vmatpush.msra.mxu0 %v752
      %6328 = vmatmul.f32.gmra.mxu0 %v6307
      %v6329 = vpop.f32.mrf.mxu0
      %v6330 = vadd.f32 %v5947, %v6329
      %6331 = vmatmul.f32.gmra.mxu0 %v6310
      %v6332 = vpop.f32.mrf.mxu0
      %v6333 = vadd.f32 %v6059, %v6332
      %6334 = vdwg.mxu0
      %v6336 = vsel %vm3308, %v4237, 0
      %v6339 = vsel %vm3308, %v4239, 0
      %6341 = vmatpush.msra.mxu0 0.0
      %6342 = vmatpush.msra.mxu0 0.0
      %6343 = vmatpush.msra.mxu0 0.0
      %6344 = vmatpush.msra.mxu0 0.0
      %6345 = vmatpush.msra.mxu0 0.0
      %6346 = vmatpush.msra.mxu0 0.0
      %6347 = vmatpush.msra.mxu0 0.0
      %6348 = vmatpush.msra.mxu0 0.0
      %6349 = vmatpush.msra.mxu0 0.0
      %6350 = vmatpush.msra.mxu0 0.0
      %6351 = vmatpush.msra.mxu0 0.0
      %6352 = vmatpush.msra.mxu0 0.0
      %6353 = vmatpush.msra.mxu0 0.0
      %6354 = vmatpush.msra.mxu0 0.0
      %6355 = vmatpush.msra.mxu0 %v761
      %6356 = vmatpush.msra.mxu0 %v758
      %6357 = vmatmul.f32.gmra.mxu0 %v6336
      %v6358 = vpop.f32.mrf.mxu0
      %v6359 = vadd.f32 %v5949, %v6358
      %6360 = vmatmul.f32.gmra.mxu0 %v6339
      %v6361 = vpop.f32.mrf.mxu0
      %v6362 = vadd.f32 %v6061, %v6361
      %6363 = vdwg.mxu0
      %v6365 = vsel %vm3308, %v4241, 0
      %v6368 = vsel %vm3308, %v4243, 0
      %6370 = vmatpush.msra.mxu0 0.0
      %6371 = vmatpush.msra.mxu0 0.0
      %6372 = vmatpush.msra.mxu0 0.0
      %6373 = vmatpush.msra.mxu0 0.0
      %6374 = vmatpush.msra.mxu0 0.0
      %6375 = vmatpush.msra.mxu0 0.0
      %6376 = vmatpush.msra.mxu0 0.0
      %6377 = vmatpush.msra.mxu0 0.0
      %6378 = vmatpush.msra.mxu0 0.0
      %6379 = vmatpush.msra.mxu0 0.0
      %6380 = vmatpush.msra.mxu0 0.0
      %6381 = vmatpush.msra.mxu0 0.0
      %6382 = vmatpush.msra.mxu0 0.0
      %6383 = vmatpush.msra.mxu0 0.0
      %6384 = vmatpush.msra.mxu0 %v767
      %6385 = vmatpush.msra.mxu0 %v764
      %6386 = vmatmul.f32.gmra.mxu0 %v6365
      %v6387 = vpop.f32.mrf.mxu0
      %v6388 = vadd.f32 %v5951, %v6387
      %6389 = vmatmul.f32.gmra.mxu0 %v6368
      %v6390 = vpop.f32.mrf.mxu0
      %v6391 = vadd.f32 %v6063, %v6390
      %6392 = vdwg.mxu0
      %v6394 = vsel %vm3308, %v4245, 0
      %v6397 = vsel %vm3308, %v4247, 0
      %6399 = vmatpush.msra.mxu0 0.0
      %6400 = vmatpush.msra.mxu0 0.0
      %6401 = vmatpush.msra.mxu0 0.0
      %6402 = vmatpush.msra.mxu0 0.0
      %6403 = vmatpush.msra.mxu0 0.0
      %6404 = vmatpush.msra.mxu0 0.0
      %6405 = vmatpush.msra.mxu0 0.0
      %6406 = vmatpush.msra.mxu0 0.0
      %6407 = vmatpush.msra.mxu0 0.0
      %6408 = vmatpush.msra.mxu0 0.0
      %6409 = vmatpush.msra.mxu0 0.0
      %6410 = vmatpush.msra.mxu0 0.0
      %6411 = vmatpush.msra.mxu0 0.0
      %6412 = vmatpush.msra.mxu0 0.0
      %6413 = vmatpush.msra.mxu0 %v773
      %6414 = vmatpush.msra.mxu0 %v770
      %6415 = vmatmul.f32.gmra.mxu0 %v6394
      %v6416 = vpop.f32.mrf.mxu0
      %v6417 = vadd.f32 %v5953, %v6416
      %6418 = vmatmul.f32.gmra.mxu0 %v6397
      %v6419 = vpop.f32.mrf.mxu0
      %v6420 = vadd.f32 %v6065, %v6419
      %6421 = vdwg.mxu0
      %v6423 = vsel %vm3308, %v4249, 0
      %v6426 = vsel %vm3308, %v4251, 0
      %6428 = vmatpush.msra.mxu0 0.0
      %6429 = vmatpush.msra.mxu0 0.0
      %6430 = vmatpush.msra.mxu0 0.0
      %6431 = vmatpush.msra.mxu0 0.0
      %6432 = vmatpush.msra.mxu0 0.0
      %6433 = vmatpush.msra.mxu0 0.0
      %6434 = vmatpush.msra.mxu0 0.0
      %6435 = vmatpush.msra.mxu0 0.0
      %6436 = vmatpush.msra.mxu0 0.0
      %6437 = vmatpush.msra.mxu0 0.0
      %6438 = vmatpush.msra.mxu0 0.0
      %6439 = vmatpush.msra.mxu0 0.0
      %6440 = vmatpush.msra.mxu0 0.0
      %6441 = vmatpush.msra.mxu0 0.0
      %6442 = vmatpush.msra.mxu0 %v779
      %6443 = vmatpush.msra.mxu0 %v776
      %6444 = vmatmul.f32.gmra.mxu0 %v6423
      %v6445 = vpop.f32.mrf.mxu0
      %v6446 = vadd.f32 %v5955, %v6445
      %6447 = vmatmul.f32.gmra.mxu0 %v6426
      %v6448 = vpop.f32.mrf.mxu0
      %v6449 = vadd.f32 %v6067, %v6448
      %6450 = vdwg.mxu0
      %v6452 = vsel %vm3308, %v4253, 0
      %v6455 = vsel %vm3308, %v4255, 0
      %6457 = vmatpush.msra.mxu0 0.0
      %6458 = vmatpush.msra.mxu0 0.0
      %6459 = vmatpush.msra.mxu0 0.0
      %6460 = vmatpush.msra.mxu0 0.0
      %6461 = vmatpush.msra.mxu0 0.0
      %6462 = vmatpush.msra.mxu0 0.0
      %6463 = vmatpush.msra.mxu0 0.0
      %6464 = vmatpush.msra.mxu0 0.0
      %6465 = vmatpush.msra.mxu0 0.0
      %6466 = vmatpush.msra.mxu0 0.0
      %6467 = vmatpush.msra.mxu0 0.0
      %6468 = vmatpush.msra.mxu0 0.0
      %6469 = vmatpush.msra.mxu0 0.0
      %6470 = vmatpush.msra.mxu0 0.0
      %6471 = vmatpush.msra.mxu0 %v785
      %6472 = vmatpush.msra.mxu0 %v782
      %6473 = vmatmul.f32.gmra.mxu0 %v6452
      %v6474 = vpop.f32.mrf.mxu0
      %v6475 = vadd.f32 %v5957, %v6474
      %6476 = vmatmul.f32.gmra.mxu0 %v6455
      %v6477 = vpop.f32.mrf.mxu0
      %v6478 = vadd.f32 %v6069, %v6477
      %6479 = vdwg.mxu0
      %v6481 = vsel %vm3308, %v4257, 0
      %v6484 = vsel %vm3308, %v4259, 0
      %6486 = vmatpush.msra.mxu0 0.0
      %6487 = vmatpush.msra.mxu0 0.0
      %6488 = vmatpush.msra.mxu0 0.0
      %6489 = vmatpush.msra.mxu0 0.0
      %6490 = vmatpush.msra.mxu0 0.0
      %6491 = vmatpush.msra.mxu0 0.0
      %6492 = vmatpush.msra.mxu0 0.0
      %6493 = vmatpush.msra.mxu0 0.0
      %6494 = vmatpush.msra.mxu0 0.0
      %6495 = vmatpush.msra.mxu0 0.0
      %6496 = vmatpush.msra.mxu0 0.0
      %6497 = vmatpush.msra.mxu0 0.0
      %6498 = vmatpush.msra.mxu0 0.0
      %6499 = vmatpush.msra.mxu0 0.0
      %6500 = vmatpush.msra.mxu0 %v791
      %6501 = vmatpush.msra.mxu0 %v788
      %6502 = vmatmul.f32.gmra.mxu0 %v6481
      %v6503 = vpop.f32.mrf.mxu0
      %v6504 = vadd.f32 %v5959, %v6503
      %6505 = vmatmul.f32.gmra.mxu0 %v6484
      %v6506 = vpop.f32.mrf.mxu0
      %v6507 = vadd.f32 %v6071, %v6506
      %6508 = vdwg.mxu0
      %v6510 = vsel %vm3308, %v4261, 0
      %v6513 = vsel %vm3308, %v4263, 0
      %6515 = vmatpush.msra.mxu0 0.0
      %6516 = vmatpush.msra.mxu0 0.0
      %6517 = vmatpush.msra.mxu0 0.0
      %6518 = vmatpush.msra.mxu0 0.0
      %6519 = vmatpush.msra.mxu0 0.0
      %6520 = vmatpush.msra.mxu0 0.0
      %6521 = vmatpush.msra.mxu0 0.0
      %6522 = vmatpush.msra.mxu0 0.0
      %6523 = vmatpush.msra.mxu0 0.0
      %6524 = vmatpush.msra.mxu0 0.0
      %6525 = vmatpush.msra.mxu0 0.0
      %6526 = vmatpush.msra.mxu0 0.0
      %6527 = vmatpush.msra.mxu0 0.0
      %6528 = vmatpush.msra.mxu0 0.0
      %6529 = vmatpush.msra.mxu0 %v797
      %6530 = vmatpush.msra.mxu0 %v794
      %6531 = vmatmul.f32.gmra.mxu0 %v6510
      %v6532 = vpop.f32.mrf.mxu0
      %v6533 = vadd.f32 %v5961, %v6532
      %6534 = vmatmul.f32.gmra.mxu0 %v6513
      %v6535 = vpop.f32.mrf.mxu0
      %v6536 = vadd.f32 %v6073, %v6535
      %6537 = vdwg.mxu0
      %6539 = vset.pattern.permute.xlu0 0
      %6540 = vperm.xlu0 %6539, %v5130
      %v6541 = vpop.permute.xlu0 %6540
      %6544 = vset.pattern.permute.xlu0 0
      %6545 = vperm.xlu0 %6544, %v5131
      %v6546 = vpop.permute.xlu0 %6545
      %6549 = vset.pattern.permute.xlu0 0
      %6550 = vperm.xlu0 %6549, %v5132
      %v6551 = vpop.permute.xlu0 %6550
      %6554 = vset.pattern.permute.xlu0 0
      %6555 = vperm.xlu0 %6554, %v5133
      %v6556 = vpop.permute.xlu0 %6555
      %6559 = vset.pattern.permute.xlu0 0
      %6560 = vperm.xlu0 %6559, %v5134
      %v6561 = vpop.permute.xlu0 %6560
      %6564 = vset.pattern.permute.xlu0 0
      %6565 = vperm.xlu0 %6564, %v5135
      %v6566 = vpop.permute.xlu0 %6565
      %6569 = vset.pattern.permute.xlu0 0
      %6570 = vperm.xlu0 %6569, %v5136
      %v6571 = vpop.permute.xlu0 %6570
      %6574 = vset.pattern.permute.xlu0 0
      %6575 = vperm.xlu0 %6574, %v5137
      %v6576 = vpop.permute.xlu0 %6575
      %6579 = vset.pattern.permute.xlu0 0
      %6580 = vperm.xlu0 %6579, %v5138
      %v6581 = vpop.permute.xlu0 %6580
      %6584 = vset.pattern.permute.xlu0 0
      %6585 = vperm.xlu0 %6584, %v5139
      %v6586 = vpop.permute.xlu0 %6585
      %6589 = vset.pattern.permute.xlu0 0
      %6590 = vperm.xlu0 %6589, %v5140
      %v6591 = vpop.permute.xlu0 %6590
      %6594 = vset.pattern.permute.xlu0 0
      %6595 = vperm.xlu0 %6594, %v5141
      %v6596 = vpop.permute.xlu0 %6595
      %6599 = vset.pattern.permute.xlu0 0
      %6600 = vperm.xlu0 %6599, %v5142
      %v6601 = vpop.permute.xlu0 %6600
      %6604 = vset.pattern.permute.xlu0 0
      %6605 = vperm.xlu0 %6604, %v5143
      %v6606 = vpop.permute.xlu0 %6605
      %6609 = vset.pattern.permute.xlu0 0
      %6610 = vperm.xlu0 %6609, %v5144
      %v6611 = vpop.permute.xlu0 %6610
      %6614 = vset.pattern.permute.xlu0 0
      %6615 = vperm.xlu0 %6614, %v5145
      %v6616 = vpop.permute.xlu0 %6615
      %6619 = vset.pattern.permute.xlu0 0
      %6620 = vperm.xlu0 %6619, %v5146
      %v6621 = vpop.permute.xlu0 %6620
      %6624 = vset.pattern.permute.xlu0 0
      %6625 = vperm.xlu0 %6624, %v5147
      %v6626 = vpop.permute.xlu0 %6625
      %6629 = vset.pattern.permute.xlu0 0
      %6630 = vperm.xlu0 %6629, %v5148
      %v6631 = vpop.permute.xlu0 %6630
      %6634 = vset.pattern.permute.xlu0 0
      %6635 = vperm.xlu0 %6634, %v5149
      %v6636 = vpop.permute.xlu0 %6635
      %6639 = vset.pattern.permute.xlu0 0
      %6640 = vperm.xlu0 %6639, %v5150
      %v6641 = vpop.permute.xlu0 %6640
      %6644 = vset.pattern.permute.xlu0 0
      %6645 = vperm.xlu0 %6644, %v5151
      %v6646 = vpop.permute.xlu0 %6645
      %6649 = vset.pattern.permute.xlu0 0
      %6650 = vperm.xlu0 %6649, %v5152
      %v6651 = vpop.permute.xlu0 %6650
      %6654 = vset.pattern.permute.xlu0 0
      %6655 = vperm.xlu0 %6654, %v5153
      %v6656 = vpop.permute.xlu0 %6655
      %6659 = vset.pattern.permute.xlu0 0
      %6660 = vperm.xlu0 %6659, %v5154
      %v6661 = vpop.permute.xlu0 %6660
      %6664 = vset.pattern.permute.xlu0 0
      %6665 = vperm.xlu0 %6664, %v5155
      %v6666 = vpop.permute.xlu0 %6665
      %6669 = vset.pattern.permute.xlu0 0
      %6670 = vperm.xlu0 %6669, %v5156
      %v6671 = vpop.permute.xlu0 %6670
      %6674 = vset.pattern.permute.xlu0 0
      %6675 = vperm.xlu0 %6674, %v5157
      %v6676 = vpop.permute.xlu0 %6675
      %6679 = vset.pattern.permute.xlu0 0
      %6680 = vperm.xlu0 %6679, %v5158
      %v6681 = vpop.permute.xlu0 %6680
      %6684 = vset.pattern.permute.xlu0 0
      %6685 = vperm.xlu0 %6684, %v5159
      %v6686 = vpop.permute.xlu0 %6685
      %6689 = vset.pattern.permute.xlu0 0
      %6690 = vperm.xlu0 %6689, %v5160
      %v6691 = vpop.permute.xlu0 %6690
      %6694 = vset.pattern.permute.xlu0 0
      %6695 = vperm.xlu0 %6694, %v5161
      %v6696 = vpop.permute.xlu0 %6695
      %v6698 = vrcp.pop %v6541
      %v6699 = vmul.f32 %v6541, %v6698
      %v6700 = vsub.f32 1.0, %v6699
      %v6701 = vmul.f32 %v6698, %v6700
      %v6702 = vadd.f32 %v6698, %v6701
      %vm6703 = vweird.f32 %v6541
      %vm6704 = vweird.f32 %v6698
      %vm6705 = vmor %vm6703, %vm6704
      %v6706 = vsel %vm6705, %v6698, %v6702
      %v6707 = vand.u32 2147483647, %v6541
      %vm6708 = vcmp.eq.f32.partialorder %v6707, 8.507059e+37
      %v6709 = vand.u32 %v6541, 2147483648
      %v6710 = vor.u32 1.1754944e-38, %v6709
      %v6711 = vsel %vm6708, %v6710, %v6706
      %v6712 = vmul.f32 %v6098, %v6711
      %v6713 = vrcp.pop %v6546
      %v6714 = vmul.f32 %v6546, %v6713
      %v6715 = vsub.f32 1.0, %v6714
      %v6716 = vmul.f32 %v6713, %v6715
      %v6717 = vadd.f32 %v6713, %v6716
      %vm6718 = vweird.f32 %v6546
      %vm6719 = vweird.f32 %v6713
      %vm6720 = vmor %vm6718, %vm6719
      %v6721 = vsel %vm6720, %v6713, %v6717
      %v6722 = vand.u32 2147483647, %v6546
      %vm6723 = vcmp.eq.f32.partialorder %v6722, 8.507059e+37
      %v6724 = vand.u32 %v6546, 2147483648
      %v6725 = vor.u32 1.1754944e-38, %v6724
      %v6726 = vsel %vm6723, %v6725, %v6721
      %v6727 = vmul.f32 %v6101, %v6726
      %v6728 = vrcp.pop %v6551
      %v6729 = vmul.f32 %v6551, %v6728
      %v6730 = vsub.f32 1.0, %v6729
      %v6731 = vmul.f32 %v6728, %v6730
      %v6732 = vadd.f32 %v6728, %v6731
      %vm6733 = vweird.f32 %v6551
      %vm6734 = vweird.f32 %v6728
      %vm6735 = vmor %vm6733, %vm6734
      %v6736 = vsel %vm6735, %v6728, %v6732
      %v6737 = vand.u32 2147483647, %v6551
      %vm6738 = vcmp.eq.f32.partialorder %v6737, 8.507059e+37
      %v6739 = vand.u32 %v6551, 2147483648
      %v6740 = vor.u32 1.1754944e-38, %v6739
      %v6741 = vsel %vm6738, %v6740, %v6736
      %v6742 = vmul.f32 %v6127, %v6741
      %v6743 = vrcp.pop %v6556
      %v6744 = vmul.f32 %v6556, %v6743
      %v6745 = vsub.f32 1.0, %v6744
      %v6746 = vmul.f32 %v6743, %v6745
      %v6747 = vadd.f32 %v6743, %v6746
      %vm6748 = vweird.f32 %v6556
      %vm6749 = vweird.f32 %v6743
      %vm6750 = vmor %vm6748, %vm6749
      %v6751 = vsel %vm6750, %v6743, %v6747
      %v6752 = vand.u32 2147483647, %v6556
      %vm6753 = vcmp.eq.f32.partialorder %v6752, 8.507059e+37
      %v6754 = vand.u32 %v6556, 2147483648
      %v6755 = vor.u32 1.1754944e-38, %v6754
      %v6756 = vsel %vm6753, %v6755, %v6751
      %v6757 = vmul.f32 %v6130, %v6756
      %v6758 = vrcp.pop %v6561
      %v6759 = vmul.f32 %v6561, %v6758
      %v6760 = vsub.f32 1.0, %v6759
      %v6761 = vmul.f32 %v6758, %v6760
      %v6762 = vadd.f32 %v6758, %v6761
      %vm6763 = vweird.f32 %v6561
      %vm6764 = vweird.f32 %v6758
      %vm6765 = vmor %vm6763, %vm6764
      %v6766 = vsel %vm6765, %v6758, %v6762
      %v6767 = vand.u32 2147483647, %v6561
      %vm6768 = vcmp.eq.f32.partialorder %v6767, 8.507059e+37
      %v6769 = vand.u32 %v6561, 2147483648
      %v6770 = vor.u32 1.1754944e-38, %v6769
      %v6771 = vsel %vm6768, %v6770, %v6766
      %v6772 = vmul.f32 %v6156, %v6771
      %v6773 = vrcp.pop %v6566
      %v6774 = vmul.f32 %v6566, %v6773
      %v6775 = vsub.f32 1.0, %v6774
      %v6776 = vmul.f32 %v6773, %v6775
      %v6777 = vadd.f32 %v6773, %v6776
      %vm6778 = vweird.f32 %v6566
      %vm6779 = vweird.f32 %v6773
      %vm6780 = vmor %vm6778, %vm6779
      %v6781 = vsel %vm6780, %v6773, %v6777
      %v6782 = vand.u32 2147483647, %v6566
      %vm6783 = vcmp.eq.f32.partialorder %v6782, 8.507059e+37
      %v6784 = vand.u32 %v6566, 2147483648
      %v6785 = vor.u32 1.1754944e-38, %v6784
      %v6786 = vsel %vm6783, %v6785, %v6781
      %v6787 = vmul.f32 %v6159, %v6786
      %v6788 = vrcp.pop %v6571
      %v6789 = vmul.f32 %v6571, %v6788
      %v6790 = vsub.f32 1.0, %v6789
      %v6791 = vmul.f32 %v6788, %v6790
      %v6792 = vadd.f32 %v6788, %v6791
      %vm6793 = vweird.f32 %v6571
      %vm6794 = vweird.f32 %v6788
      %vm6795 = vmor %vm6793, %vm6794
      %v6796 = vsel %vm6795, %v6788, %v6792
      %v6797 = vand.u32 2147483647, %v6571
      %vm6798 = vcmp.eq.f32.partialorder %v6797, 8.507059e+37
      %v6799 = vand.u32 %v6571, 2147483648
      %v6800 = vor.u32 1.1754944e-38, %v6799
      %v6801 = vsel %vm6798, %v6800, %v6796
      %v6802 = vmul.f32 %v6185, %v6801
      %v6803 = vrcp.pop %v6576
      %v6804 = vmul.f32 %v6576, %v6803
      %v6805 = vsub.f32 1.0, %v6804
      %v6806 = vmul.f32 %v6803, %v6805
      %v6807 = vadd.f32 %v6803, %v6806
      %vm6808 = vweird.f32 %v6576
      %vm6809 = vweird.f32 %v6803
      %vm6810 = vmor %vm6808, %vm6809
      %v6811 = vsel %vm6810, %v6803, %v6807
      %v6812 = vand.u32 2147483647, %v6576
      %vm6813 = vcmp.eq.f32.partialorder %v6812, 8.507059e+37
      %v6814 = vand.u32 %v6576, 2147483648
      %v6815 = vor.u32 1.1754944e-38, %v6814
      %v6816 = vsel %vm6813, %v6815, %v6811
      %v6817 = vmul.f32 %v6188, %v6816
      %v6818 = vrcp.pop %v6581
      %v6819 = vmul.f32 %v6581, %v6818
      %v6820 = vsub.f32 1.0, %v6819
      %v6821 = vmul.f32 %v6818, %v6820
      %v6822 = vadd.f32 %v6818, %v6821
      %vm6823 = vweird.f32 %v6581
      %vm6824 = vweird.f32 %v6818
      %vm6825 = vmor %vm6823, %vm6824
      %v6826 = vsel %vm6825, %v6818, %v6822
      %v6827 = vand.u32 2147483647, %v6581
      %vm6828 = vcmp.eq.f32.partialorder %v6827, 8.507059e+37
      %v6829 = vand.u32 %v6581, 2147483648
      %v6830 = vor.u32 1.1754944e-38, %v6829
      %v6831 = vsel %vm6828, %v6830, %v6826
      %v6832 = vmul.f32 %v6214, %v6831
      %v6833 = vrcp.pop %v6586
      %v6834 = vmul.f32 %v6586, %v6833
      %v6835 = vsub.f32 1.0, %v6834
      %v6836 = vmul.f32 %v6833, %v6835
      %v6837 = vadd.f32 %v6833, %v6836
      %vm6838 = vweird.f32 %v6586
      %vm6839 = vweird.f32 %v6833
      %vm6840 = vmor %vm6838, %vm6839
      %v6841 = vsel %vm6840, %v6833, %v6837
      %v6842 = vand.u32 2147483647, %v6586
      %vm6843 = vcmp.eq.f32.partialorder %v6842, 8.507059e+37
      %v6844 = vand.u32 %v6586, 2147483648
      %v6845 = vor.u32 1.1754944e-38, %v6844
      %v6846 = vsel %vm6843, %v6845, %v6841
      %v6847 = vmul.f32 %v6217, %v6846
      %v6848 = vrcp.pop %v6591
      %v6849 = vmul.f32 %v6591, %v6848
      %v6850 = vsub.f32 1.0, %v6849
      %v6851 = vmul.f32 %v6848, %v6850
      %v6852 = vadd.f32 %v6848, %v6851
      %vm6853 = vweird.f32 %v6591
      %vm6854 = vweird.f32 %v6848
      %vm6855 = vmor %vm6853, %vm6854
      %v6856 = vsel %vm6855, %v6848, %v6852
      %v6857 = vand.u32 2147483647, %v6591
      %vm6858 = vcmp.eq.f32.partialorder %v6857, 8.507059e+37
      %v6859 = vand.u32 %v6591, 2147483648
      %v6860 = vor.u32 1.1754944e-38, %v6859
      %v6861 = vsel %vm6858, %v6860, %v6856
      %v6862 = vmul.f32 %v6243, %v6861
      %v6863 = vrcp.pop %v6596
      %v6864 = vmul.f32 %v6596, %v6863
      %v6865 = vsub.f32 1.0, %v6864
      %v6866 = vmul.f32 %v6863, %v6865
      %v6867 = vadd.f32 %v6863, %v6866
      %vm6868 = vweird.f32 %v6596
      %vm6869 = vweird.f32 %v6863
      %vm6870 = vmor %vm6868, %vm6869
      %v6871 = vsel %vm6870, %v6863, %v6867
      %v6872 = vand.u32 2147483647, %v6596
      %vm6873 = vcmp.eq.f32.partialorder %v6872, 8.507059e+37
      %v6874 = vand.u32 %v6596, 2147483648
      %v6875 = vor.u32 1.1754944e-38, %v6874
      %v6876 = vsel %vm6873, %v6875, %v6871
      %v6877 = vmul.f32 %v6246, %v6876
      %v6878 = vrcp.pop %v6601
      %v6879 = vmul.f32 %v6601, %v6878
      %v6880 = vsub.f32 1.0, %v6879
      %v6881 = vmul.f32 %v6878, %v6880
      %v6882 = vadd.f32 %v6878, %v6881
      %vm6883 = vweird.f32 %v6601
      %vm6884 = vweird.f32 %v6878
      %vm6885 = vmor %vm6883, %vm6884
      %v6886 = vsel %vm6885, %v6878, %v6882
      %v6887 = vand.u32 2147483647, %v6601
      %vm6888 = vcmp.eq.f32.partialorder %v6887, 8.507059e+37
      %v6889 = vand.u32 %v6601, 2147483648
      %v6890 = vor.u32 1.1754944e-38, %v6889
      %v6891 = vsel %vm6888, %v6890, %v6886
      %v6892 = vmul.f32 %v6272, %v6891
      %v6893 = vrcp.pop %v6606
      %v6894 = vmul.f32 %v6606, %v6893
      %v6895 = vsub.f32 1.0, %v6894
      %v6896 = vmul.f32 %v6893, %v6895
      %v6897 = vadd.f32 %v6893, %v6896
      %vm6898 = vweird.f32 %v6606
      %vm6899 = vweird.f32 %v6893
      %vm6900 = vmor %vm6898, %vm6899
      %v6901 = vsel %vm6900, %v6893, %v6897
      %v6902 = vand.u32 2147483647, %v6606
      %vm6903 = vcmp.eq.f32.partialorder %v6902, 8.507059e+37
      %v6904 = vand.u32 %v6606, 2147483648
      %v6905 = vor.u32 1.1754944e-38, %v6904
      %v6906 = vsel %vm6903, %v6905, %v6901
      %v6907 = vmul.f32 %v6275, %v6906
      %v6908 = vrcp.pop %v6611
      %v6909 = vmul.f32 %v6611, %v6908
      %v6910 = vsub.f32 1.0, %v6909
      %v6911 = vmul.f32 %v6908, %v6910
      %v6912 = vadd.f32 %v6908, %v6911
      %vm6913 = vweird.f32 %v6611
      %vm6914 = vweird.f32 %v6908
      %vm6915 = vmor %vm6913, %vm6914
      %v6916 = vsel %vm6915, %v6908, %v6912
      %v6917 = vand.u32 2147483647, %v6611
      %vm6918 = vcmp.eq.f32.partialorder %v6917, 8.507059e+37
      %v6919 = vand.u32 %v6611, 2147483648
      %v6920 = vor.u32 1.1754944e-38, %v6919
      %v6921 = vsel %vm6918, %v6920, %v6916
      %v6922 = vmul.f32 %v6301, %v6921
      %v6923 = vrcp.pop %v6616
      %v6924 = vmul.f32 %v6616, %v6923
      %v6925 = vsub.f32 1.0, %v6924
      %v6926 = vmul.f32 %v6923, %v6925
      %v6927 = vadd.f32 %v6923, %v6926
      %vm6928 = vweird.f32 %v6616
      %vm6929 = vweird.f32 %v6923
      %vm6930 = vmor %vm6928, %vm6929
      %v6931 = vsel %vm6930, %v6923, %v6927
      %v6932 = vand.u32 2147483647, %v6616
      %vm6933 = vcmp.eq.f32.partialorder %v6932, 8.507059e+37
      %v6934 = vand.u32 %v6616, 2147483648
      %v6935 = vor.u32 1.1754944e-38, %v6934
      %v6936 = vsel %vm6933, %v6935, %v6931
      %v6937 = vmul.f32 %v6304, %v6936
      %v6938 = vrcp.pop %v6621
      %v6939 = vmul.f32 %v6621, %v6938
      %v6940 = vsub.f32 1.0, %v6939
      %v6941 = vmul.f32 %v6938, %v6940
      %v6942 = vadd.f32 %v6938, %v6941
      %vm6943 = vweird.f32 %v6621
      %vm6944 = vweird.f32 %v6938
      %vm6945 = vmor %vm6943, %vm6944
      %v6946 = vsel %vm6945, %v6938, %v6942
      %v6947 = vand.u32 2147483647, %v6621
      %vm6948 = vcmp.eq.f32.partialorder %v6947, 8.507059e+37
      %v6949 = vand.u32 %v6621, 2147483648
      %v6950 = vor.u32 1.1754944e-38, %v6949
      %v6951 = vsel %vm6948, %v6950, %v6946
      %v6952 = vmul.f32 %v6330, %v6951
      %v6953 = vrcp.pop %v6626
      %v6954 = vmul.f32 %v6626, %v6953
      %v6955 = vsub.f32 1.0, %v6954
      %v6956 = vmul.f32 %v6953, %v6955
      %v6957 = vadd.f32 %v6953, %v6956
      %vm6958 = vweird.f32 %v6626
      %vm6959 = vweird.f32 %v6953
      %vm6960 = vmor %vm6958, %vm6959
      %v6961 = vsel %vm6960, %v6953, %v6957
      %v6962 = vand.u32 2147483647, %v6626
      %vm6963 = vcmp.eq.f32.partialorder %v6962, 8.507059e+37
      %v6964 = vand.u32 %v6626, 2147483648
      %v6965 = vor.u32 1.1754944e-38, %v6964
      %v6966 = vsel %vm6963, %v6965, %v6961
      %v6967 = vmul.f32 %v6333, %v6966
      %v6968 = vrcp.pop %v6631
      %v6969 = vmul.f32 %v6631, %v6968
      %v6970 = vsub.f32 1.0, %v6969
      %v6971 = vmul.f32 %v6968, %v6970
      %v6972 = vadd.f32 %v6968, %v6971
      %vm6973 = vweird.f32 %v6631
      %vm6974 = vweird.f32 %v6968
      %vm6975 = vmor %vm6973, %vm6974
      %v6976 = vsel %vm6975, %v6968, %v6972
      %v6977 = vand.u32 2147483647, %v6631
      %vm6978 = vcmp.eq.f32.partialorder %v6977, 8.507059e+37
      %v6979 = vand.u32 %v6631, 2147483648
      %v6980 = vor.u32 1.1754944e-38, %v6979
      %v6981 = vsel %vm6978, %v6980, %v6976
      %v6982 = vmul.f32 %v6359, %v6981
      %v6983 = vrcp.pop %v6636
      %v6984 = vmul.f32 %v6636, %v6983
      %v6985 = vsub.f32 1.0, %v6984
      %v6986 = vmul.f32 %v6983, %v6985
      %v6987 = vadd.f32 %v6983, %v6986
      %vm6988 = vweird.f32 %v6636
      %vm6989 = vweird.f32 %v6983
      %vm6990 = vmor %vm6988, %vm6989
      %v6991 = vsel %vm6990, %v6983, %v6987
      %v6992 = vand.u32 2147483647, %v6636
      %vm6993 = vcmp.eq.f32.partialorder %v6992, 8.507059e+37
      %v6994 = vand.u32 %v6636, 2147483648
      %v6995 = vor.u32 1.1754944e-38, %v6994
      %v6996 = vsel %vm6993, %v6995, %v6991
      %v6997 = vmul.f32 %v6362, %v6996
      %v6998 = vrcp.pop %v6641
      %v6999 = vmul.f32 %v6641, %v6998
      %v7000 = vsub.f32 1.0, %v6999
      %v7001 = vmul.f32 %v6998, %v7000
      %v7002 = vadd.f32 %v6998, %v7001
      %vm7003 = vweird.f32 %v6641
      %vm7004 = vweird.f32 %v6998
      %vm7005 = vmor %vm7003, %vm7004
      %v7006 = vsel %vm7005, %v6998, %v7002
      %v7007 = vand.u32 2147483647, %v6641
      %vm7008 = vcmp.eq.f32.partialorder %v7007, 8.507059e+37
      %v7009 = vand.u32 %v6641, 2147483648
      %v7010 = vor.u32 1.1754944e-38, %v7009
      %v7011 = vsel %vm7008, %v7010, %v7006
      %v7012 = vmul.f32 %v6388, %v7011
      %v7013 = vrcp.pop %v6646
      %v7014 = vmul.f32 %v6646, %v7013
      %v7015 = vsub.f32 1.0, %v7014
      %v7016 = vmul.f32 %v7013, %v7015
      %v7017 = vadd.f32 %v7013, %v7016
      %vm7018 = vweird.f32 %v6646
      %vm7019 = vweird.f32 %v7013
      %vm7020 = vmor %vm7018, %vm7019
      %v7021 = vsel %vm7020, %v7013, %v7017
      %v7022 = vand.u32 2147483647, %v6646
      %vm7023 = vcmp.eq.f32.partialorder %v7022, 8.507059e+37
      %v7024 = vand.u32 %v6646, 2147483648
      %v7025 = vor.u32 1.1754944e-38, %v7024
      %v7026 = vsel %vm7023, %v7025, %v7021
      %v7027 = vmul.f32 %v6391, %v7026
      %v7028 = vrcp.pop %v6651
      %v7029 = vmul.f32 %v6651, %v7028
      %v7030 = vsub.f32 1.0, %v7029
      %v7031 = vmul.f32 %v7028, %v7030
      %v7032 = vadd.f32 %v7028, %v7031
      %vm7033 = vweird.f32 %v6651
      %vm7034 = vweird.f32 %v7028
      %vm7035 = vmor %vm7033, %vm7034
      %v7036 = vsel %vm7035, %v7028, %v7032
      %v7037 = vand.u32 2147483647, %v6651
      %vm7038 = vcmp.eq.f32.partialorder %v7037, 8.507059e+37
      %v7039 = vand.u32 %v6651, 2147483648
      %v7040 = vor.u32 1.1754944e-38, %v7039
      %v7041 = vsel %vm7038, %v7040, %v7036
      %v7042 = vmul.f32 %v6417, %v7041
      %v7043 = vrcp.pop %v6656
      %v7044 = vmul.f32 %v6656, %v7043
      %v7045 = vsub.f32 1.0, %v7044
      %v7046 = vmul.f32 %v7043, %v7045
      %v7047 = vadd.f32 %v7043, %v7046
      %vm7048 = vweird.f32 %v6656
      %vm7049 = vweird.f32 %v7043
      %vm7050 = vmor %vm7048, %vm7049
      %v7051 = vsel %vm7050, %v7043, %v7047
      %v7052 = vand.u32 2147483647, %v6656
      %vm7053 = vcmp.eq.f32.partialorder %v7052, 8.507059e+37
      %v7054 = vand.u32 %v6656, 2147483648
      %v7055 = vor.u32 1.1754944e-38, %v7054
      %v7056 = vsel %vm7053, %v7055, %v7051
      %v7057 = vmul.f32 %v6420, %v7056
      %v7058 = vrcp.pop %v6661
      %v7059 = vmul.f32 %v6661, %v7058
      %v7060 = vsub.f32 1.0, %v7059
      %v7061 = vmul.f32 %v7058, %v7060
      %v7062 = vadd.f32 %v7058, %v7061
      %vm7063 = vweird.f32 %v6661
      %vm7064 = vweird.f32 %v7058
      %vm7065 = vmor %vm7063, %vm7064
      %v7066 = vsel %vm7065, %v7058, %v7062
      %v7067 = vand.u32 2147483647, %v6661
      %vm7068 = vcmp.eq.f32.partialorder %v7067, 8.507059e+37
      %v7069 = vand.u32 %v6661, 2147483648
      %v7070 = vor.u32 1.1754944e-38, %v7069
      %v7071 = vsel %vm7068, %v7070, %v7066
      %v7072 = vmul.f32 %v6446, %v7071
      %v7073 = vrcp.pop %v6666
      %v7074 = vmul.f32 %v6666, %v7073
      %v7075 = vsub.f32 1.0, %v7074
      %v7076 = vmul.f32 %v7073, %v7075
      %v7077 = vadd.f32 %v7073, %v7076
      %vm7078 = vweird.f32 %v6666
      %vm7079 = vweird.f32 %v7073
      %vm7080 = vmor %vm7078, %vm7079
      %v7081 = vsel %vm7080, %v7073, %v7077
      %v7082 = vand.u32 2147483647, %v6666
      %vm7083 = vcmp.eq.f32.partialorder %v7082, 8.507059e+37
      %v7084 = vand.u32 %v6666, 2147483648
      %v7085 = vor.u32 1.1754944e-38, %v7084
      %v7086 = vsel %vm7083, %v7085, %v7081
      %v7087 = vmul.f32 %v6449, %v7086
      %v7088 = vrcp.pop %v6671
      %v7089 = vmul.f32 %v6671, %v7088
      %v7090 = vsub.f32 1.0, %v7089
      %v7091 = vmul.f32 %v7088, %v7090
      %v7092 = vadd.f32 %v7088, %v7091
      %vm7093 = vweird.f32 %v6671
      %vm7094 = vweird.f32 %v7088
      %vm7095 = vmor %vm7093, %vm7094
      %v7096 = vsel %vm7095, %v7088, %v7092
      %v7097 = vand.u32 2147483647, %v6671
      %vm7098 = vcmp.eq.f32.partialorder %v7097, 8.507059e+37
      %v7099 = vand.u32 %v6671, 2147483648
      %v7100 = vor.u32 1.1754944e-38, %v7099
      %v7101 = vsel %vm7098, %v7100, %v7096
      %v7102 = vmul.f32 %v6475, %v7101
      %v7103 = vrcp.pop %v6676
      %v7104 = vmul.f32 %v6676, %v7103
      %v7105 = vsub.f32 1.0, %v7104
      %v7106 = vmul.f32 %v7103, %v7105
      %v7107 = vadd.f32 %v7103, %v7106
      %vm7108 = vweird.f32 %v6676
      %vm7109 = vweird.f32 %v7103
      %vm7110 = vmor %vm7108, %vm7109
      %v7111 = vsel %vm7110, %v7103, %v7107
      %v7112 = vand.u32 2147483647, %v6676
      %vm7113 = vcmp.eq.f32.partialorder %v7112, 8.507059e+37
      %v7114 = vand.u32 %v6676, 2147483648
      %v7115 = vor.u32 1.1754944e-38, %v7114
      %v7116 = vsel %vm7113, %v7115, %v7111
      %v7117 = vmul.f32 %v6478, %v7116
      %v7118 = vrcp.pop %v6681
      %v7119 = vmul.f32 %v6681, %v7118
      %v7120 = vsub.f32 1.0, %v7119
      %v7121 = vmul.f32 %v7118, %v7120
      %v7122 = vadd.f32 %v7118, %v7121
      %vm7123 = vweird.f32 %v6681
      %vm7124 = vweird.f32 %v7118
      %vm7125 = vmor %vm7123, %vm7124
      %v7126 = vsel %vm7125, %v7118, %v7122
      %v7127 = vand.u32 2147483647, %v6681
      %vm7128 = vcmp.eq.f32.partialorder %v7127, 8.507059e+37
      %v7129 = vand.u32 %v6681, 2147483648
      %v7130 = vor.u32 1.1754944e-38, %v7129
      %v7131 = vsel %vm7128, %v7130, %v7126
      %v7132 = vmul.f32 %v6504, %v7131
      %v7133 = vrcp.pop %v6686
      %v7134 = vmul.f32 %v6686, %v7133
      %v7135 = vsub.f32 1.0, %v7134
      %v7136 = vmul.f32 %v7133, %v7135
      %v7137 = vadd.f32 %v7133, %v7136
      %vm7138 = vweird.f32 %v6686
      %vm7139 = vweird.f32 %v7133
      %vm7140 = vmor %vm7138, %vm7139
      %v7141 = vsel %vm7140, %v7133, %v7137
      %v7142 = vand.u32 2147483647, %v6686
      %vm7143 = vcmp.eq.f32.partialorder %v7142, 8.507059e+37
      %v7144 = vand.u32 %v6686, 2147483648
      %v7145 = vor.u32 1.1754944e-38, %v7144
      %v7146 = vsel %vm7143, %v7145, %v7141
      %v7147 = vmul.f32 %v6507, %v7146
      %v7148 = vrcp.pop %v6691
      %v7149 = vmul.f32 %v6691, %v7148
      %v7150 = vsub.f32 1.0, %v7149
      %v7151 = vmul.f32 %v7148, %v7150
      %v7152 = vadd.f32 %v7148, %v7151
      %vm7153 = vweird.f32 %v6691
      %vm7154 = vweird.f32 %v7148
      %vm7155 = vmor %vm7153, %vm7154
      %v7156 = vsel %vm7155, %v7148, %v7152
      %v7157 = vand.u32 2147483647, %v6691
      %vm7158 = vcmp.eq.f32.partialorder %v7157, 8.507059e+37
      %v7159 = vand.u32 %v6691, 2147483648
      %v7160 = vor.u32 1.1754944e-38, %v7159
      %v7161 = vsel %vm7158, %v7160, %v7156
      %v7162 = vmul.f32 %v6533, %v7161
      %v7163 = vrcp.pop %v6696
      %v7164 = vmul.f32 %v6696, %v7163
      %v7165 = vsub.f32 1.0, %v7164
      %v7166 = vmul.f32 %v7163, %v7165
      %v7167 = vadd.f32 %v7163, %v7166
      %vm7168 = vweird.f32 %v6696
      %vm7169 = vweird.f32 %v7163
      %vm7170 = vmor %vm7168, %vm7169
      %v7171 = vsel %vm7170, %v7163, %v7167
      %v7172 = vand.u32 2147483647, %v6696
      %vm7173 = vcmp.eq.f32.partialorder %v7172, 8.507059e+37
      %v7174 = vand.u32 %v6696, 2147483648
      %v7175 = vor.u32 1.1754944e-38, %v7174
      %v7176 = vsel %vm7173, %v7175, %v7171
      %v7177 = vmul.f32 %v6536, %v7176
      %s7178 = sld [smem:[#allocation2]]
      %v7179 = vstv %s7178
      %v7180 = vmul.f32 %v7179, %v6712
      %v7181 = vmul.f32 %v7179, %v6727
      %v7182 = vmul.f32 %v7179, %v6742
      %v7183 = vmul.f32 %v7179, %v6757
      %v7184 = vmul.f32 %v7179, %v6772
      %v7185 = vmul.f32 %v7179, %v6787
      %v7186 = vmul.f32 %v7179, %v6802
      %v7187 = vmul.f32 %v7179, %v6817
      %v7188 = vmul.f32 %v7179, %v6832
      %v7189 = vmul.f32 %v7179, %v6847
      %v7190 = vmul.f32 %v7179, %v6862
      %v7191 = vmul.f32 %v7179, %v6877
      %v7192 = vmul.f32 %v7179, %v6892
      %v7193 = vmul.f32 %v7179, %v6907
      %v7194 = vmul.f32 %v7179, %v6922
      %v7195 = vmul.f32 %v7179, %v6937
      %v7196 = vmul.f32 %v7179, %v6952
      %v7197 = vmul.f32 %v7179, %v6967
      %v7198 = vmul.f32 %v7179, %v6982
      %v7199 = vmul.f32 %v7179, %v6997
      %v7200 = vmul.f32 %v7179, %v7012
      %v7201 = vmul.f32 %v7179, %v7027
      %v7202 = vmul.f32 %v7179, %v7042
      %v7203 = vmul.f32 %v7179, %v7057
      %v7204 = vmul.f32 %v7179, %v7072
      %v7205 = vmul.f32 %v7179, %v7087
      %v7206 = vmul.f32 %v7179, %v7102
      %v7207 = vmul.f32 %v7179, %v7117
      %v7208 = vmul.f32 %v7179, %v7132
      %v7209 = vmul.f32 %v7179, %v7147
      %v7210 = vmul.f32 %v7179, %v7162
      %v7211 = vmul.f32 %v7179, %v7177
      %v7212 = vadd.f32 %v7180, %v307
      %v7213 = vadd.f32 %v7181, %v308
      %v7214 = vadd.f32 %v7182, %v309
      %v7215 = vadd.f32 %v7183, %v310
      %v7216 = vadd.f32 %v7184, %v311
      %v7217 = vadd.f32 %v7185, %v312
      %v7218 = vadd.f32 %v7186, %v313
      %v7219 = vadd.f32 %v7187, %v314
      %v7220 = vadd.f32 %v7188, %v315
      %v7221 = vadd.f32 %v7189, %v316
      %v7222 = vadd.f32 %v7190, %v317
      %v7223 = vadd.f32 %v7191, %v318
      %v7224 = vadd.f32 %v7192, %v319
      %v7225 = vadd.f32 %v7193, %v320
      %v7226 = vadd.f32 %v7194, %v321
      %v7227 = vadd.f32 %v7195, %v322
      %v7228 = vadd.f32 %v7196, %v323
      %v7229 = vadd.f32 %v7197, %v324
      %v7230 = vadd.f32 %v7198, %v325
      %v7231 = vadd.f32 %v7199, %v326
      %v7232 = vadd.f32 %v7200, %v327
      %v7233 = vadd.f32 %v7201, %v328
      %v7234 = vadd.f32 %v7202, %v329
      %v7235 = vadd.f32 %v7203, %v330
      %v7236 = vadd.f32 %v7204, %v331
      %v7237 = vadd.f32 %v7205, %v332
      %v7238 = vadd.f32 %v7206, %v333
      %v7239 = vadd.f32 %v7207, %v334
      %v7240 = vadd.f32 %v7208, %v335
      %v7241 = vadd.f32 %v7209, %v336
      %v7242 = vadd.f32 %v7210, %v337
      %v7243 = vadd.f32 %v7211, %v338
      %7244 = vst.msk [vmem:[%s306] sm:$0xff] %vm347, %v7212
      %7245 = vst.msk [vmem:[%s306 + $0x8] sm:$0xff] %vm347, %v7213
      %7246 = vst.msk [vmem:[%s306 + $0x10] sm:$0xff] %vm347, %v7214
      %7247 = vst.msk [vmem:[%s306 + $0x18] sm:$0xff] %vm347, %v7215
      %7248 = vst.msk [vmem:[%s306 + $0x20] sm:$0xff] %vm347, %v7216
      %7249 = vst.msk [vmem:[%s306 + $0x28] sm:$0xff] %vm347, %v7217
      %7250 = vst.msk [vmem:[%s306 + $0x30] sm:$0xff] %vm347, %v7218
      %7251 = vst.msk [vmem:[%s306 + $0x38] sm:$0xff] %vm347, %v7219
      %7252 = vst.msk [vmem:[%s306 + $0x40] sm:$0xff] %vm347, %v7220
      %7253 = vst.msk [vmem:[%s306 + $0x48] sm:$0xff] %vm347, %v7221
      %7254 = vst.msk [vmem:[%s306 + $0x50] sm:$0xff] %vm347, %v7222
      %7255 = vst.msk [vmem:[%s306 + $0x58] sm:$0xff] %vm347, %v7223
      %7256 = vst.msk [vmem:[%s306 + $0x60] sm:$0xff] %vm347, %v7224
      %7257 = vst.msk [vmem:[%s306 + $0x68] sm:$0xff] %vm347, %v7225
      %7258 = vst.msk [vmem:[%s306 + $0x70] sm:$0xff] %vm347, %v7226
      %7259 = vst.msk [vmem:[%s306 + $0x78] sm:$0xff] %vm347, %v7227
      %7260 = vst.msk [vmem:[%s306 + $0x80] sm:$0xff] %vm347, %v7228
      %7261 = vst.msk [vmem:[%s306 + $0x88] sm:$0xff] %vm347, %v7229
      %7262 = vst.msk [vmem:[%s306 + $0x90] sm:$0xff] %vm347, %v7230
      %7263 = vst.msk [vmem:[%s306 + $0x98] sm:$0xff] %vm347, %v7231
      %7264 = vst.msk [vmem:[%s306 + $0xa0] sm:$0xff] %vm347, %v7232
      %7265 = vst.msk [vmem:[%s306 + $0xa8] sm:$0xff] %vm347, %v7233
      %7266 = vst.msk [vmem:[%s306 + $0xb0] sm:$0xff] %vm347, %v7234
      %7267 = vst.msk [vmem:[%s306 + $0xb8] sm:$0xff] %vm347, %v7235
      %7268 = vst.msk [vmem:[%s306 + $0xc0] sm:$0xff] %vm347, %v7236
      %7269 = vst.msk [vmem:[%s306 + $0xc8] sm:$0xff] %vm347, %v7237
      %7270 = vst.msk [vmem:[%s306 + $0xd0] sm:$0xff] %vm347, %v7238
      %7271 = vst.msk [vmem:[%s306 + $0xd8] sm:$0xff] %vm347, %v7239
      %7272 = vst.msk [vmem:[%s306 + $0xe0] sm:$0xff] %vm347, %v7240
      %7273 = vst.msk [vmem:[%s306 + $0xe8] sm:$0xff] %vm347, %v7241
      %7274 = vst.msk [vmem:[%s306 + $0xf0] sm:$0xff] %vm347, %v7242
      %7275 = vst.msk [vmem:[%s306 + $0xf8] sm:$0xff] %vm347, %v7243
      %p7276 = scmp.lt.s32.totalorder %s20, 1
      %s7277 = scalar_select %p7276, %s20, 1
      %s7278 = smul.addr %s7277, 32
      %s7279 = smul.addr %s7278, 8
      %s7280 = scalar_lea.vmem %s8, %s7279
      // Predicated region
      $region53: #{tpu_custom_call.1} parent=51 // pred_check
        %p7281 = pneg %p211
      $region54: #{tpu_custom_call.1} parent=51 // pred_check_branch
        %7283 = sbr.rel (%p7281) target = $region56
      $region55: #{tpu_custom_call.1} parent=51 // pred_region
        _
      $region56: #{tpu_custom_call.1} parent=51 // pred_fallthru
        _
    $region52: #{tpu_custom_call.1} parent=5 // pred_fallthru
      _
    %p7284 = scmp.le.s32.totalorder 2, %s15
    // Predicated region
    $region57: #{tpu_custom_call.1} parent=5 // pred_check
      %p7285 = pneg %p7284
    $region58: #{tpu_custom_call.1} parent=5 // pred_check_branch
      %7287 = sbr.rel (%p7285) target = $region60
    $region59: #{tpu_custom_call.1} parent=5 // pred_region
      %s7288 = ssub.s32 %s15, 2
      // Predicated region
      $region61: #{tpu_custom_call.1} parent=59 // pred_check
        %p7289 = pneg %p217
      $region62: #{tpu_custom_call.1} parent=59 // pred_check_branch
        %7291 = sbr.rel (%p7289) target = $region64
      $region63: #{tpu_custom_call.1} parent=59 // pred_region
        %p7292 = scmp.lt.s32.totalorder %s21, 1
        %s7293 = scalar_select %p7292, %s21, 1
        %s7294 = smul.addr %s7293, 32
        %s7295 = smul.addr %s7294, 8
        %s7296 = scalar_lea.vmem %s8, %s7295
      $region64: #{tpu_custom_call.1} parent=59 // pred_fallthru
        _
    $region60: #{tpu_custom_call.1} parent=5 // pred_fallthru
      _
  $region6: #{tpu_custom_call.1} parent=0 // loop_footer
    %s19 = sadd.s32 1, %s15
  $region7: #{tpu_custom_call.1} parent=0 // loop_footer_branch
    %14 = sbr.rel target = $region3
  $region8: #{tpu_custom_call.1} parent=0 // loop_exit
    _

</llo_original>
